<compile_context>
chip_gen: v7x
topology: tpu7x:2x2x1
jax: 0.10.0
libtpu: 0.0.40
codegen_flags: <defaults>
</compile_context>

<pallas_src>
import functools

import jax
import jax.numpy as jnp
from jax.experimental import pallas as pl
from jax.experimental.pallas import tpu as pltpu


# ---------------------------------------------------------------------------
# Generic fused Pallas kernel:
#     out(Cout, M) = relu( W(Cout, K) @ col(K, M) + b(Cout, 1) )
# optionally followed by a fused 2x2 max-pool, expressed as a max over the four
# phase-major contiguous chunks of the lane (M) axis.
# ---------------------------------------------------------------------------
def _mm_kernel(col_ref, w_ref, b_ref, o_ref, *, relu, pool):
    col = col_ref[0]                                    # (K, M), lane-dense
    y = jnp.dot(w_ref[...], col, preferred_element_type=jnp.float32) + b_ref[...]
    if relu:
        y = jnp.maximum(y, 0.0)
    if pool:
        mo = y.shape[1] // 4
        y = jnp.maximum(jnp.maximum(y[:, 0 * mo:1 * mo], y[:, 1 * mo:2 * mo]),
                        jnp.maximum(y[:, 2 * mo:3 * mo], y[:, 3 * mo:4 * mo]))
    o_ref[0] = y


def _fused_matmul(col, w, b, *, relu=True, pool=False):
    # col: (N, K, M)   w: (Cout, K)   b: (Cout,)
    N, K, M = col.shape
    Cout = w.shape[0]
    Mo = M // 4 if pool else M
    kernel = functools.partial(_mm_kernel, relu=relu, pool=pool)
    return pl.pallas_call(
        kernel,
        grid=(N,),
        in_specs=[pl.BlockSpec((1, K, M), lambda n: (n, 0, 0)),
                  pl.BlockSpec((Cout, K), lambda n: (0, 0)),
                  pl.BlockSpec((Cout, 1), lambda n: (0, 0))],
        out_specs=pl.BlockSpec((1, Cout, Mo), lambda n: (n, 0, 0)),
        out_shape=jax.ShapeDtypeStruct((N, Cout, Mo), jnp.float32),
        compiler_params=pltpu.CompilerParams(dimension_semantics=("parallel",)),
    )(col, w, b.reshape(Cout, 1))


# ---------------------------------------------------------------------------
# Fused "deconv2 + ReLU + 1x1 heads" kernel:
#   z = relu(Wd @ col + bd)          -- polyphase transposed conv (4*Cout rows)
#   y = Wh_blockdiag @ z + bh        -- pos/cos/sin heads per phase (12 rows)
#   sigmoid on the pos rows (rows 0..3).
# ---------------------------------------------------------------------------
def _deconv_heads_kernel(col_ref, wd_ref, bd_ref, wh_ref, bh_ref, o_ref):
    col = col_ref[0]                                    # (K, M)
    z = jnp.dot(wd_ref[...], col, preferred_element_type=jnp.float32) + bd_ref[...]
    z = jnp.maximum(z, 0.0)
    y = jnp.dot(wh_ref[...], z, preferred_element_type=jnp.float32) + bh_ref[...]
    rows = jax.lax.broadcasted_iota(jnp.int32, y.shape, 0)
    o_ref[0] = jnp.where(rows < 4, jax.nn.sigmoid(y), y)


def _deconv_heads_call(col, wd, bd, wh, bh):
    N, K, M = col.shape
    Cd = wd.shape[0]        # 4 * Cout
    Ch = wh.shape[0]        # 12 = 3 heads * 4 phases
    return pl.pallas_call(
        _deconv_heads_kernel,
        grid=(N,),
        in_specs=[pl.BlockSpec((1, K, M), lambda n: (n, 0, 0)),
                  pl.BlockSpec((Cd, K), lambda n: (0, 0)),
                  pl.BlockSpec((Cd, 1), lambda n: (0, 0)),
                  pl.BlockSpec((Ch, Cd), lambda n: (0, 0)),
                  pl.BlockSpec((Ch, 1), lambda n: (0, 0))],
        out_specs=pl.BlockSpec((1, Ch, M), lambda n: (n, 0, 0)),
        out_shape=jax.ShapeDtypeStruct((N, Ch, M), jnp.float32),
        compiler_params=pltpu.CompilerParams(dimension_semantics=("parallel",)),
    )(col, wd, bd.reshape(Cd, 1), wh, bh.reshape(Ch, 1))


# ---------------------------------------------------------------------------
# Wrapper-side layout plumbing (im2col / phase ordering / weight packing).
# These are tiny tensors (<= a few MB) and pure data movement, not compute.
# ---------------------------------------------------------------------------
def _im2col(x_nchw, KH, KW, pad, dil, pool=False):
    """col[n, ci*KH*KW + kh*KW + kw, m] = xpad[n, ci, h + kh*dil, w + kw*dil].

    If pool=True the output-position index m is phase-major ordered
    ((di, dj, h', w') with h = 2h'+di, w = 2w'+dj) so a 2x2 max pool becomes a
    max over four contiguous lane chunks inside the Pallas kernel.
    """
    N, C, H, W = x_nchw.shape
    Ho = H + 2 * pad - dil * (KH - 1)
    Wo = W + 2 * pad - dil * (KW - 1)
    xp = jnp.pad(x_nchw, ((0, 0), (0, 0), (pad, pad), (pad, pad)))
    taps = []
    for kh in range(KH):
        for kw in range(KW):
            taps.append(xp[:, :, kh * dil:kh * dil + Ho, kw * dil:kw * dil + Wo])
    col = jnp.stack(taps, axis=2)                       # (N, C, T, Ho, Wo)
    if pool:
        col = col.reshape(N, C, KH * KW, Ho // 2, 2, Wo // 2, 2)
        col = col.transpose(0, 1, 2, 4, 6, 3, 5)        # (N, C, T, di, dj, h', w')
    col = col.reshape(N, C * KH * KW, Ho * Wo)
    return col, Ho, Wo


def _deconv_col(x_nchw):
    """Shared 2x2-window col for the polyphase transposed conv.

    col[n, ci*4 + dy*2 + dx, h*W + w] = xpad[n, ci, h + dy, w + dx],
    where x is zero-padded by one row/col on the bottom/right.
    """
    N, C, H, W = x_nchw.shape
    xp = jnp.pad(x_nchw, ((0, 0), (0, 0), (0, 1), (0, 1)))
    taps = [xp[:, :, dy:dy + H, dx:dx + W] for dy in (0, 1) for dx in (0, 1)]
    col = jnp.stack(taps, axis=2).reshape(N, C * 4, H * W)
    return col


def _deconv_phase_weight(wt, r, s):
    """Phase (r, s) filter of ConvTranspose2d(k=3, stride=2, pad=1, outpad=1).

    out[2h+r, 2w+s, co] = sum_{ci,dy,dx} xpad[h+dy, w+dx, ci] * G[co, ci*4+dy*2+dx],
    with G[co, ci, dy, dx] = wt[ci, co, 1+r-2dy, 1+s-2dx] when the kernel index is
    in range, else 0.  wt is the PyTorch (Cin, Cout, 3, 3) weight.
    """
    Cin, Cout = wt.shape[0], wt.shape[1]
    blocks_dy = []
    for dy in (0, 1):
        ky = 1 + r - 2 * dy
        blocks_dx = []
        for dx in (0, 1):
            kx = 1 + s - 2 * dx
            if 0 <= ky <= 2 and 0 <= kx <= 2:
                blocks_dx.append(jnp.transpose(wt[:, :, ky, kx]))   # (Cout, Cin)
            else:
                blocks_dx.append(jnp.zeros((Cout, Cin), wt.dtype))
        blocks_dy.append(jnp.stack(blocks_dx, axis=-1))             # (Cout, Cin, 2)
    g = jnp.stack(blocks_dy, axis=-2)                               # (Cout, Cin, dy, dx)
    return g.reshape(Cout, Cin * 4)


def _deconv_weight(wt):
    # rows ordered phase-major: row = (r*2 + s) * Cout + co
    return jnp.concatenate(
        [_deconv_phase_weight(wt, r, s) for r in (0, 1) for s in (0, 1)], axis=0)


# ---------------------------------------------------------------------------
# Parameters (deterministic xavier-uniform weights, PyTorch-style uniform biases),
# stored in PyTorch-native layouts: Conv2d (Cout, Cin, KH, KW),
# ConvTranspose2d (Cin, Cout, KH, KW), 1x1 heads as (16,) vectors.
# ---------------------------------------------------------------------------
def init_params(key):
    ks = jax.random.split(key, 22)

    def xavier(k, shape, fan_in, fan_out):
        bound = (6.0 / (fan_in + fan_out)) ** 0.5
        return jax.random.uniform(k, shape, jnp.float32, -bound, bound)

    def bias(k, n, fan_in):
        bound = 1.0 / (fan_in ** 0.5)
        return jax.random.uniform(k, (n,), jnp.float32, -bound, bound)

    f = [16, 16, 32, 16]
    p = {}
    p['w1'] = xavier(ks[0], (f[0], 1, 11, 11), 1 * 121, f[0] * 121)
    p['b1'] = bias(ks[1], f[0], 1 * 121)
    p['w2'] = xavier(ks[2], (f[0], f[0], 5, 5), f[0] * 25, f[0] * 25)
    p['b2'] = bias(ks[3], f[0], f[0] * 25)
    p['w3'] = xavier(ks[4], (f[1], f[0], 5, 5), f[0] * 25, f[1] * 25)
    p['b3'] = bias(ks[5], f[1], f[0] * 25)
    p['w4'] = xavier(ks[6], (f[1], f[1], 5, 5), f[1] * 25, f[1] * 25)
    p['b4'] = bias(ks[7], f[1], f[1] * 25)
    p['w5'] = xavier(ks[8], (f[2], f[1], 5, 5), f[1] * 25, f[2] * 25)
    p['b5'] = bias(ks[9], f[2], f[1] * 25)
    p['w6'] = xavier(ks[10], (f[2], f[2], 5, 5), f[2] * 25, f[2] * 25)
    p['b6'] = bias(ks[11], f[2], f[2] * 25)
    p['wt1'] = xavier(ks[12], (f[2], f[3], 3, 3), f[3] * 9, f[2] * 9)
    p['bt1'] = bias(ks[13], f[3], f[3] * 9)
    p['wt2'] = xavier(ks[14], (f[3], f[3], 3, 3), f[3] * 9, f[3] * 9)
    p['bt2'] = bias(ks[15], f[3], f[3] * 9)
    p['w_pos'] = xavier(ks[16], (f[3],), f[3], 1)
    p['b_pos'] = bias(ks[17], 1, f[3])
    p['w_cos'] = xavier(ks[18], (f[3],), f[3], 1)
    p['b_cos'] = bias(ks[19], 1, f[3])
    p['w_sin'] = xavier(ks[20], (f[3],), f[3], 1)
    p['b_sin'] = bias(ks[21], 1, f[3])
    return p


# ---------------------------------------------------------------------------
# Full forward pass (mirrors GGCNN4.forward).  x is NCHW like PyTorch.
# ---------------------------------------------------------------------------
def ggcnn4_forward(params, x_nchw):
    x = x_nchw.astype(jnp.float32)
    N = x.shape[0]

    def conv(t, w, b, *, k, pad, dil=1, pool=False):
        Cout = w.shape[0]
        col, Ho, Wo = _im2col(t, k, k, pad, dil, pool=pool)
        y = _fused_matmul(col, w.reshape(Cout, -1), b, relu=True, pool=pool)
        if pool:
            Ho, Wo = Ho // 2, Wo // 2
        return y.reshape(N, Cout, Ho, Wo)

    x = conv(x, params['w1'], params['b1'], k=11, pad=5)                 # conv 11x11 + relu
    x = conv(x, params['w2'], params['b2'], k=5, pad=2, pool=True)       # conv 5x5 + relu + pool
    x = conv(x, params['w3'], params['b3'], k=5, pad=2)                  # conv 5x5 + relu
    x = conv(x, params['w4'], params['b4'], k=5, pad=2, pool=True)       # conv 5x5 + relu + pool
    x = conv(x, params['w5'], params['b5'], k=5, pad=4, dil=2)           # dilated conv + relu
    x = conv(x, params['w6'], params['b6'], k=5, pad=8, dil=4)           # dilated conv + relu

    # --- deconv1 (polyphase transposed conv, stride 2) + ReLU ----------------
    H, W = x.shape[2], x.shape[3]
    Cout1 = params['wt1'].shape[1]
    col = _deconv_col(x)                                                 # (N, 4*32, H*W)
    y = _fused_matmul(col, _deconv_weight(params['wt1']),
                      jnp.tile(params['bt1'], 4), relu=True, pool=False)  # (N, 4*Cout1, H*W)
    # interleave the four phases back into a (N, Cout1, 2H, 2W) image
    y = (y.reshape(N, 2, 2, Cout1, H, W)
          .transpose(0, 3, 4, 1, 5, 2)
          .reshape(N, Cout1, 2 * H, 2 * W))

    # --- deconv2 + ReLU + fused 1x1 heads (pos/cos/sin), one Pallas call -----
    H2, W2 = y.shape[2], y.shape[3]
    C2 = params['wt2'].shape[1]
    col = _deconv_col(y)                                                 # (N, 4*16, H2*W2)
    wd2 = _deconv_weight(params['wt2'])                                  # (4*C2, 4*16)
    bd2 = jnp.tile(params['bt2'], 4)                                     # (4*C2,)
    wh = jnp.stack([params['w_pos'], params['w_cos'], params['w_sin']], axis=0)   # (3, C2)
    bh = jnp.concatenate([params['b_pos'], params['b_cos'], params['b_sin']])     # (3,)
    # block-diagonal heads weight over the 4 phases: rows = head*4 + phase
    wh_bd = (wh[:, None, None, :] * jnp.eye(4, dtype=wh.dtype)[None, :, :, None]
             ).reshape(3 * 4, 4 * C2)
    bh_bd = jnp.repeat(bh, 4)                                            # (12,)
    heads = _deconv_heads_call(col, wd2, bd2, wh_bd, bh_bd)              # (N, 12, H2*W2)

    # interleave phases: (N, head, r, s, h, w) -> (N, head, 2*H2, 2*W2)
    heads = (heads.reshape(N, 3, 2, 2, H2, W2)
                  .transpose(0, 1, 4, 2, 5, 3)
                  .reshape(N, 3, 2 * H2, 2 * W2))
    pos = heads[:, 0:1]
    cos = heads[:, 1:2]
    sin = heads[:, 2:3]
    return pos, cos, sin


if __name__ == "__main__":
    key = jax.random.PRNGKey(0)
    pkey, xkey = jax.random.split(key)
    params = init_params(pkey)

    # small input consistent with the module: batch=2, input_channels=1, 32x32 spatial
    x = jax.random.normal(xkey, (2, 1, 32, 32), jnp.float32)  # NCHW, like PyTorch

    fwd = jax.jit(ggcnn4_forward)
    pos, cos, sin = fwd(params, x)
    jax.block_until_ready((pos, cos, sin))

    assert pos.shape == (2, 1, 32, 32)
    assert cos.shape == (2, 1, 32, 32)
    assert sin.shape == (2, 1, 32, 32)
    print("KERNEL_OK")
</pallas_src>

<mosaic_0001>
module attributes {stable_mosaic.version = 11 : i64} {
  func.func @_mm_kernel(%arg0: i32, %arg1: memref<1x121x1024xf32, #tpu.memory_space<vmem>>, %arg2: memref<16x121xf32, #tpu.memory_space<vmem>>, %arg3: memref<16x1xf32, #tpu.memory_space<vmem>>, %arg4: memref<1x16x1024xf32, #tpu.memory_space<vmem>>) attributes {dimension_semantics = [#tpu.dimension_semantics<parallel>], iteration_bounds = array<i64: 2>, scalar_prefetch = 0 : i64, scratch_operands = 0 : i64, tpu.core_type = #tpu.core_type<tc>, window_params = [{transform_indices = @transform_0, window_bounds = array<i64: 1, 121, 1024>}, {pipeline_mode = #tpu.pipeline_mode<synchronous>, transform_indices = @transform_1, window_bounds = array<i64: 16, 121>}, {pipeline_mode = #tpu.pipeline_mode<synchronous>, transform_indices = @transform_2, window_bounds = array<i64: 16, 1>}, {transform_indices = @transform_3, window_bounds = array<i64: 1, 16, 1024>}]} {
    %c0 = arith.constant 0 : index
    %c0_0 = arith.constant 0 : index
    %c0_1 = arith.constant 0 : index
    %0 = vector.load %arg1[%c0, %c0_0, %c0_1] : memref<1x121x1024xf32, #tpu.memory_space<vmem>>, vector<1x121x1024xf32>
    %1 = vector.shape_cast %0 : vector<1x121x1024xf32> to vector<121x1024xf32>
    %c0_2 = arith.constant 0 : index
    %c0_3 = arith.constant 0 : index
    %2 = vector.load %arg2[%c0_2, %c0_3] : memref<16x121xf32, #tpu.memory_space<vmem>>, vector<16x121xf32>
    %cst = arith.constant dense<0.000000e+00> : vector<16x1024xf32>
    %3 = tpu.matmul %2, %1, %cst {dimension_numbers = #tpu.dot_dimension_numbers<[1], [0], [0], [1], [0, 0, 1, 1], [], []>} : vector<16x121xf32>, vector<121x1024xf32>, vector<16x1024xf32> -> vector<16x1024xf32>
    %c0_4 = arith.constant 0 : index
    %c0_5 = arith.constant 0 : index
    %4 = vector.load %arg3[%c0_4, %c0_5] : memref<16x1xf32, #tpu.memory_space<vmem>>, vector<16x1xf32>
    %5 = vector.broadcast %4 : vector<16x1xf32> to vector<16x1024xf32>
    %6 = arith.addf %3, %5 : vector<16x1024xf32>
    %cst_6 = arith.constant 0.000000e+00 : f32
    %7 = vector.broadcast %cst_6 : f32 to vector<16x1024xf32>
    %8 = arith.maximumf %6, %7 : vector<16x1024xf32>
    %c0_7 = arith.constant 0 : index
    %c0_8 = arith.constant 0 : index
    %c0_9 = arith.constant 0 : index
    %9 = vector.load %arg4[%c0_7, %c0_8, %c0_9] : memref<1x16x1024xf32, #tpu.memory_space<vmem>>, vector<1x16x1024xf32>
    %10 = vector.shape_cast %9 : vector<1x16x1024xf32> to vector<16x1024xf32>
    %11 = vector.shape_cast %8 : vector<16x1024xf32> to vector<1x16x1024xf32>
    tpu.vector_store %arg4[%c0_7, %c0_8, %c0_9], %11 {strides = array<i32>} : memref<1x16x1024xf32, #tpu.memory_space<vmem>>, vector<1x16x1024xf32>,
    return
  }
  func.func @transform_0(%arg0: i32) -> (i32, i32, i32) {
    %c0_i32 = arith.constant 0 : i32
    %c0_i32_0 = arith.constant 0 : i32
    %c0_i32_1 = arith.constant 0 : i32
    return %arg0, %c0_i32, %c0_i32_0 : i32, i32, i32
  }
  func.func @transform_1(%arg0: i32) -> (i32, i32) {
    %c0_i32 = arith.constant 0 : i32
    %c0_i32_0 = arith.constant 0 : i32
    %c0_i32_1 = arith.constant 0 : i32
    return %c0_i32, %c0_i32_0 : i32, i32
  }
  func.func @transform_2(%arg0: i32) -> (i32, i32) {
    %c0_i32 = arith.constant 0 : i32
    %c0_i32_0 = arith.constant 0 : i32
    %c0_i32_1 = arith.constant 0 : i32
    return %c0_i32, %c0_i32_0 : i32, i32
  }
  func.func @transform_3(%arg0: i32) -> (i32, i32, i32) {
    %c0_i32 = arith.constant 0 : i32
    %c0_i32_0 = arith.constant 0 : i32
    %c0_i32_1 = arith.constant 0 : i32
    return %arg0, %c0_i32, %c0_i32_0 : i32, i32, i32
  }
}

module attributes {stable_mosaic.version = 11 : i64} {
  func.func @_mm_kernel(%arg0: i32, %arg1: memref<1x400x1024xf32, #tpu.memory_space<vmem>>, %arg2: memref<16x400xf32, #tpu.memory_space<vmem>>, %arg3: memref<16x1xf32, #tpu.memory_space<vmem>>, %arg4: memref<1x16x256xf32, #tpu.memory_space<vmem>>) attributes {dimension_semantics = [#tpu.dimension_semantics<parallel>], iteration_bounds = array<i64: 2>, scalar_prefetch = 0 : i64, scratch_operands = 0 : i64, tpu.core_type = #tpu.core_type<tc>, window_params = [{transform_indices = @transform_0, window_bounds = array<i64: 1, 400, 1024>}, {pipeline_mode = #tpu.pipeline_mode<synchronous>, transform_indices = @transform_1, window_bounds = array<i64: 16, 400>}, {pipeline_mode = #tpu.pipeline_mode<synchronous>, transform_indices = @transform_2, window_bounds = array<i64: 16, 1>}, {transform_indices = @transform_3, window_bounds = array<i64: 1, 16, 256>}]} {
    %c0 = arith.constant 0 : index
    %c0_0 = arith.constant 0 : index
    %c0_1 = arith.constant 0 : index
    %0 = vector.load %arg1[%c0, %c0_0, %c0_1] : memref<1x400x1024xf32, #tpu.memory_space<vmem>>, vector<1x400x1024xf32>
    %1 = vector.shape_cast %0 : vector<1x400x1024xf32> to vector<400x1024xf32>
    %c0_2 = arith.constant 0 : index
    %c0_3 = arith.constant 0 : index
    %2 = vector.load %arg2[%c0_2, %c0_3] : memref<16x400xf32, #tpu.memory_space<vmem>>, vector<16x400xf32>
    %cst = arith.constant dense<0.000000e+00> : vector<16x1024xf32>
    %3 = tpu.matmul %2, %1, %cst {dimension_numbers = #tpu.dot_dimension_numbers<[1], [0], [0], [1], [0, 0, 1, 1], [], []>} : vector<16x400xf32>, vector<400x1024xf32>, vector<16x1024xf32> -> vector<16x1024xf32>
    %c0_4 = arith.constant 0 : index
    %c0_5 = arith.constant 0 : index
    %4 = vector.load %arg3[%c0_4, %c0_5] : memref<16x1xf32, #tpu.memory_space<vmem>>, vector<16x1xf32>
    %5 = vector.broadcast %4 : vector<16x1xf32> to vector<16x1024xf32>
    %6 = arith.addf %3, %5 : vector<16x1024xf32>
    %cst_6 = arith.constant 0.000000e+00 : f32
    %7 = vector.broadcast %cst_6 : f32 to vector<16x1024xf32>
    %8 = arith.maximumf %6, %7 : vector<16x1024xf32>
    %9 = vector.extract_strided_slice %8 {offsets = [0, 0], sizes = [16, 256], strides = [1, 1]} : vector<16x1024xf32> to vector<16x256xf32>
    %10 = vector.extract_strided_slice %8 {offsets = [0, 256], sizes = [16, 256], strides = [1, 1]} : vector<16x1024xf32> to vector<16x256xf32>
    %11 = arith.maximumf %9, %10 : vector<16x256xf32>
    %12 = vector.extract_strided_slice %8 {offsets = [0, 512], sizes = [16, 256], strides = [1, 1]} : vector<16x1024xf32> to vector<16x256xf32>
    %13 = vector.extract_strided_slice %8 {offsets = [0, 768], sizes = [16, 256], strides = [1, 1]} : vector<16x1024xf32> to vector<16x256xf32>
    %14 = arith.maximumf %12, %13 : vector<16x256xf32>
    %15 = arith.maximumf %11, %14 : vector<16x256xf32>
    %c0_7 = arith.constant 0 : index
    %c0_8 = arith.constant 0 : index
    %c0_9 = arith.constant 0 : index
    %16 = vector.load %arg4[%c0_7, %c0_8, %c0_9] : memref<1x16x256xf32, #tpu.memory_space<vmem>>, vector<1x16x256xf32>
    %17 = vector.shape_cast %16 : vector<1x16x256xf32> to vector<16x256xf32>
    %18 = vector.shape_cast %15 : vector<16x256xf32> to vector<1x16x256xf32>
    tpu.vector_store %arg4[%c0_7, %c0_8, %c0_9], %18 {strides = array<i32>} : memref<1x16x256xf32, #tpu.memory_space<vmem>>, vector<1x16x256xf32>,
    return
  }
  func.func @transform_0(%arg0: i32) -> (i32, i32, i32) {
    %c0_i32 = arith.constant 0 : i32
    %c0_i32_0 = arith.constant 0 : i32
    %c0_i32_1 = arith.constant 0 : i32
    return %arg0, %c0_i32, %c0_i32_0 : i32, i32, i32
  }
  func.func @transform_1(%arg0: i32) -> (i32, i32) {
    %c0_i32 = arith.constant 0 : i32
    %c0_i32_0 = arith.constant 0 : i32
    %c0_i32_1 = arith.constant 0 : i32
    return %c0_i32, %c0_i32_0 : i32, i32
  }
  func.func @transform_2(%arg0: i32) -> (i32, i32) {
    %c0_i32 = arith.constant 0 : i32
    %c0_i32_0 = arith.constant 0 : i32
    %c0_i32_1 = arith.constant 0 : i32
    return %c0_i32, %c0_i32_0 : i32, i32
  }
  func.func @transform_3(%arg0: i32) -> (i32, i32, i32) {
    %c0_i32 = arith.constant 0 : i32
    %c0_i32_0 = arith.constant 0 : i32
    %c0_i32_1 = arith.constant 0 : i32
    return %arg0, %c0_i32, %c0_i32_0 : i32, i32, i32
  }
}

module attributes {stable_mosaic.version = 11 : i64} {
  func.func @_mm_kernel(%arg0: i32, %arg1: memref<1x400x256xf32, #tpu.memory_space<vmem>>, %arg2: memref<16x400xf32, #tpu.memory_space<vmem>>, %arg3: memref<16x1xf32, #tpu.memory_space<vmem>>, %arg4: memref<1x16x256xf32, #tpu.memory_space<vmem>>) attributes {dimension_semantics = [#tpu.dimension_semantics<parallel>], iteration_bounds = array<i64: 2>, scalar_prefetch = 0 : i64, scratch_operands = 0 : i64, tpu.core_type = #tpu.core_type<tc>, window_params = [{transform_indices = @transform_0, window_bounds = array<i64: 1, 400, 256>}, {pipeline_mode = #tpu.pipeline_mode<synchronous>, transform_indices = @transform_1, window_bounds = array<i64: 16, 400>}, {pipeline_mode = #tpu.pipeline_mode<synchronous>, transform_indices = @transform_2, window_bounds = array<i64: 16, 1>}, {transform_indices = @transform_3, window_bounds = array<i64: 1, 16, 256>}]} {
    %c0 = arith.constant 0 : index
    %c0_0 = arith.constant 0 : index
    %c0_1 = arith.constant 0 : index
    %0 = vector.load %arg1[%c0, %c0_0, %c0_1] : memref<1x400x256xf32, #tpu.memory_space<vmem>>, vector<1x400x256xf32>
    %1 = vector.shape_cast %0 : vector<1x400x256xf32> to vector<400x256xf32>
    %c0_2 = arith.constant 0 : index
    %c0_3 = arith.constant 0 : index
    %2 = vector.load %arg2[%c0_2, %c0_3] : memref<16x400xf32, #tpu.memory_space<vmem>>, vector<16x400xf32>
    %cst = arith.constant dense<0.000000e+00> : vector<16x256xf32>
    %3 = tpu.matmul %2, %1, %cst {dimension_numbers = #tpu.dot_dimension_numbers<[1], [0], [0], [1], [0, 0, 1, 1], [], []>} : vector<16x400xf32>, vector<400x256xf32>, vector<16x256xf32> -> vector<16x256xf32>
    %c0_4 = arith.constant 0 : index
    %c0_5 = arith.constant 0 : index
    %4 = vector.load %arg3[%c0_4, %c0_5] : memref<16x1xf32, #tpu.memory_space<vmem>>, vector<16x1xf32>
    %5 = vector.broadcast %4 : vector<16x1xf32> to vector<16x256xf32>
    %6 = arith.addf %3, %5 : vector<16x256xf32>
    %cst_6 = arith.constant 0.000000e+00 : f32
    %7 = vector.broadcast %cst_6 : f32 to vector<16x256xf32>
    %8 = arith.maximumf %6, %7 : vector<16x256xf32>
    %c0_7 = arith.constant 0 : index
    %c0_8 = arith.constant 0 : index
    %c0_9 = arith.constant 0 : index
    %9 = vector.load %arg4[%c0_7, %c0_8, %c0_9] : memref<1x16x256xf32, #tpu.memory_space<vmem>>, vector<1x16x256xf32>
    %10 = vector.shape_cast %9 : vector<1x16x256xf32> to vector<16x256xf32>
    %11 = vector.shape_cast %8 : vector<16x256xf32> to vector<1x16x256xf32>
    tpu.vector_store %arg4[%c0_7, %c0_8, %c0_9], %11 {strides = array<i32>} : memref<1x16x256xf32, #tpu.memory_space<vmem>>, vector<1x16x256xf32>,
    return
  }
  func.func @transform_0(%arg0: i32) -> (i32, i32, i32) {
    %c0_i32 = arith.constant 0 : i32
    %c0_i32_0 = arith.constant 0 : i32
    %c0_i32_1 = arith.constant 0 : i32
    return %arg0, %c0_i32, %c0_i32_0 : i32, i32, i32
  }
  func.func @transform_1(%arg0: i32) -> (i32, i32) {
    %c0_i32 = arith.constant 0 : i32
    %c0_i32_0 = arith.constant 0 : i32
    %c0_i32_1 = arith.constant 0 : i32
    return %c0_i32, %c0_i32_0 : i32, i32
  }
  func.func @transform_2(%arg0: i32) -> (i32, i32) {
    %c0_i32 = arith.constant 0 : i32
    %c0_i32_0 = arith.constant 0 : i32
    %c0_i32_1 = arith.constant 0 : i32
    return %c0_i32, %c0_i32_0 : i32, i32
  }
  func.func @transform_3(%arg0: i32) -> (i32, i32, i32) {
    %c0_i32 = arith.constant 0 : i32
    %c0_i32_0 = arith.constant 0 : i32
    %c0_i32_1 = arith.constant 0 : i32
    return %arg0, %c0_i32, %c0_i32_0 : i32, i32, i32
  }
}

module attributes {stable_mosaic.version = 11 : i64} {
  func.func @_mm_kernel(%arg0: i32, %arg1: memref<1x400x256xf32, #tpu.memory_space<vmem>>, %arg2: memref<16x400xf32, #tpu.memory_space<vmem>>, %arg3: memref<16x1xf32, #tpu.memory_space<vmem>>, %arg4: memref<1x16x64xf32, #tpu.memory_space<vmem>>) attributes {dimension_semantics = [#tpu.dimension_semantics<parallel>], iteration_bounds = array<i64: 2>, scalar_prefetch = 0 : i64, scratch_operands = 0 : i64, tpu.core_type = #tpu.core_type<tc>, window_params = [{transform_indices = @transform_0, window_bounds = array<i64: 1, 400, 256>}, {pipeline_mode = #tpu.pipeline_mode<synchronous>, transform_indices = @transform_1, window_bounds = array<i64: 16, 400>}, {pipeline_mode = #tpu.pipeline_mode<synchronous>, transform_indices = @transform_2, window_bounds = array<i64: 16, 1>}, {transform_indices = @transform_3, window_bounds = array<i64: 1, 16, 64>}]} {
    %c0 = arith.constant 0 : index
    %c0_0 = arith.constant 0 : index
    %c0_1 = arith.constant 0 : index
    %0 = vector.load %arg1[%c0, %c0_0, %c0_1] : memref<1x400x256xf32, #tpu.memory_space<vmem>>, vector<1x400x256xf32>
    %1 = vector.shape_cast %0 : vector<1x400x256xf32> to vector<400x256xf32>
    %c0_2 = arith.constant 0 : index
    %c0_3 = arith.constant 0 : index
    %2 = vector.load %arg2[%c0_2, %c0_3] : memref<16x400xf32, #tpu.memory_space<vmem>>, vector<16x400xf32>
    %cst = arith.constant dense<0.000000e+00> : vector<16x256xf32>
    %3 = tpu.matmul %2, %1, %cst {dimension_numbers = #tpu.dot_dimension_numbers<[1], [0], [0], [1], [0, 0, 1, 1], [], []>} : vector<16x400xf32>, vector<400x256xf32>, vector<16x256xf32> -> vector<16x256xf32>
    %c0_4 = arith.constant 0 : index
    %c0_5 = arith.constant 0 : index
    %4 = vector.load %arg3[%c0_4, %c0_5] : memref<16x1xf32, #tpu.memory_space<vmem>>, vector<16x1xf32>
    %5 = vector.broadcast %4 : vector<16x1xf32> to vector<16x256xf32>
    %6 = arith.addf %3, %5 : vector<16x256xf32>
    %cst_6 = arith.constant 0.000000e+00 : f32
    %7 = vector.broadcast %cst_6 : f32 to vector<16x256xf32>
    %8 = arith.maximumf %6, %7 : vector<16x256xf32>
    %9 = vector.extract_strided_slice %8 {offsets = [0, 0], sizes = [16, 64], strides = [1, 1]} : vector<16x256xf32> to vector<16x64xf32>
    %10 = vector.extract_strided_slice %8 {offsets = [0, 64], sizes = [16, 64], strides = [1, 1]} : vector<16x256xf32> to vector<16x64xf32>
    %11 = arith.maximumf %9, %10 : vector<16x64xf32>
    %12 = vector.extract_strided_slice %8 {offsets = [0, 128], sizes = [16, 64], strides = [1, 1]} : vector<16x256xf32> to vector<16x64xf32>
    %13 = vector.extract_strided_slice %8 {offsets = [0, 192], sizes = [16, 64], strides = [1, 1]} : vector<16x256xf32> to vector<16x64xf32>
    %14 = arith.maximumf %12, %13 : vector<16x64xf32>
    %15 = arith.maximumf %11, %14 : vector<16x64xf32>
    %c0_7 = arith.constant 0 : index
    %c0_8 = arith.constant 0 : index
    %c0_9 = arith.constant 0 : index
    %16 = vector.load %arg4[%c0_7, %c0_8, %c0_9] : memref<1x16x64xf32, #tpu.memory_space<vmem>>, vector<1x16x64xf32>
    %17 = vector.shape_cast %16 : vector<1x16x64xf32> to vector<16x64xf32>
    %18 = vector.shape_cast %15 : vector<16x64xf32> to vector<1x16x64xf32>
    tpu.vector_store %arg4[%c0_7, %c0_8, %c0_9], %18 {strides = array<i32>} : memref<1x16x64xf32, #tpu.memory_space<vmem>>, vector<1x16x64xf32>,
    return
  }
  func.func @transform_0(%arg0: i32) -> (i32, i32, i32) {
    %c0_i32 = arith.constant 0 : i32
    %c0_i32_0 = arith.constant 0 : i32
    %c0_i32_1 = arith.constant 0 : i32
    return %arg0, %c0_i32, %c0_i32_0 : i32, i32, i32
  }
  func.func @transform_1(%arg0: i32) -> (i32, i32) {
    %c0_i32 = arith.constant 0 : i32
    %c0_i32_0 = arith.constant 0 : i32
    %c0_i32_1 = arith.constant 0 : i32
    return %c0_i32, %c0_i32_0 : i32, i32
  }
  func.func @transform_2(%arg0: i32) -> (i32, i32) {
    %c0_i32 = arith.constant 0 : i32
    %c0_i32_0 = arith.constant 0 : i32
    %c0_i32_1 = arith.constant 0 : i32
    return %c0_i32, %c0_i32_0 : i32, i32
  }
  func.func @transform_3(%arg0: i32) -> (i32, i32, i32) {
    %c0_i32 = arith.constant 0 : i32
    %c0_i32_0 = arith.constant 0 : i32
    %c0_i32_1 = arith.constant 0 : i32
    return %arg0, %c0_i32, %c0_i32_0 : i32, i32, i32
  }
}

module attributes {stable_mosaic.version = 11 : i64} {
  func.func @_mm_kernel(%arg0: i32, %arg1: memref<1x400x64xf32, #tpu.memory_space<vmem>>, %arg2: memref<32x400xf32, #tpu.memory_space<vmem>>, %arg3: memref<32x1xf32, #tpu.memory_space<vmem>>, %arg4: memref<1x32x64xf32, #tpu.memory_space<vmem>>) attributes {dimension_semantics = [#tpu.dimension_semantics<parallel>], iteration_bounds = array<i64: 2>, scalar_prefetch = 0 : i64, scratch_operands = 0 : i64, tpu.core_type = #tpu.core_type<tc>, window_params = [{transform_indices = @transform_0, window_bounds = array<i64: 1, 400, 64>}, {pipeline_mode = #tpu.pipeline_mode<synchronous>, transform_indices = @transform_1, window_bounds = array<i64: 32, 400>}, {pipeline_mode = #tpu.pipeline_mode<synchronous>, transform_indices = @transform_2, window_bounds = array<i64: 32, 1>}, {transform_indices = @transform_3, window_bounds = array<i64: 1, 32, 64>}]} {
    %c0 = arith.constant 0 : index
    %c0_0 = arith.constant 0 : index
    %c0_1 = arith.constant 0 : index
    %0 = vector.load %arg1[%c0, %c0_0, %c0_1] : memref<1x400x64xf32, #tpu.memory_space<vmem>>, vector<1x400x64xf32>
    %1 = vector.shape_cast %0 : vector<1x400x64xf32> to vector<400x64xf32>
    %c0_2 = arith.constant 0 : index
    %c0_3 = arith.constant 0 : index
    %2 = vector.load %arg2[%c0_2, %c0_3] : memref<32x400xf32, #tpu.memory_space<vmem>>, vector<32x400xf32>
    %cst = arith.constant dense<0.000000e+00> : vector<32x64xf32>
    %3 = tpu.matmul %2, %1, %cst {dimension_numbers = #tpu.dot_dimension_numbers<[1], [0], [0], [1], [0, 0, 1, 1], [], []>} : vector<32x400xf32>, vector<400x64xf32>, vector<32x64xf32> -> vector<32x64xf32>
    %c0_4 = arith.constant 0 : index
    %c0_5 = arith.constant 0 : index
    %4 = vector.load %arg3[%c0_4, %c0_5] : memref<32x1xf32, #tpu.memory_space<vmem>>, vector<32x1xf32>
    %5 = vector.broadcast %4 : vector<32x1xf32> to vector<32x64xf32>
    %6 = arith.addf %3, %5 : vector<32x64xf32>
    %cst_6 = arith.constant 0.000000e+00 : f32
    %7 = vector.broadcast %cst_6 : f32 to vector<32x64xf32>
    %8 = arith.maximumf %6, %7 : vector<32x64xf32>
    %c0_7 = arith.constant 0 : index
    %c0_8 = arith.constant 0 : index
    %c0_9 = arith.constant 0 : index
    %9 = vector.load %arg4[%c0_7, %c0_8, %c0_9] : memref<1x32x64xf32, #tpu.memory_space<vmem>>, vector<1x32x64xf32>
    %10 = vector.shape_cast %9 : vector<1x32x64xf32> to vector<32x64xf32>
    %11 = vector.shape_cast %8 : vector<32x64xf32> to vector<1x32x64xf32>
    tpu.vector_store %arg4[%c0_7, %c0_8, %c0_9], %11 {strides = array<i32>} : memref<1x32x64xf32, #tpu.memory_space<vmem>>, vector<1x32x64xf32>,
    return
  }
  func.func @transform_0(%arg0: i32) -> (i32, i32, i32) {
    %c0_i32 = arith.constant 0 : i32
    %c0_i32_0 = arith.constant 0 : i32
    %c0_i32_1 = arith.constant 0 : i32
    return %arg0, %c0_i32, %c0_i32_0 : i32, i32, i32
  }
  func.func @transform_1(%arg0: i32) -> (i32, i32) {
    %c0_i32 = arith.constant 0 : i32
    %c0_i32_0 = arith.constant 0 : i32
    %c0_i32_1 = arith.constant 0 : i32
    return %c0_i32, %c0_i32_0 : i32, i32
  }
  func.func @transform_2(%arg0: i32) -> (i32, i32) {
    %c0_i32 = arith.constant 0 : i32
    %c0_i32_0 = arith.constant 0 : i32
    %c0_i32_1 = arith.constant 0 : i32
    return %c0_i32, %c0_i32_0 : i32, i32
  }
  func.func @transform_3(%arg0: i32) -> (i32, i32, i32) {
    %c0_i32 = arith.constant 0 : i32
    %c0_i32_0 = arith.constant 0 : i32
    %c0_i32_1 = arith.constant 0 : i32
    return %arg0, %c0_i32, %c0_i32_0 : i32, i32, i32
  }
}

module attributes {stable_mosaic.version = 11 : i64} {
  func.func @_mm_kernel(%arg0: i32, %arg1: memref<1x800x64xf32, #tpu.memory_space<vmem>>, %arg2: memref<32x800xf32, #tpu.memory_space<vmem>>, %arg3: memref<32x1xf32, #tpu.memory_space<vmem>>, %arg4: memref<1x32x64xf32, #tpu.memory_space<vmem>>) attributes {dimension_semantics = [#tpu.dimension_semantics<parallel>], iteration_bounds = array<i64: 2>, scalar_prefetch = 0 : i64, scratch_operands = 0 : i64, tpu.core_type = #tpu.core_type<tc>, window_params = [{transform_indices = @transform_0, window_bounds = array<i64: 1, 800, 64>}, {pipeline_mode = #tpu.pipeline_mode<synchronous>, transform_indices = @transform_1, window_bounds = array<i64: 32, 800>}, {pipeline_mode = #tpu.pipeline_mode<synchronous>, transform_indices = @transform_2, window_bounds = array<i64: 32, 1>}, {transform_indices = @transform_3, window_bounds = array<i64: 1, 32, 64>}]} {
    %c0 = arith.constant 0 : index
    %c0_0 = arith.constant 0 : index
    %c0_1 = arith.constant 0 : index
    %0 = vector.load %arg1[%c0, %c0_0, %c0_1] : memref<1x800x64xf32, #tpu.memory_space<vmem>>, vector<1x800x64xf32>
    %1 = vector.shape_cast %0 : vector<1x800x64xf32> to vector<800x64xf32>
    %c0_2 = arith.constant 0 : index
    %c0_3 = arith.constant 0 : index
    %2 = vector.load %arg2[%c0_2, %c0_3] : memref<32x800xf32, #tpu.memory_space<vmem>>, vector<32x800xf32>
    %cst = arith.constant dense<0.000000e+00> : vector<32x64xf32>
    %3 = tpu.matmul %2, %1, %cst {dimension_numbers = #tpu.dot_dimension_numbers<[1], [0], [0], [1], [0, 0, 1, 1], [], []>} : vector<32x800xf32>, vector<800x64xf32>, vector<32x64xf32> -> vector<32x64xf32>
    %c0_4 = arith.constant 0 : index
    %c0_5 = arith.constant 0 : index
    %4 = vector.load %arg3[%c0_4, %c0_5] : memref<32x1xf32, #tpu.memory_space<vmem>>, vector<32x1xf32>
    %5 = vector.broadcast %4 : vector<32x1xf32> to vector<32x64xf32>
    %6 = arith.addf %3, %5 : vector<32x64xf32>
    %cst_6 = arith.constant 0.000000e+00 : f32
    %7 = vector.broadcast %cst_6 : f32 to vector<32x64xf32>
    %8 = arith.maximumf %6, %7 : vector<32x64xf32>
    %c0_7 = arith.constant 0 : index
    %c0_8 = arith.constant 0 : index
    %c0_9 = arith.constant 0 : index
    %9 = vector.load %arg4[%c0_7, %c0_8, %c0_9] : memref<1x32x64xf32, #tpu.memory_space<vmem>>, vector<1x32x64xf32>
    %10 = vector.shape_cast %9 : vector<1x32x64xf32> to vector<32x64xf32>
    %11 = vector.shape_cast %8 : vector<32x64xf32> to vector<1x32x64xf32>
    tpu.vector_store %arg4[%c0_7, %c0_8, %c0_9], %11 {strides = array<i32>} : memref<1x32x64xf32, #tpu.memory_space<vmem>>, vector<1x32x64xf32>,
    return
  }
  func.func @transform_0(%arg0: i32) -> (i32, i32, i32) {
    %c0_i32 = arith.constant 0 : i32
    %c0_i32_0 = arith.constant 0 : i32
    %c0_i32_1 = arith.constant 0 : i32
    return %arg0, %c0_i32, %c0_i32_0 : i32, i32, i32
  }
  func.func @transform_1(%arg0: i32) -> (i32, i32) {
    %c0_i32 = arith.constant 0 : i32
    %c0_i32_0 = arith.constant 0 : i32
    %c0_i32_1 = arith.constant 0 : i32
    return %c0_i32, %c0_i32_0 : i32, i32
  }
  func.func @transform_2(%arg0: i32) -> (i32, i32) {
    %c0_i32 = arith.constant 0 : i32
    %c0_i32_0 = arith.constant 0 : i32
    %c0_i32_1 = arith.constant 0 : i32
    return %c0_i32, %c0_i32_0 : i32, i32
  }
  func.func @transform_3(%arg0: i32) -> (i32, i32, i32) {
    %c0_i32 = arith.constant 0 : i32
    %c0_i32_0 = arith.constant 0 : i32
    %c0_i32_1 = arith.constant 0 : i32
    return %arg0, %c0_i32, %c0_i32_0 : i32, i32, i32
  }
}

module attributes {stable_mosaic.version = 11 : i64} {
  func.func @_mm_kernel(%arg0: i32, %arg1: memref<1x128x64xf32, #tpu.memory_space<vmem>>, %arg2: memref<64x128xf32, #tpu.memory_space<vmem>>, %arg3: memref<64x1xf32, #tpu.memory_space<vmem>>, %arg4: memref<1x64x64xf32, #tpu.memory_space<vmem>>) attributes {dimension_semantics = [#tpu.dimension_semantics<parallel>], iteration_bounds = array<i64: 2>, scalar_prefetch = 0 : i64, scratch_operands = 0 : i64, tpu.core_type = #tpu.core_type<tc>, window_params = [{transform_indices = @transform_0, window_bounds = array<i64: 1, 128, 64>}, {pipeline_mode = #tpu.pipeline_mode<synchronous>, transform_indices = @transform_1, window_bounds = array<i64: 64, 128>}, {pipeline_mode = #tpu.pipeline_mode<synchronous>, transform_indices = @transform_2, window_bounds = array<i64: 64, 1>}, {transform_indices = @transform_3, window_bounds = array<i64: 1, 64, 64>}]} {
    %c0 = arith.constant 0 : index
    %c0_0 = arith.constant 0 : index
    %c0_1 = arith.constant 0 : index
    %0 = vector.load %arg1[%c0, %c0_0, %c0_1] : memref<1x128x64xf32, #tpu.memory_space<vmem>>, vector<1x128x64xf32>
    %1 = vector.shape_cast %0 : vector<1x128x64xf32> to vector<128x64xf32>
    %c0_2 = arith.constant 0 : index
    %c0_3 = arith.constant 0 : index
    %2 = vector.load %arg2[%c0_2, %c0_3] : memref<64x128xf32, #tpu.memory_space<vmem>>, vector<64x128xf32>
    %cst = arith.constant dense<0.000000e+00> : vector<64x64xf32>
    %3 = tpu.matmul %2, %1, %cst {dimension_numbers = #tpu.dot_dimension_numbers<[1], [0], [0], [1], [0, 0, 1, 1], [], []>} : vector<64x128xf32>, vector<128x64xf32>, vector<64x64xf32> -> vector<64x64xf32>
    %c0_4 = arith.constant 0 : index
    %c0_5 = arith.constant 0 : index
    %4 = vector.load %arg3[%c0_4, %c0_5] : memref<64x1xf32, #tpu.memory_space<vmem>>, vector<64x1xf32>
    %5 = vector.broadcast %4 : vector<64x1xf32> to vector<64x64xf32>
    %6 = arith.addf %3, %5 : vector<64x64xf32>
    %cst_6 = arith.constant 0.000000e+00 : f32
    %7 = vector.broadcast %cst_6 : f32 to vector<64x64xf32>
    %8 = arith.maximumf %6, %7 : vector<64x64xf32>
    %c0_7 = arith.constant 0 : index
    %c0_8 = arith.constant 0 : index
    %c0_9 = arith.constant 0 : index
    %9 = vector.load %arg4[%c0_7, %c0_8, %c0_9] : memref<1x64x64xf32, #tpu.memory_space<vmem>>, vector<1x64x64xf32>
    %10 = vector.shape_cast %9 : vector<1x64x64xf32> to vector<64x64xf32>
    %11 = vector.shape_cast %8 : vector<64x64xf32> to vector<1x64x64xf32>
    tpu.vector_store %arg4[%c0_7, %c0_8, %c0_9], %11 {strides = array<i32>} : memref<1x64x64xf32, #tpu.memory_space<vmem>>, vector<1x64x64xf32>,
    return
  }
  func.func @transform_0(%arg0: i32) -> (i32, i32, i32) {
    %c0_i32 = arith.constant 0 : i32
    %c0_i32_0 = arith.constant 0 : i32
    %c0_i32_1 = arith.constant 0 : i32
    return %arg0, %c0_i32, %c0_i32_0 : i32, i32, i32
  }
  func.func @transform_1(%arg0: i32) -> (i32, i32) {
    %c0_i32 = arith.constant 0 : i32
    %c0_i32_0 = arith.constant 0 : i32
    %c0_i32_1 = arith.constant 0 : i32
    return %c0_i32, %c0_i32_0 : i32, i32
  }
  func.func @transform_2(%arg0: i32) -> (i32, i32) {
    %c0_i32 = arith.constant 0 : i32
    %c0_i32_0 = arith.constant 0 : i32
    %c0_i32_1 = arith.constant 0 : i32
    return %c0_i32, %c0_i32_0 : i32, i32
  }
  func.func @transform_3(%arg0: i32) -> (i32, i32, i32) {
    %c0_i32 = arith.constant 0 : i32
    %c0_i32_0 = arith.constant 0 : i32
    %c0_i32_1 = arith.constant 0 : i32
    return %arg0, %c0_i32, %c0_i32_0 : i32, i32, i32
  }
}

module attributes {stable_mosaic.version = 11 : i64} {
  func.func @_deconv_heads_kernel(%arg0: i32, %arg1: memref<1x64x256xf32, #tpu.memory_space<vmem>>, %arg2: memref<64x64xf32, #tpu.memory_space<vmem>>, %arg3: memref<64x1xf32, #tpu.memory_space<vmem>>, %arg4: memref<12x64xf32, #tpu.memory_space<vmem>>, %arg5: memref<12x1xf32, #tpu.memory_space<vmem>>, %arg6: memref<1x12x256xf32, #tpu.memory_space<vmem>>) attributes {dimension_semantics = [#tpu.dimension_semantics<parallel>], iteration_bounds = array<i64: 2>, scalar_prefetch = 0 : i64, scratch_operands = 0 : i64, tpu.core_type = #tpu.core_type<tc>, window_params = [{transform_indices = @transform_0, window_bounds = array<i64: 1, 64, 256>}, {pipeline_mode = #tpu.pipeline_mode<synchronous>, transform_indices = @transform_1, window_bounds = array<i64: 64, 64>}, {pipeline_mode = #tpu.pipeline_mode<synchronous>, transform_indices = @transform_2, window_bounds = array<i64: 64, 1>}, {pipeline_mode = #tpu.pipeline_mode<synchronous>, transform_indices = @transform_3, window_bounds = array<i64: 12, 64>}, {pipeline_mode = #tpu.pipeline_mode<synchronous>, transform_indices = @transform_4, window_bounds = array<i64: 12, 1>}, {transform_indices = @transform_5, window_bounds = array<i64: 1, 12, 256>}]} {
    %c0 = arith.constant 0 : index
    %c0_0 = arith.constant 0 : index
    %c0_1 = arith.constant 0 : index
    %0 = vector.load %arg1[%c0, %c0_0, %c0_1] : memref<1x64x256xf32, #tpu.memory_space<vmem>>, vector<1x64x256xf32>
    %1 = vector.shape_cast %0 : vector<1x64x256xf32> to vector<64x256xf32>
    %c0_2 = arith.constant 0 : index
    %c0_3 = arith.constant 0 : index
    %2 = vector.load %arg2[%c0_2, %c0_3] : memref<64x64xf32, #tpu.memory_space<vmem>>, vector<64x64xf32>
    %cst = arith.constant dense<0.000000e+00> : vector<64x256xf32>
    %3 = tpu.matmul %2, %1, %cst {dimension_numbers = #tpu.dot_dimension_numbers<[1], [0], [0], [1], [0, 0, 1, 1], [], []>} : vector<64x64xf32>, vector<64x256xf32>, vector<64x256xf32> -> vector<64x256xf32>
    %c0_4 = arith.constant 0 : index
    %c0_5 = arith.constant 0 : index
    %4 = vector.load %arg3[%c0_4, %c0_5] : memref<64x1xf32, #tpu.memory_space<vmem>>, vector<64x1xf32>
    %5 = vector.broadcast %4 : vector<64x1xf32> to vector<64x256xf32>
    %6 = arith.addf %3, %5 : vector<64x256xf32>
    %cst_6 = arith.constant 0.000000e+00 : f32
    %7 = vector.broadcast %cst_6 : f32 to vector<64x256xf32>
    %8 = arith.maximumf %6, %7 : vector<64x256xf32>
    %c0_7 = arith.constant 0 : index
    %c0_8 = arith.constant 0 : index
    %9 = vector.load %arg4[%c0_7, %c0_8] : memref<12x64xf32, #tpu.memory_space<vmem>>, vector<12x64xf32>
    %cst_9 = arith.constant dense<0.000000e+00> : vector<12x256xf32>
    %10 = tpu.matmul %9, %8, %cst_9 {dimension_numbers = #tpu.dot_dimension_numbers<[1], [0], [0], [1], [0, 0, 1, 1], [], []>} : vector<12x64xf32>, vector<64x256xf32>, vector<12x256xf32> -> vector<12x256xf32>
    %c0_10 = arith.constant 0 : index
    %c0_11 = arith.constant 0 : index
    %11 = vector.load %arg5[%c0_10, %c0_11] : memref<12x1xf32, #tpu.memory_space<vmem>>, vector<12x1xf32>
    %12 = vector.broadcast %11 : vector<12x1xf32> to vector<12x256xf32>
    %13 = arith.addf %10, %12 : vector<12x256xf32>
    %14 = tpu.iota {dimensions = array<i32: 0>} : vector<12x256xi32>
    %c4_i32 = arith.constant 4 : i32
    %15 = vector.broadcast %c4_i32 : i32 to vector<12x256xi32>
    %16 = arith.cmpi slt, %14, %15 : vector<12x256xi32>
    %17 = arith.negf %13 : vector<12x256xf32>
    %18 = math.exp %17 : vector<12x256xf32>
    %cst_12 = arith.constant 1.000000e+00 : f32
    %19 = vector.broadcast %cst_12 : f32 to vector<12x256xf32>
    %20 = arith.addf %19, %18 : vector<12x256xf32>
    %21 = arith.divf %19, %20 : vector<12x256xf32>
    %22 = arith.select %16, %21, %13 : vector<12x256xi1>, vector<12x256xf32>
    %c0_13 = arith.constant 0 : index
    %c0_14 = arith.constant 0 : index
    %c0_15 = arith.constant 0 : index
    %23 = vector.load %arg6[%c0_13, %c0_14, %c0_15] : memref<1x12x256xf32, #tpu.memory_space<vmem>>, vector<1x12x256xf32>
    %24 = vector.shape_cast %23 : vector<1x12x256xf32> to vector<12x256xf32>
    %25 = vector.shape_cast %22 : vector<12x256xf32> to vector<1x12x256xf32>
    tpu.vector_store %arg6[%c0_13, %c0_14, %c0_15], %25 {strides = array<i32>} : memref<1x12x256xf32, #tpu.memory_space<vmem>>, vector<1x12x256xf32>,
    return
  }
  func.func @transform_0(%arg0: i32) -> (i32, i32, i32) {
    %c0_i32 = arith.constant 0 : i32
    %c0_i32_0 = arith.constant 0 : i32
    %c0_i32_1 = arith.constant 0 : i32
    return %arg0, %c0_i32, %c0_i32_0 : i32, i32, i32
  }
  func.func @transform_1(%arg0: i32) -> (i32, i32) {
    %c0_i32 = arith.constant 0 : i32
    %c0_i32_0 = arith.constant 0 : i32
    %c0_i32_1 = arith.constant 0 : i32
    return %c0_i32, %c0_i32_0 : i32, i32
  }
  func.func @transform_2(%arg0: i32) -> (i32, i32) {
    %c0_i32 = arith.constant 0 : i32
    %c0_i32_0 = arith.constant 0 : i32
    %c0_i32_1 = arith.constant 0 : i32
    return %c0_i32, %c0_i32_0 : i32, i32
  }
  func.func @transform_3(%arg0: i32) -> (i32, i32) {
    %c0_i32 = arith.constant 0 : i32
    %c0_i32_0 = arith.constant 0 : i32
    %c0_i32_1 = arith.constant 0 : i32
    return %c0_i32, %c0_i32_0 : i32, i32
  }
  func.func @transform_4(%arg0: i32) -> (i32, i32) {
    %c0_i32 = arith.constant 0 : i32
    %c0_i32_0 = arith.constant 0 : i32
    %c0_i32_1 = arith.constant 0 : i32
    return %c0_i32, %c0_i32_0 : i32, i32
  }
  func.func @transform_5(%arg0: i32) -> (i32, i32, i32) {
    %c0_i32 = arith.constant 0 : i32
    %c0_i32_0 = arith.constant 0 : i32
    %c0_i32_1 = arith.constant 0 : i32
    return %arg0, %c0_i32, %c0_i32_0 : i32, i32, i32
  }
}

</mosaic_0001>

<llo_original>
// kernel: ggcnn4_forward.8
$region0: #{ggcnn4_forward.8}
  #allocation0 [shape = 'u32[]', space=smem, size = 0x4, offset = 0x4, fixed_abs, tag = 'smem constant byte address 0x4 - core index']
  #allocation1 [shape = 'u32[144,128]{1,0:T(1,128)}', space=vmem, size = 0x12000, scoped, tag = 'internal scratch']
  %s0 = inlined_call_operand.vmem [shape: f32[2,121,1024], index: 0, kind: input, shape index: {}]
  %s1 = inlined_call_operand.vmem [shape: f32[16,121], index: 1, kind: input, shape index: {}]
  %s2 = inlined_call_operand.vmem [shape: f32[16,1], index: 2, kind: input, shape index: {}]
  %s3 = inlined_call_operand.vmem [shape: f32[2,16,1024], index: 3, kind: output, shape index: {}]
  %s4 = sld [smem:[#allocation0]]
  $region45: #{ggcnn4_forward.8} parent=0
    _
  %s6 = ssub.s32 1, %s4
  %s7 = scalar_select 0, %s6, %s4
  loop: start=0, step=1, limit=4
  $region2: #{ggcnn4_forward.8} parent=0 // loop_pre_header
    _
  $region3: #{ggcnn4_forward.8} parent=0 // loop_header
    %s9 = sphi 0, %s13
    %p10 = scmp.ge.s32.totalorder %s9, 4
    %s19 = sphi 0, %s21
    %s22 = sphi 0, %s19
    %s23 = sphi 0, %s22
    %s39 = sphi 0, %s23
    %s43 = sphi 0, %s43
    %s45 = sphi 0, %s43
    %s46 = sphi 0, %s45
    %s60 = sphi 0, %s46
    %s64 = sphi 0, %s64
    %s66 = sphi 0, %s64
    %s67 = sphi 0, %s66
    %s81 = sphi 0, %s67
    %s87 = sphi 0, %s89
    %s90 = sphi 0, %s87
    %s91 = sphi 0, %s90
    %s107 = sphi 0, %s91
  $region4: #{ggcnn4_forward.8} parent=0 // loop_header_branch
    %12 = sbr.rel (%p10) target = $region8
  $region5: #{ggcnn4_forward.8} parent=0 // loop_body
    %s14 = ssub.s32 %s9, 1
    %s15 = ssub.s32 %s9, 2
    %s16 = sadd.s32 %s9, 1
    %s17 = ssub.s32 %s9, %s16
    %p18 = scmp.eq.s32.totalorder %s17, 0
    %s20 = sadd.s32 %s19, 1
    %s21 = scalar_select %p18, %s19, %s20
    %p24 = pneg %p18
    %p25 = scmp.eq.s32.totalorder %s9, 1
    %p26 = por %p24, %p25
    %p27 = scmp.ne.s32.totalorder %s19, %s22
    %p28 = scmp.eq.s32.totalorder %s9, 0
    %p29 = por %p27, %p28
    %p30 = scmp.ne.s32.totalorder %s19, %s22
    %p31 = scmp.eq.s32.totalorder %s14, 1
    %p32 = por %p30, %p31
    %p33 = scmp.ne.s32.totalorder %s22, %s23
    %p34 = scmp.eq.s32.totalorder %s14, 0
    %p35 = por %p33, %p34
    %p36 = scmp.ne.s32.totalorder %s22, %s23
    %p37 = scmp.eq.s32.totalorder %s15, 1
    %p38 = por %p36, %p37
    %p40 = scmp.ne.s32.totalorder %s23, %s39
    %p41 = scmp.eq.s32.totalorder %s15, 0
    %p42 = por %p40, %p41
    %s44 = sadd.s32 %s43, 1
    %p47 = scmp.eq.s32.totalorder %s9, 1
    %p48 = scmp.ne.s32.totalorder %s43, %s45
    %p49 = scmp.eq.s32.totalorder %s9, 0
    %p50 = por %p48, %p49
    %p51 = scmp.ne.s32.totalorder %s43, %s45
    %p52 = scmp.eq.s32.totalorder %s14, 1
    %p53 = por %p51, %p52
    %p54 = scmp.ne.s32.totalorder %s45, %s46
    %p55 = scmp.eq.s32.totalorder %s14, 0
    %p56 = por %p54, %p55
    %p57 = scmp.ne.s32.totalorder %s45, %s46
    %p58 = scmp.eq.s32.totalorder %s15, 1
    %p59 = por %p57, %p58
    %p61 = scmp.ne.s32.totalorder %s46, %s60
    %p62 = scmp.eq.s32.totalorder %s15, 0
    %p63 = por %p61, %p62
    %s65 = sadd.s32 %s64, 1
    %p68 = scmp.eq.s32.totalorder %s9, 1
    %p69 = scmp.ne.s32.totalorder %s64, %s66
    %p70 = scmp.eq.s32.totalorder %s9, 0
    %p71 = por %p69, %p70
    %p72 = scmp.ne.s32.totalorder %s64, %s66
    %p73 = scmp.eq.s32.totalorder %s14, 1
    %p74 = por %p72, %p73
    %p75 = scmp.ne.s32.totalorder %s66, %s67
    %p76 = scmp.eq.s32.totalorder %s14, 0
    %p77 = por %p75, %p76
    %p78 = scmp.ne.s32.totalorder %s66, %s67
    %p79 = scmp.eq.s32.totalorder %s15, 1
    %p80 = por %p78, %p79
    %p82 = scmp.ne.s32.totalorder %s67, %s81
    %p83 = scmp.eq.s32.totalorder %s15, 0
    %p84 = por %p82, %p83
    %s85 = ssub.s32 %s9, %s16
    %p86 = scmp.eq.s32.totalorder %s85, 0
    %s88 = sadd.s32 %s87, 1
    %s89 = scalar_select %p86, %s87, %s88
    %p92 = pneg %p86
    %p93 = scmp.eq.s32.totalorder %s9, 1
    %p94 = por %p92, %p93
    %p95 = scmp.ne.s32.totalorder %s87, %s90
    %p96 = scmp.eq.s32.totalorder %s9, 0
    %p97 = por %p95, %p96
    %p98 = scmp.ne.s32.totalorder %s87, %s90
    %p99 = scmp.eq.s32.totalorder %s14, 1
    %p100 = por %p98, %p99
    %p101 = scmp.ne.s32.totalorder %s90, %s91
    %p102 = scmp.eq.s32.totalorder %s14, 0
    %p103 = por %p101, %p102
    %p104 = scmp.ne.s32.totalorder %s90, %s91
    %p105 = scmp.eq.s32.totalorder %s15, 1
    %p106 = por %p104, %p105
    %p108 = scmp.ne.s32.totalorder %s91, %s107
    %p109 = scmp.eq.s32.totalorder %s15, 0
    %p110 = por %p108, %p109
    %p111 = scmp.le.s32.totalorder 1, %s9
    %p112 = scmp.lt.s32.totalorder %s9, 3
    %p113 = pnand %p111, %p112
    %p114 = pneg %p113
    // Predicated region
    $region9: #{ggcnn4_forward.8} parent=5 // pred_check
      _
    $region10: #{ggcnn4_forward.8} parent=5 // pred_check_branch
      %116 = sbr.rel (%p113) target = $region12
    $region11: #{ggcnn4_forward.8} parent=5 // pred_region
      %s117 = ssub.s32 %s9, 1
      // Predicated region
      $region13: #{ggcnn4_forward.8} parent=11 // pred_check
        %p118 = pneg %p56
      $region14: #{ggcnn4_forward.8} parent=11 // pred_check_branch
        %120 = sbr.rel (%p118) target = $region16
      $region15: #{ggcnn4_forward.8} parent=11 // pred_region
        _
      $region16: #{ggcnn4_forward.8} parent=11 // pred_fallthru
        _
      // Predicated region
      $region17: #{ggcnn4_forward.8} parent=11 // pred_check
        %p121 = pneg %p77
      $region18: #{ggcnn4_forward.8} parent=11 // pred_check_branch
        %123 = sbr.rel (%p121) target = $region20
      $region19: #{ggcnn4_forward.8} parent=11 // pred_region
        _
      $region20: #{ggcnn4_forward.8} parent=11 // pred_fallthru
        _
    $region12: #{ggcnn4_forward.8} parent=5 // pred_fallthru
      _
    %p124 = scmp.lt.s32.totalorder %s9, 2
    // Predicated region
    $region21: #{ggcnn4_forward.8} parent=5 // pred_check
      %p125 = pneg %p124
    $region22: #{ggcnn4_forward.8} parent=5 // pred_check_branch
      %127 = sbr.rel (%p125) target = $region24
    $region23: #{ggcnn4_forward.8} parent=5 // pred_region
      // Predicated region
      $region25: #{ggcnn4_forward.8} parent=23 // pred_check
        %p128 = pneg %p29
      $region26: #{ggcnn4_forward.8} parent=23 // pred_check_branch
        %130 = sbr.rel (%p128) target = $region28
      $region27: #{ggcnn4_forward.8} parent=23 // pred_region
        %p131 = scmp.lt.s32.totalorder %s9, 1
        %s132 = scalar_select %p131, %s9, 1
        %s133 = smul.addr %s132, 128
        %s134 = smul.addr %s133, 8
        %s135 = scalar_lea.vmem %s0, %s134
      $region28: #{ggcnn4_forward.8} parent=23 // pred_fallthru
        _
    $region24: #{ggcnn4_forward.8} parent=5 // pred_fallthru
      _
    %p136 = scmp.le.s32.totalorder 1, %s9
    %p137 = scmp.lt.s32.totalorder %s9, 3
    %p138 = pnand %p136, %p137
    %p139 = pneg %p138
    // Predicated region
    $region29: #{ggcnn4_forward.8} parent=5 // pred_check
      _
    $region30: #{ggcnn4_forward.8} parent=5 // pred_check_branch
      %141 = sbr.rel (%p138) target = $region32
    $region31: #{ggcnn4_forward.8} parent=5 // pred_region
      %s142 = ssub.s32 %s9, 1
      %p143 = scmp.lt.s32.totalorder %s14, 1
      %s144 = scalar_select %p143, %s14, 1
      %s145 = smul.addr %s144, 128
      %s146 = smul.addr %s145, 8
      %s147 = scalar_lea.vmem %s0, %s146
      %p148 = pneg %p35
      %p149 = pneg %p32
      %p150 = pneg %p56
      %p151 = pneg %p53
      %p152 = pneg %p77
      %p153 = pneg %p74
      %p154 = pneg %p103
      %p155 = pneg %p100
      %p156 = scmp.lt.s32.totalorder %s14, 1
      %s157 = scalar_select %p156, %s14, 1
      %s158 = smul.addr %s157, 16
      %s159 = smul.addr %s158, 8
      %s160 = scalar_lea.vmem %s3, %s159
      %p161 = scmp.lt.s32.totalorder %s14, 1
      %s162 = scalar_select %p161, %s14, 1
      %s163 = smul.addr %s162, 128
      %s164 = smul.addr %s163, 8
      %s165 = scalar_lea.vmem %s0, %s164
      %p166 = scmp.lt.s32.totalorder %s14, 1
      %s167 = scalar_select %p166, %s14, 1
      %s168 = smul.addr %s167, 16
      %s169 = smul.addr %s168, 8
      %s170 = scalar_lea.vmem %s3, %s169
      %v171 = vld [vmem:[%s165] sm:$0xff]
      %v172 = vld [vmem:[%s165 + $0x8] sm:$0xff]
      %v173 = vld [vmem:[%s165 + $0x10] sm:$0xff]
      %v174 = vld [vmem:[%s165 + $0x18] sm:$0xff]
      %v175 = vld [vmem:[%s165 + $0x20] sm:$0xff]
      %v176 = vld [vmem:[%s165 + $0x28] sm:$0xff]
      %v177 = vld [vmem:[%s165 + $0x30] sm:$0xff]
      %v178 = vld [vmem:[%s165 + $0x38] sm:$0xff]
      %v179 = vld [vmem:[%s165 + $0x40] sm:$0xff]
      %v180 = vld [vmem:[%s165 + $0x48] sm:$0xff]
      %v181 = vld [vmem:[%s165 + $0x50] sm:$0xff]
      %v182 = vld [vmem:[%s165 + $0x58] sm:$0xff]
      %v183 = vld [vmem:[%s165 + $0x60] sm:$0xff]
      %v184 = vld [vmem:[%s165 + $0x68] sm:$0xff]
      %v185 = vld [vmem:[%s165 + $0x70] sm:$0xff]
      %v186 = vld [vmem:[%s165 + $0x78] sm:$0xff]
      %v187 = vld [vmem:[%s165 + $0x80] sm:$0xff]
      %v188 = vld [vmem:[%s165 + $0x88] sm:$0xff]
      %v189 = vld [vmem:[%s165 + $0x90] sm:$0xff]
      %v190 = vld [vmem:[%s165 + $0x98] sm:$0xff]
      %v191 = vld [vmem:[%s165 + $0xa0] sm:$0xff]
      %v192 = vld [vmem:[%s165 + $0xa8] sm:$0xff]
      %v193 = vld [vmem:[%s165 + $0xb0] sm:$0xff]
      %v194 = vld [vmem:[%s165 + $0xb8] sm:$0xff]
      %v195 = vld [vmem:[%s165 + $0xc0] sm:$0xff]
      %v196 = vld [vmem:[%s165 + $0xc8] sm:$0xff]
      %v197 = vld [vmem:[%s165 + $0xd0] sm:$0xff]
      %v198 = vld [vmem:[%s165 + $0xd8] sm:$0xff]
      %v199 = vld [vmem:[%s165 + $0xe0] sm:$0xff]
      %v200 = vld [vmem:[%s165 + $0xe8] sm:$0xff]
      %v201 = vld [vmem:[%s165 + $0xf0] sm:$0xff]
      %v202 = vld [vmem:[%s165 + $0xf8] sm:$0xff]
      %v203 = vld [vmem:[%s165 + $0x100] sm:$0xff]
      %v204 = vld [vmem:[%s165 + $0x108] sm:$0xff]
      %v205 = vld [vmem:[%s165 + $0x110] sm:$0xff]
      %v206 = vld [vmem:[%s165 + $0x118] sm:$0xff]
      %v207 = vld [vmem:[%s165 + $0x120] sm:$0xff]
      %v208 = vld [vmem:[%s165 + $0x128] sm:$0xff]
      %v209 = vld [vmem:[%s165 + $0x130] sm:$0xff]
      %v210 = vld [vmem:[%s165 + $0x138] sm:$0xff]
      %v211 = vld [vmem:[%s165 + $0x140] sm:$0xff]
      %v212 = vld [vmem:[%s165 + $0x148] sm:$0xff]
      %v213 = vld [vmem:[%s165 + $0x150] sm:$0xff]
      %v214 = vld [vmem:[%s165 + $0x158] sm:$0xff]
      %v215 = vld [vmem:[%s165 + $0x160] sm:$0xff]
      %v216 = vld [vmem:[%s165 + $0x168] sm:$0xff]
      %v217 = vld [vmem:[%s165 + $0x170] sm:$0xff]
      %v218 = vld [vmem:[%s165 + $0x178] sm:$0xff]
      %v219 = vld [vmem:[%s165 + $0x180] sm:$0xff]
      %v220 = vld [vmem:[%s165 + $0x188] sm:$0xff]
      %v221 = vld [vmem:[%s165 + $0x190] sm:$0xff]
      %v222 = vld [vmem:[%s165 + $0x198] sm:$0xff]
      %v223 = vld [vmem:[%s165 + $0x1a0] sm:$0xff]
      %v224 = vld [vmem:[%s165 + $0x1a8] sm:$0xff]
      %v225 = vld [vmem:[%s165 + $0x1b0] sm:$0xff]
      %v226 = vld [vmem:[%s165 + $0x1b8] sm:$0xff]
      %v227 = vld [vmem:[%s165 + $0x1c0] sm:$0xff]
      %v228 = vld [vmem:[%s165 + $0x1c8] sm:$0xff]
      %v229 = vld [vmem:[%s165 + $0x1d0] sm:$0xff]
      %v230 = vld [vmem:[%s165 + $0x1d8] sm:$0xff]
      %v231 = vld [vmem:[%s165 + $0x1e0] sm:$0xff]
      %v232 = vld [vmem:[%s165 + $0x1e8] sm:$0xff]
      %v233 = vld [vmem:[%s165 + $0x1f0] sm:$0xff]
      %v234 = vld [vmem:[%s165 + $0x1f8] sm:$0xff]
      %v235 = vld [vmem:[%s165 + $0x200] sm:$0xff]
      %v236 = vld [vmem:[%s165 + $0x208] sm:$0xff]
      %v237 = vld [vmem:[%s165 + $0x210] sm:$0xff]
      %v238 = vld [vmem:[%s165 + $0x218] sm:$0xff]
      %v239 = vld [vmem:[%s165 + $0x220] sm:$0xff]
      %v240 = vld [vmem:[%s165 + $0x228] sm:$0xff]
      %v241 = vld [vmem:[%s165 + $0x230] sm:$0xff]
      %v242 = vld [vmem:[%s165 + $0x238] sm:$0xff]
      %v243 = vld [vmem:[%s165 + $0x240] sm:$0xff]
      %v244 = vld [vmem:[%s165 + $0x248] sm:$0xff]
      %v245 = vld [vmem:[%s165 + $0x250] sm:$0xff]
      %v246 = vld [vmem:[%s165 + $0x258] sm:$0xff]
      %v247 = vld [vmem:[%s165 + $0x260] sm:$0xff]
      %v248 = vld [vmem:[%s165 + $0x268] sm:$0xff]
      %v249 = vld [vmem:[%s165 + $0x270] sm:$0xff]
      %v250 = vld [vmem:[%s165 + $0x278] sm:$0xff]
      %v251 = vld [vmem:[%s165 + $0x280] sm:$0xff]
      %v252 = vld [vmem:[%s165 + $0x288] sm:$0xff]
      %v253 = vld [vmem:[%s165 + $0x290] sm:$0xff]
      %v254 = vld [vmem:[%s165 + $0x298] sm:$0xff]
      %v255 = vld [vmem:[%s165 + $0x2a0] sm:$0xff]
      %v256 = vld [vmem:[%s165 + $0x2a8] sm:$0xff]
      %v257 = vld [vmem:[%s165 + $0x2b0] sm:$0xff]
      %v258 = vld [vmem:[%s165 + $0x2b8] sm:$0xff]
      %v259 = vld [vmem:[%s165 + $0x2c0] sm:$0xff]
      %v260 = vld [vmem:[%s165 + $0x2c8] sm:$0xff]
      %v261 = vld [vmem:[%s165 + $0x2d0] sm:$0xff]
      %v262 = vld [vmem:[%s165 + $0x2d8] sm:$0xff]
      %v263 = vld [vmem:[%s165 + $0x2e0] sm:$0xff]
      %v264 = vld [vmem:[%s165 + $0x2e8] sm:$0xff]
      %v265 = vld [vmem:[%s165 + $0x2f0] sm:$0xff]
      %v266 = vld [vmem:[%s165 + $0x2f8] sm:$0xff]
      %v267 = vld [vmem:[%s165 + $0x300] sm:$0xff]
      %v268 = vld [vmem:[%s165 + $0x308] sm:$0xff]
      %v269 = vld [vmem:[%s165 + $0x310] sm:$0xff]
      %v270 = vld [vmem:[%s165 + $0x318] sm:$0xff]
      %v271 = vld [vmem:[%s165 + $0x320] sm:$0xff]
      %v272 = vld [vmem:[%s165 + $0x328] sm:$0xff]
      %v273 = vld [vmem:[%s165 + $0x330] sm:$0xff]
      %v274 = vld [vmem:[%s165 + $0x338] sm:$0xff]
      %v275 = vld [vmem:[%s165 + $0x340] sm:$0xff]
      %v276 = vld [vmem:[%s165 + $0x348] sm:$0xff]
      %v277 = vld [vmem:[%s165 + $0x350] sm:$0xff]
      %v278 = vld [vmem:[%s165 + $0x358] sm:$0xff]
      %v279 = vld [vmem:[%s165 + $0x360] sm:$0xff]
      %v280 = vld [vmem:[%s165 + $0x368] sm:$0xff]
      %v281 = vld [vmem:[%s165 + $0x370] sm:$0xff]
      %v282 = vld [vmem:[%s165 + $0x378] sm:$0xff]
      %v283 = vld [vmem:[%s165 + $0x380] sm:$0xff]
      %v284 = vld [vmem:[%s165 + $0x388] sm:$0xff]
      %v285 = vld [vmem:[%s165 + $0x390] sm:$0xff]
      %v286 = vld [vmem:[%s165 + $0x398] sm:$0xff]
      %v287 = vld [vmem:[%s165 + $0x3a0] sm:$0xff]
      %v288 = vld [vmem:[%s165 + $0x3a8] sm:$0xff]
      %v289 = vld [vmem:[%s165 + $0x3b0] sm:$0xff]
      %v290 = vld [vmem:[%s165 + $0x3b8] sm:$0xff]
      %v291 = vld [vmem:[%s165 + $0x3c0] sm:$0x1]
      %v292 = vld [vmem:[%s165 + $0x3c8] sm:$0x1]
      %v293 = vld [vmem:[%s165 + $0x3d0] sm:$0x1]
      %v294 = vld [vmem:[%s165 + $0x3d8] sm:$0x1]
      %v295 = vld [vmem:[%s165 + $0x3e0] sm:$0x1]
      %v296 = vld [vmem:[%s165 + $0x3e8] sm:$0x1]
      %v297 = vld [vmem:[%s165 + $0x3f0] sm:$0x1]
      %v298 = vld [vmem:[%s165 + $0x3f8] sm:$0x1]
      %v299 = vld [vmem:[%s1] sm:$0xff]
      %v300 = vld [vmem:[%s1 + $0x8] sm:$0xff]
      %v301 = vld [vmem:[%s2] sm:$0xff]
      %v302 = vld [vmem:[%s2 + $0x8] sm:$0xff]
      %304 = vset.pattern.permute.xlu0 0
      %305 = vperm.xlu0 %304, %v301
      %v306 = vpop.permute.xlu0 %305
      %309 = vset.pattern.permute.xlu0 0
      %310 = vperm.xlu0 %309, %v302
      %v311 = vpop.permute.xlu0 %310
      %vm313 = vcmask 990208
      %v315 = vsel %vm313, %v299, 0
      %v318 = vsel %vm313, %v300, 0
      %vm320 = vcmask 1040384
      %v322 = vsel %vm320, %v291, 0
      %v325 = vsel %vm320, %v292, 0
      %v328 = vsel %vm320, %v293, 0
      %v331 = vsel %vm320, %v294, 0
      %v334 = vsel %vm320, %v295, 0
      %v337 = vsel %vm320, %v296, 0
      %v340 = vsel %vm320, %v297, 0
      %v343 = vsel %vm320, %v298, 0
      %345 = vmatprep.subr.mxu0 %v172
      %346 = vmatpush1.msra.mxu0 %v171
      %347 = vmatprep.subr.mxu0 %v180
      %348 = vmatpush1.msra.mxu0 %v179
      %349 = vmatprep.subr.mxu0 %v188
      %350 = vmatpush1.msra.mxu0 %v187
      %351 = vmatprep.subr.mxu0 %v196
      %352 = vmatpush1.msra.mxu0 %v195
      %353 = vmatprep.subr.mxu0 %v204
      %354 = vmatpush1.msra.mxu0 %v203
      %355 = vmatprep.subr.mxu0 %v212
      %356 = vmatpush1.msra.mxu0 %v211
      %357 = vmatprep.subr.mxu0 %v220
      %358 = vmatpush1.msra.mxu0 %v219
      %359 = vmatprep.subr.mxu0 %v228
      %360 = vmatpush1.msra.mxu0 %v227
      %361 = vmatprep.subr.mxu0 %v236
      %362 = vmatpush1.msra.mxu0 %v235
      %363 = vmatprep.subr.mxu0 %v244
      %364 = vmatpush1.msra.mxu0 %v243
      %365 = vmatprep.subr.mxu0 %v252
      %366 = vmatpush1.msra.mxu0 %v251
      %367 = vmatprep.subr.mxu0 %v260
      %368 = vmatpush1.msra.mxu0 %v259
      %369 = vmatprep.subr.mxu0 %v268
      %370 = vmatpush1.msra.mxu0 %v267
      %371 = vmatprep.subr.mxu0 %v276
      %372 = vmatpush1.msra.mxu0 %v275
      %373 = vmatprep.subr.mxu0 %v284
      %374 = vmatpush1.msra.mxu0 %v283
      %375 = vmatprep.subr.mxu0 %v325
      %376 = vmatpush1.msra.mxu0 %v322
      %377 = vmatprep.subr.mxu0 0.0
      %378 = vmatpush1.msra.mxu0 0.0
      %379 = vmatprep.subr.mxu0 0.0
      %380 = vmatpush1.msra.mxu0 0.0
      %381 = vmatprep.subr.mxu0 0.0
      %382 = vmatpush1.msra.mxu0 0.0
      %383 = vmatprep.subr.mxu0 0.0
      %384 = vmatpush1.msra.mxu0 0.0
      %385 = vmatprep.subr.mxu0 0.0
      %386 = vmatpush1.msra.mxu0 0.0
      %387 = vmatprep.subr.mxu0 0.0
      %388 = vmatpush1.msra.mxu0 0.0
      %389 = vmatprep.subr.mxu0 0.0
      %390 = vmatpush1.msra.mxu0 0.0
      %391 = vmatprep.subr.mxu0 0.0
      %392 = vmatpush1.msra.mxu0 0.0
      %393 = vmatprep.subr.mxu0 0.0
      %394 = vmatpush1.msra.mxu0 0.0
      %395 = vmatprep.subr.mxu0 0.0
      %396 = vmatpush1.msra.mxu0 0.0
      %397 = vmatprep.subr.mxu0 0.0
      %398 = vmatpush1.msra.mxu0 0.0
      %399 = vmatprep.subr.mxu0 0.0
      %400 = vmatpush1.msra.mxu0 0.0
      %401 = vmatprep.subr.mxu0 0.0
      %402 = vmatpush1.msra.mxu0 0.0
      %403 = vmatprep.subr.mxu0 0.0
      %404 = vmatpush1.msra.mxu0 0.0
      %405 = vmatprep.subr.mxu0 0.0
      %406 = vmatpush1.msra.mxu0 0.0
      %407 = vmatprep.subr.mxu0 0.0
      %408 = vmatpush1.msra.mxu0 0.0
      %409 = vmatprep.mubr.f32.mxu0 0.0
      %410 = vmatmul.mubr.f32.gmra.mrb[0].mxu0 %v315
      %v411 = vpop.f32.mrb[0].mxu0
      %v412 = vadd.f32 %v306, %v411
      %v413 = vpop.f32.mrb[0].mxu0
      %v414 = vadd.f32 %v306, %v413
      %415 = vmatprep.mubr.f32.mxu0 0.0
      %416 = vmatmul.mubr.f32.gmra.mrb[0].mxu0 %v318
      %v417 = vpop.f32.mrb[0].mxu0
      %v418 = vadd.f32 %v311, %v417
      %v419 = vpop.f32.mrb[0].mxu0
      %v420 = vadd.f32 %v311, %v419
      %421 = vdwg.mxu0
      %422 = vmatprep.subr.mxu0 %v174
      %423 = vmatpush1.msra.mxu0 %v173
      %424 = vmatprep.subr.mxu0 %v182
      %425 = vmatpush1.msra.mxu0 %v181
      %426 = vmatprep.subr.mxu0 %v190
      %427 = vmatpush1.msra.mxu0 %v189
      %428 = vmatprep.subr.mxu0 %v198
      %429 = vmatpush1.msra.mxu0 %v197
      %430 = vmatprep.subr.mxu0 %v206
      %431 = vmatpush1.msra.mxu0 %v205
      %432 = vmatprep.subr.mxu0 %v214
      %433 = vmatpush1.msra.mxu0 %v213
      %434 = vmatprep.subr.mxu0 %v222
      %435 = vmatpush1.msra.mxu0 %v221
      %436 = vmatprep.subr.mxu0 %v230
      %437 = vmatpush1.msra.mxu0 %v229
      %438 = vmatprep.subr.mxu0 %v238
      %439 = vmatpush1.msra.mxu0 %v237
      %440 = vmatprep.subr.mxu0 %v246
      %441 = vmatpush1.msra.mxu0 %v245
      %442 = vmatprep.subr.mxu0 %v254
      %443 = vmatpush1.msra.mxu0 %v253
      %444 = vmatprep.subr.mxu0 %v262
      %445 = vmatpush1.msra.mxu0 %v261
      %446 = vmatprep.subr.mxu0 %v270
      %447 = vmatpush1.msra.mxu0 %v269
      %448 = vmatprep.subr.mxu0 %v278
      %449 = vmatpush1.msra.mxu0 %v277
      %450 = vmatprep.subr.mxu0 %v286
      %451 = vmatpush1.msra.mxu0 %v285
      %452 = vmatprep.subr.mxu0 %v331
      %453 = vmatpush1.msra.mxu0 %v328
      %454 = vmatprep.subr.mxu0 0.0
      %455 = vmatpush1.msra.mxu0 0.0
      %456 = vmatprep.subr.mxu0 0.0
      %457 = vmatpush1.msra.mxu0 0.0
      %458 = vmatprep.subr.mxu0 0.0
      %459 = vmatpush1.msra.mxu0 0.0
      %460 = vmatprep.subr.mxu0 0.0
      %461 = vmatpush1.msra.mxu0 0.0
      %462 = vmatprep.subr.mxu0 0.0
      %463 = vmatpush1.msra.mxu0 0.0
      %464 = vmatprep.subr.mxu0 0.0
      %465 = vmatpush1.msra.mxu0 0.0
      %466 = vmatprep.subr.mxu0 0.0
      %467 = vmatpush1.msra.mxu0 0.0
      %468 = vmatprep.subr.mxu0 0.0
      %469 = vmatpush1.msra.mxu0 0.0
      %470 = vmatprep.subr.mxu0 0.0
      %471 = vmatpush1.msra.mxu0 0.0
      %472 = vmatprep.subr.mxu0 0.0
      %473 = vmatpush1.msra.mxu0 0.0
      %474 = vmatprep.subr.mxu0 0.0
      %475 = vmatpush1.msra.mxu0 0.0
      %476 = vmatprep.subr.mxu0 0.0
      %477 = vmatpush1.msra.mxu0 0.0
      %478 = vmatprep.subr.mxu0 0.0
      %479 = vmatpush1.msra.mxu0 0.0
      %480 = vmatprep.subr.mxu0 0.0
      %481 = vmatpush1.msra.mxu0 0.0
      %482 = vmatprep.subr.mxu0 0.0
      %483 = vmatpush1.msra.mxu0 0.0
      %484 = vmatprep.subr.mxu0 0.0
      %485 = vmatpush1.msra.mxu0 0.0
      %486 = vmatprep.mubr.f32.mxu0 0.0
      %487 = vmatmul.mubr.f32.gmra.mrb[0].mxu0 %v315
      %v488 = vpop.f32.mrb[0].mxu0
      %v489 = vadd.f32 %v306, %v488
      %v490 = vpop.f32.mrb[0].mxu0
      %v491 = vadd.f32 %v306, %v490
      %492 = vmatprep.mubr.f32.mxu0 0.0
      %493 = vmatmul.mubr.f32.gmra.mrb[0].mxu0 %v318
      %v494 = vpop.f32.mrb[0].mxu0
      %v495 = vadd.f32 %v311, %v494
      %v496 = vpop.f32.mrb[0].mxu0
      %v497 = vadd.f32 %v311, %v496
      %498 = vdwg.mxu0
      %499 = vmatprep.subr.mxu0 %v176
      %500 = vmatpush1.msra.mxu0 %v175
      %501 = vmatprep.subr.mxu0 %v184
      %502 = vmatpush1.msra.mxu0 %v183
      %503 = vmatprep.subr.mxu0 %v192
      %504 = vmatpush1.msra.mxu0 %v191
      %505 = vmatprep.subr.mxu0 %v200
      %506 = vmatpush1.msra.mxu0 %v199
      %507 = vmatprep.subr.mxu0 %v208
      %508 = vmatpush1.msra.mxu0 %v207
      %509 = vmatprep.subr.mxu0 %v216
      %510 = vmatpush1.msra.mxu0 %v215
      %511 = vmatprep.subr.mxu0 %v224
      %512 = vmatpush1.msra.mxu0 %v223
      %513 = vmatprep.subr.mxu0 %v232
      %514 = vmatpush1.msra.mxu0 %v231
      %515 = vmatprep.subr.mxu0 %v240
      %516 = vmatpush1.msra.mxu0 %v239
      %517 = vmatprep.subr.mxu0 %v248
      %518 = vmatpush1.msra.mxu0 %v247
      %519 = vmatprep.subr.mxu0 %v256
      %520 = vmatpush1.msra.mxu0 %v255
      %521 = vmatprep.subr.mxu0 %v264
      %522 = vmatpush1.msra.mxu0 %v263
      %523 = vmatprep.subr.mxu0 %v272
      %524 = vmatpush1.msra.mxu0 %v271
      %525 = vmatprep.subr.mxu0 %v280
      %526 = vmatpush1.msra.mxu0 %v279
      %527 = vmatprep.subr.mxu0 %v288
      %528 = vmatpush1.msra.mxu0 %v287
      %529 = vmatprep.subr.mxu0 %v337
      %530 = vmatpush1.msra.mxu0 %v334
      %531 = vmatprep.subr.mxu0 0.0
      %532 = vmatpush1.msra.mxu0 0.0
      %533 = vmatprep.subr.mxu0 0.0
      %534 = vmatpush1.msra.mxu0 0.0
      %535 = vmatprep.subr.mxu0 0.0
      %536 = vmatpush1.msra.mxu0 0.0
      %537 = vmatprep.subr.mxu0 0.0
      %538 = vmatpush1.msra.mxu0 0.0
      %539 = vmatprep.subr.mxu0 0.0
      %540 = vmatpush1.msra.mxu0 0.0
      %541 = vmatprep.subr.mxu0 0.0
      %542 = vmatpush1.msra.mxu0 0.0
      %543 = vmatprep.subr.mxu0 0.0
      %544 = vmatpush1.msra.mxu0 0.0
      %545 = vmatprep.subr.mxu0 0.0
      %546 = vmatpush1.msra.mxu0 0.0
      %547 = vmatprep.subr.mxu0 0.0
      %548 = vmatpush1.msra.mxu0 0.0
      %549 = vmatprep.subr.mxu0 0.0
      %550 = vmatpush1.msra.mxu0 0.0
      %551 = vmatprep.subr.mxu0 0.0
      %552 = vmatpush1.msra.mxu0 0.0
      %553 = vmatprep.subr.mxu0 0.0
      %554 = vmatpush1.msra.mxu0 0.0
      %555 = vmatprep.subr.mxu0 0.0
      %556 = vmatpush1.msra.mxu0 0.0
      %557 = vmatprep.subr.mxu0 0.0
      %558 = vmatpush1.msra.mxu0 0.0
      %559 = vmatprep.subr.mxu0 0.0
      %560 = vmatpush1.msra.mxu0 0.0
      %561 = vmatprep.subr.mxu0 0.0
      %562 = vmatpush1.msra.mxu0 0.0
      %563 = vmatprep.mubr.f32.mxu0 0.0
      %564 = vmatmul.mubr.f32.gmra.mrb[0].mxu0 %v315
      %v565 = vpop.f32.mrb[0].mxu0
      %v566 = vadd.f32 %v306, %v565
      %v567 = vpop.f32.mrb[0].mxu0
      %v568 = vadd.f32 %v306, %v567
      %569 = vmatprep.mubr.f32.mxu0 0.0
      %570 = vmatmul.mubr.f32.gmra.mrb[0].mxu0 %v318
      %v571 = vpop.f32.mrb[0].mxu0
      %v572 = vadd.f32 %v311, %v571
      %v573 = vpop.f32.mrb[0].mxu0
      %v574 = vadd.f32 %v311, %v573
      %575 = vdwg.mxu0
      %576 = vmatprep.subr.mxu0 %v178
      %577 = vmatpush1.msra.mxu0 %v177
      %578 = vmatprep.subr.mxu0 %v186
      %579 = vmatpush1.msra.mxu0 %v185
      %580 = vmatprep.subr.mxu0 %v194
      %581 = vmatpush1.msra.mxu0 %v193
      %582 = vmatprep.subr.mxu0 %v202
      %583 = vmatpush1.msra.mxu0 %v201
      %584 = vmatprep.subr.mxu0 %v210
      %585 = vmatpush1.msra.mxu0 %v209
      %586 = vmatprep.subr.mxu0 %v218
      %587 = vmatpush1.msra.mxu0 %v217
      %588 = vmatprep.subr.mxu0 %v226
      %589 = vmatpush1.msra.mxu0 %v225
      %590 = vmatprep.subr.mxu0 %v234
      %591 = vmatpush1.msra.mxu0 %v233
      %592 = vmatprep.subr.mxu0 %v242
      %593 = vmatpush1.msra.mxu0 %v241
      %594 = vmatprep.subr.mxu0 %v250
      %595 = vmatpush1.msra.mxu0 %v249
      %596 = vmatprep.subr.mxu0 %v258
      %597 = vmatpush1.msra.mxu0 %v257
      %598 = vmatprep.subr.mxu0 %v266
      %599 = vmatpush1.msra.mxu0 %v265
      %600 = vmatprep.subr.mxu0 %v274
      %601 = vmatpush1.msra.mxu0 %v273
      %602 = vmatprep.subr.mxu0 %v282
      %603 = vmatpush1.msra.mxu0 %v281
      %604 = vmatprep.subr.mxu0 %v290
      %605 = vmatpush1.msra.mxu0 %v289
      %606 = vmatprep.subr.mxu0 %v343
      %607 = vmatpush1.msra.mxu0 %v340
      %608 = vmatprep.subr.mxu0 0.0
      %609 = vmatpush1.msra.mxu0 0.0
      %610 = vmatprep.subr.mxu0 0.0
      %611 = vmatpush1.msra.mxu0 0.0
      %612 = vmatprep.subr.mxu0 0.0
      %613 = vmatpush1.msra.mxu0 0.0
      %614 = vmatprep.subr.mxu0 0.0
      %615 = vmatpush1.msra.mxu0 0.0
      %616 = vmatprep.subr.mxu0 0.0
      %617 = vmatpush1.msra.mxu0 0.0
      %618 = vmatprep.subr.mxu0 0.0
      %619 = vmatpush1.msra.mxu0 0.0
      %620 = vmatprep.subr.mxu0 0.0
      %621 = vmatpush1.msra.mxu0 0.0
      %622 = vmatprep.subr.mxu0 0.0
      %623 = vmatpush1.msra.mxu0 0.0
      %624 = vmatprep.subr.mxu0 0.0
      %625 = vmatpush1.msra.mxu0 0.0
      %626 = vmatprep.subr.mxu0 0.0
      %627 = vmatpush1.msra.mxu0 0.0
      %628 = vmatprep.subr.mxu0 0.0
      %629 = vmatpush1.msra.mxu0 0.0
      %630 = vmatprep.subr.mxu0 0.0
      %631 = vmatpush1.msra.mxu0 0.0
      %632 = vmatprep.subr.mxu0 0.0
      %633 = vmatpush1.msra.mxu0 0.0
      %634 = vmatprep.subr.mxu0 0.0
      %635 = vmatpush1.msra.mxu0 0.0
      %636 = vmatprep.subr.mxu0 0.0
      %637 = vmatpush1.msra.mxu0 0.0
      %638 = vmatprep.subr.mxu0 0.0
      %639 = vmatpush1.msra.mxu0 0.0
      %640 = vmatprep.mubr.f32.mxu0 0.0
      %641 = vmatmul.mubr.f32.gmra.mrb[0].mxu0 %v315
      %v642 = vpop.f32.mrb[0].mxu0
      %v643 = vadd.f32 %v306, %v642
      %v644 = vpop.f32.mrb[0].mxu0
      %v645 = vadd.f32 %v306, %v644
      %646 = vmatprep.mubr.f32.mxu0 0.0
      %647 = vmatmul.mubr.f32.gmra.mrb[0].mxu0 %v318
      %v648 = vpop.f32.mrb[0].mxu0
      %v649 = vadd.f32 %v311, %v648
      %v650 = vpop.f32.mrb[0].mxu0
      %v651 = vadd.f32 %v311, %v650
      %652 = vdwg.mxu0
      %v653 = vmax.f32 %v412, 0.0
      %v654 = vmax.f32 %v414, 0.0
      %v655 = vmax.f32 %v489, 0.0
      %v656 = vmax.f32 %v491, 0.0
      %v657 = vmax.f32 %v566, 0.0
      %v658 = vmax.f32 %v568, 0.0
      %v659 = vmax.f32 %v643, 0.0
      %v660 = vmax.f32 %v645, 0.0
      %v661 = vmax.f32 %v418, 0.0
      %v662 = vmax.f32 %v420, 0.0
      %v663 = vmax.f32 %v495, 0.0
      %v664 = vmax.f32 %v497, 0.0
      %v665 = vmax.f32 %v572, 0.0
      %v666 = vmax.f32 %v574, 0.0
      %v667 = vmax.f32 %v649, 0.0
      %v668 = vmax.f32 %v651, 0.0
      %669 = vst [vmem:[%s170] sm:$0xff] %v653
      %670 = vst [vmem:[%s170 + $0x8] sm:$0xff] %v654
      %671 = vst [vmem:[%s170 + $0x10] sm:$0xff] %v655
      %672 = vst [vmem:[%s170 + $0x18] sm:$0xff] %v656
      %673 = vst [vmem:[%s170 + $0x20] sm:$0xff] %v657
      %674 = vst [vmem:[%s170 + $0x28] sm:$0xff] %v658
      %675 = vst [vmem:[%s170 + $0x30] sm:$0xff] %v659
      %676 = vst [vmem:[%s170 + $0x38] sm:$0xff] %v660
      %677 = vst [vmem:[%s170 + $0x40] sm:$0xff] %v661
      %678 = vst [vmem:[%s170 + $0x48] sm:$0xff] %v662
      %679 = vst [vmem:[%s170 + $0x50] sm:$0xff] %v663
      %680 = vst [vmem:[%s170 + $0x58] sm:$0xff] %v664
      %681 = vst [vmem:[%s170 + $0x60] sm:$0xff] %v665
      %682 = vst [vmem:[%s170 + $0x68] sm:$0xff] %v666
      %683 = vst [vmem:[%s170 + $0x70] sm:$0xff] %v667
      %684 = vst [vmem:[%s170 + $0x78] sm:$0xff] %v668
      %p685 = scmp.lt.s32.totalorder %s14, 1
      %s686 = scalar_select %p685, %s14, 1
      %s687 = smul.addr %s686, 16
      %s688 = smul.addr %s687, 8
      %s689 = scalar_lea.vmem %s3, %s688
      // Predicated region
      $region33: #{ggcnn4_forward.8} parent=31 // pred_check
        %p690 = pneg %p100
      $region34: #{ggcnn4_forward.8} parent=31 // pred_check_branch
        %692 = sbr.rel (%p690) target = $region36
      $region35: #{ggcnn4_forward.8} parent=31 // pred_region
        _
      $region36: #{ggcnn4_forward.8} parent=31 // pred_fallthru
        _
    $region32: #{ggcnn4_forward.8} parent=5 // pred_fallthru
      _
    %p693 = scmp.le.s32.totalorder 2, %s9
    // Predicated region
    $region37: #{ggcnn4_forward.8} parent=5 // pred_check
      %p694 = pneg %p693
    $region38: #{ggcnn4_forward.8} parent=5 // pred_check_branch
      %696 = sbr.rel (%p694) target = $region40
    $region39: #{ggcnn4_forward.8} parent=5 // pred_region
      %s697 = ssub.s32 %s9, 2
      // Predicated region
      $region41: #{ggcnn4_forward.8} parent=39 // pred_check
        %p698 = pneg %p106
      $region42: #{ggcnn4_forward.8} parent=39 // pred_check_branch
        %700 = sbr.rel (%p698) target = $region44
      $region43: #{ggcnn4_forward.8} parent=39 // pred_region
        %p701 = scmp.lt.s32.totalorder %s15, 1
        %s702 = scalar_select %p701, %s15, 1
        %s703 = smul.addr %s702, 16
        %s704 = smul.addr %s703, 8
        %s705 = scalar_lea.vmem %s3, %s704
      $region44: #{ggcnn4_forward.8} parent=39 // pred_fallthru
        _
    $region40: #{ggcnn4_forward.8} parent=5 // pred_fallthru
      _
  $region6: #{ggcnn4_forward.8} parent=0 // loop_footer
    %s13 = sadd.s32 1, %s9
  $region7: #{ggcnn4_forward.8} parent=0 // loop_footer_branch
    %8 = sbr.rel target = $region3
  $region8: #{ggcnn4_forward.8} parent=0 // loop_exit
    _

// kernel: ggcnn4_forward.9
$region0: #{ggcnn4_forward.9}
  #allocation0 [shape = 'u32[]', space=smem, size = 0x4, offset = 0x4, fixed_abs, tag = 'smem constant byte address 0x4 - core index']
  #allocation1 [shape = 'u32[144,128]{1,0:T(1,128)}', space=vmem, size = 0x12000, scoped, tag = 'internal scratch']
  %s0 = inlined_call_operand.vmem [shape: f32[2,400,1024], index: 0, kind: input, shape index: {}]
  %s1 = inlined_call_operand.vmem [shape: f32[16,400], index: 1, kind: input, shape index: {}]
  %s2 = inlined_call_operand.vmem [shape: f32[16,1], index: 2, kind: input, shape index: {}]
  %s3 = inlined_call_operand.vmem [shape: f32[2,16,256], index: 3, kind: output, shape index: {}]
  %s4 = sld [smem:[#allocation0]]
  $region45: #{ggcnn4_forward.9} parent=0
    _
  %s6 = ssub.s32 1, %s4
  %s7 = scalar_select 0, %s6, %s4
  loop: start=0, step=1, limit=4
  $region2: #{ggcnn4_forward.9} parent=0 // loop_pre_header
    _
  $region3: #{ggcnn4_forward.9} parent=0 // loop_header
    %s9 = sphi 0, %s13
    %p10 = scmp.ge.s32.totalorder %s9, 4
    %s19 = sphi 0, %s21
    %s22 = sphi 0, %s19
    %s23 = sphi 0, %s22
    %s39 = sphi 0, %s23
    %s43 = sphi 0, %s43
    %s45 = sphi 0, %s43
    %s46 = sphi 0, %s45
    %s60 = sphi 0, %s46
    %s64 = sphi 0, %s64
    %s66 = sphi 0, %s64
    %s67 = sphi 0, %s66
    %s81 = sphi 0, %s67
    %s87 = sphi 0, %s89
    %s90 = sphi 0, %s87
    %s91 = sphi 0, %s90
    %s107 = sphi 0, %s91
  $region4: #{ggcnn4_forward.9} parent=0 // loop_header_branch
    %12 = sbr.rel (%p10) target = $region8
  $region5: #{ggcnn4_forward.9} parent=0 // loop_body
    %s14 = ssub.s32 %s9, 1
    %s15 = ssub.s32 %s9, 2
    %s16 = sadd.s32 %s9, 1
    %s17 = ssub.s32 %s9, %s16
    %p18 = scmp.eq.s32.totalorder %s17, 0
    %s20 = sadd.s32 %s19, 1
    %s21 = scalar_select %p18, %s19, %s20
    %p24 = pneg %p18
    %p25 = scmp.eq.s32.totalorder %s9, 1
    %p26 = por %p24, %p25
    %p27 = scmp.ne.s32.totalorder %s19, %s22
    %p28 = scmp.eq.s32.totalorder %s9, 0
    %p29 = por %p27, %p28
    %p30 = scmp.ne.s32.totalorder %s19, %s22
    %p31 = scmp.eq.s32.totalorder %s14, 1
    %p32 = por %p30, %p31
    %p33 = scmp.ne.s32.totalorder %s22, %s23
    %p34 = scmp.eq.s32.totalorder %s14, 0
    %p35 = por %p33, %p34
    %p36 = scmp.ne.s32.totalorder %s22, %s23
    %p37 = scmp.eq.s32.totalorder %s15, 1
    %p38 = por %p36, %p37
    %p40 = scmp.ne.s32.totalorder %s23, %s39
    %p41 = scmp.eq.s32.totalorder %s15, 0
    %p42 = por %p40, %p41
    %s44 = sadd.s32 %s43, 1
    %p47 = scmp.eq.s32.totalorder %s9, 1
    %p48 = scmp.ne.s32.totalorder %s43, %s45
    %p49 = scmp.eq.s32.totalorder %s9, 0
    %p50 = por %p48, %p49
    %p51 = scmp.ne.s32.totalorder %s43, %s45
    %p52 = scmp.eq.s32.totalorder %s14, 1
    %p53 = por %p51, %p52
    %p54 = scmp.ne.s32.totalorder %s45, %s46
    %p55 = scmp.eq.s32.totalorder %s14, 0
    %p56 = por %p54, %p55
    %p57 = scmp.ne.s32.totalorder %s45, %s46
    %p58 = scmp.eq.s32.totalorder %s15, 1
    %p59 = por %p57, %p58
    %p61 = scmp.ne.s32.totalorder %s46, %s60
    %p62 = scmp.eq.s32.totalorder %s15, 0
    %p63 = por %p61, %p62
    %s65 = sadd.s32 %s64, 1
    %p68 = scmp.eq.s32.totalorder %s9, 1
    %p69 = scmp.ne.s32.totalorder %s64, %s66
    %p70 = scmp.eq.s32.totalorder %s9, 0
    %p71 = por %p69, %p70
    %p72 = scmp.ne.s32.totalorder %s64, %s66
    %p73 = scmp.eq.s32.totalorder %s14, 1
    %p74 = por %p72, %p73
    %p75 = scmp.ne.s32.totalorder %s66, %s67
    %p76 = scmp.eq.s32.totalorder %s14, 0
    %p77 = por %p75, %p76
    %p78 = scmp.ne.s32.totalorder %s66, %s67
    %p79 = scmp.eq.s32.totalorder %s15, 1
    %p80 = por %p78, %p79
    %p82 = scmp.ne.s32.totalorder %s67, %s81
    %p83 = scmp.eq.s32.totalorder %s15, 0
    %p84 = por %p82, %p83
    %s85 = ssub.s32 %s9, %s16
    %p86 = scmp.eq.s32.totalorder %s85, 0
    %s88 = sadd.s32 %s87, 1
    %s89 = scalar_select %p86, %s87, %s88
    %p92 = pneg %p86
    %p93 = scmp.eq.s32.totalorder %s9, 1
    %p94 = por %p92, %p93
    %p95 = scmp.ne.s32.totalorder %s87, %s90
    %p96 = scmp.eq.s32.totalorder %s9, 0
    %p97 = por %p95, %p96
    %p98 = scmp.ne.s32.totalorder %s87, %s90
    %p99 = scmp.eq.s32.totalorder %s14, 1
    %p100 = por %p98, %p99
    %p101 = scmp.ne.s32.totalorder %s90, %s91
    %p102 = scmp.eq.s32.totalorder %s14, 0
    %p103 = por %p101, %p102
    %p104 = scmp.ne.s32.totalorder %s90, %s91
    %p105 = scmp.eq.s32.totalorder %s15, 1
    %p106 = por %p104, %p105
    %p108 = scmp.ne.s32.totalorder %s91, %s107
    %p109 = scmp.eq.s32.totalorder %s15, 0
    %p110 = por %p108, %p109
    %p111 = scmp.le.s32.totalorder 1, %s9
    %p112 = scmp.lt.s32.totalorder %s9, 3
    %p113 = pnand %p111, %p112
    %p114 = pneg %p113
    // Predicated region
    $region9: #{ggcnn4_forward.9} parent=5 // pred_check
      _
    $region10: #{ggcnn4_forward.9} parent=5 // pred_check_branch
      %116 = sbr.rel (%p113) target = $region12
    $region11: #{ggcnn4_forward.9} parent=5 // pred_region
      %s117 = ssub.s32 %s9, 1
      // Predicated region
      $region13: #{ggcnn4_forward.9} parent=11 // pred_check
        %p118 = pneg %p56
      $region14: #{ggcnn4_forward.9} parent=11 // pred_check_branch
        %120 = sbr.rel (%p118) target = $region16
      $region15: #{ggcnn4_forward.9} parent=11 // pred_region
        _
      $region16: #{ggcnn4_forward.9} parent=11 // pred_fallthru
        _
      // Predicated region
      $region17: #{ggcnn4_forward.9} parent=11 // pred_check
        %p121 = pneg %p77
      $region18: #{ggcnn4_forward.9} parent=11 // pred_check_branch
        %123 = sbr.rel (%p121) target = $region20
      $region19: #{ggcnn4_forward.9} parent=11 // pred_region
        _
      $region20: #{ggcnn4_forward.9} parent=11 // pred_fallthru
        _
    $region12: #{ggcnn4_forward.9} parent=5 // pred_fallthru
      _
    %p124 = scmp.lt.s32.totalorder %s9, 2
    // Predicated region
    $region21: #{ggcnn4_forward.9} parent=5 // pred_check
      %p125 = pneg %p124
    $region22: #{ggcnn4_forward.9} parent=5 // pred_check_branch
      %127 = sbr.rel (%p125) target = $region24
    $region23: #{ggcnn4_forward.9} parent=5 // pred_region
      // Predicated region
      $region25: #{ggcnn4_forward.9} parent=23 // pred_check
        %p128 = pneg %p29
      $region26: #{ggcnn4_forward.9} parent=23 // pred_check_branch
        %130 = sbr.rel (%p128) target = $region28
      $region27: #{ggcnn4_forward.9} parent=23 // pred_region
        %p131 = scmp.lt.s32.totalorder %s9, 1
        %s132 = scalar_select %p131, %s9, 1
        %s133 = smul.addr %s132, 400
        %s134 = smul.addr %s133, 8
        %s135 = scalar_lea.vmem %s0, %s134
      $region28: #{ggcnn4_forward.9} parent=23 // pred_fallthru
        _
    $region24: #{ggcnn4_forward.9} parent=5 // pred_fallthru
      _
    %p136 = scmp.le.s32.totalorder 1, %s9
    %p137 = scmp.lt.s32.totalorder %s9, 3
    %p138 = pnand %p136, %p137
    %p139 = pneg %p138
    // Predicated region
    $region29: #{ggcnn4_forward.9} parent=5 // pred_check
      _
    $region30: #{ggcnn4_forward.9} parent=5 // pred_check_branch
      %141 = sbr.rel (%p138) target = $region32
    $region31: #{ggcnn4_forward.9} parent=5 // pred_region
      %s142 = ssub.s32 %s9, 1
      %p143 = scmp.lt.s32.totalorder %s14, 1
      %s144 = scalar_select %p143, %s14, 1
      %s145 = smul.addr %s144, 400
      %s146 = smul.addr %s145, 8
      %s147 = scalar_lea.vmem %s0, %s146
      %p148 = pneg %p35
      %p149 = pneg %p32
      %p150 = pneg %p56
      %p151 = pneg %p53
      %p152 = pneg %p77
      %p153 = pneg %p74
      %p154 = pneg %p103
      %p155 = pneg %p100
      %p156 = scmp.lt.s32.totalorder %s14, 1
      %s157 = scalar_select %p156, %s14, 1
      %s158 = smul.addr %s157, 4
      %s159 = smul.addr %s158, 8
      %s160 = scalar_lea.vmem %s3, %s159
      %p161 = scmp.lt.s32.totalorder %s14, 1
      %s162 = scalar_select %p161, %s14, 1
      %s163 = smul.addr %s162, 400
      %s164 = smul.addr %s163, 8
      %s165 = scalar_lea.vmem %s0, %s164
      %p166 = scmp.lt.s32.totalorder %s14, 1
      %s167 = scalar_select %p166, %s14, 1
      %s168 = smul.addr %s167, 4
      %s169 = smul.addr %s168, 8
      %s170 = scalar_lea.vmem %s3, %s169
      %v171 = vld [vmem:[%s165] sm:$0xff]
      %v172 = vld [vmem:[%s165 + $0x8] sm:$0xff]
      %v173 = vld [vmem:[%s165 + $0x10] sm:$0xff]
      %v174 = vld [vmem:[%s165 + $0x18] sm:$0xff]
      %v175 = vld [vmem:[%s165 + $0x20] sm:$0xff]
      %v176 = vld [vmem:[%s165 + $0x28] sm:$0xff]
      %v177 = vld [vmem:[%s165 + $0x30] sm:$0xff]
      %v178 = vld [vmem:[%s165 + $0x38] sm:$0xff]
      %v179 = vld [vmem:[%s165 + $0x40] sm:$0xff]
      %v180 = vld [vmem:[%s165 + $0x48] sm:$0xff]
      %v181 = vld [vmem:[%s165 + $0x50] sm:$0xff]
      %v182 = vld [vmem:[%s165 + $0x58] sm:$0xff]
      %v183 = vld [vmem:[%s165 + $0x60] sm:$0xff]
      %v184 = vld [vmem:[%s165 + $0x68] sm:$0xff]
      %v185 = vld [vmem:[%s165 + $0x70] sm:$0xff]
      %v186 = vld [vmem:[%s165 + $0x78] sm:$0xff]
      %v187 = vld [vmem:[%s165 + $0x80] sm:$0xff]
      %v188 = vld [vmem:[%s165 + $0x88] sm:$0xff]
      %v189 = vld [vmem:[%s165 + $0x90] sm:$0xff]
      %v190 = vld [vmem:[%s165 + $0x98] sm:$0xff]
      %v191 = vld [vmem:[%s165 + $0xa0] sm:$0xff]
      %v192 = vld [vmem:[%s165 + $0xa8] sm:$0xff]
      %v193 = vld [vmem:[%s165 + $0xb0] sm:$0xff]
      %v194 = vld [vmem:[%s165 + $0xb8] sm:$0xff]
      %v195 = vld [vmem:[%s165 + $0xc0] sm:$0xff]
      %v196 = vld [vmem:[%s165 + $0xc8] sm:$0xff]
      %v197 = vld [vmem:[%s165 + $0xd0] sm:$0xff]
      %v198 = vld [vmem:[%s165 + $0xd8] sm:$0xff]
      %v199 = vld [vmem:[%s165 + $0xe0] sm:$0xff]
      %v200 = vld [vmem:[%s165 + $0xe8] sm:$0xff]
      %v201 = vld [vmem:[%s165 + $0xf0] sm:$0xff]
      %v202 = vld [vmem:[%s165 + $0xf8] sm:$0xff]
      %v203 = vld [vmem:[%s165 + $0x100] sm:$0xff]
      %v204 = vld [vmem:[%s165 + $0x108] sm:$0xff]
      %v205 = vld [vmem:[%s165 + $0x110] sm:$0xff]
      %v206 = vld [vmem:[%s165 + $0x118] sm:$0xff]
      %v207 = vld [vmem:[%s165 + $0x120] sm:$0xff]
      %v208 = vld [vmem:[%s165 + $0x128] sm:$0xff]
      %v209 = vld [vmem:[%s165 + $0x130] sm:$0xff]
      %v210 = vld [vmem:[%s165 + $0x138] sm:$0xff]
      %v211 = vld [vmem:[%s165 + $0x140] sm:$0xff]
      %v212 = vld [vmem:[%s165 + $0x148] sm:$0xff]
      %v213 = vld [vmem:[%s165 + $0x150] sm:$0xff]
      %v214 = vld [vmem:[%s165 + $0x158] sm:$0xff]
      %v215 = vld [vmem:[%s165 + $0x160] sm:$0xff]
      %v216 = vld [vmem:[%s165 + $0x168] sm:$0xff]
      %v217 = vld [vmem:[%s165 + $0x170] sm:$0xff]
      %v218 = vld [vmem:[%s165 + $0x178] sm:$0xff]
      %v219 = vld [vmem:[%s165 + $0x180] sm:$0xff]
      %v220 = vld [vmem:[%s165 + $0x188] sm:$0xff]
      %v221 = vld [vmem:[%s165 + $0x190] sm:$0xff]
      %v222 = vld [vmem:[%s165 + $0x198] sm:$0xff]
      %v223 = vld [vmem:[%s165 + $0x1a0] sm:$0xff]
      %v224 = vld [vmem:[%s165 + $0x1a8] sm:$0xff]
      %v225 = vld [vmem:[%s165 + $0x1b0] sm:$0xff]
      %v226 = vld [vmem:[%s165 + $0x1b8] sm:$0xff]
      %v227 = vld [vmem:[%s165 + $0x1c0] sm:$0xff]
      %v228 = vld [vmem:[%s165 + $0x1c8] sm:$0xff]
      %v229 = vld [vmem:[%s165 + $0x1d0] sm:$0xff]
      %v230 = vld [vmem:[%s165 + $0x1d8] sm:$0xff]
      %v231 = vld [vmem:[%s165 + $0x1e0] sm:$0xff]
      %v232 = vld [vmem:[%s165 + $0x1e8] sm:$0xff]
      %v233 = vld [vmem:[%s165 + $0x1f0] sm:$0xff]
      %v234 = vld [vmem:[%s165 + $0x1f8] sm:$0xff]
      %v235 = vld [vmem:[%s165 + $0x200] sm:$0xff]
      %v236 = vld [vmem:[%s165 + $0x208] sm:$0xff]
      %v237 = vld [vmem:[%s165 + $0x210] sm:$0xff]
      %v238 = vld [vmem:[%s165 + $0x218] sm:$0xff]
      %v239 = vld [vmem:[%s165 + $0x220] sm:$0xff]
      %v240 = vld [vmem:[%s165 + $0x228] sm:$0xff]
      %v241 = vld [vmem:[%s165 + $0x230] sm:$0xff]
      %v242 = vld [vmem:[%s165 + $0x238] sm:$0xff]
      %v243 = vld [vmem:[%s165 + $0x240] sm:$0xff]
      %v244 = vld [vmem:[%s165 + $0x248] sm:$0xff]
      %v245 = vld [vmem:[%s165 + $0x250] sm:$0xff]
      %v246 = vld [vmem:[%s165 + $0x258] sm:$0xff]
      %v247 = vld [vmem:[%s165 + $0x260] sm:$0xff]
      %v248 = vld [vmem:[%s165 + $0x268] sm:$0xff]
      %v249 = vld [vmem:[%s165 + $0x270] sm:$0xff]
      %v250 = vld [vmem:[%s165 + $0x278] sm:$0xff]
      %v251 = vld [vmem:[%s165 + $0x280] sm:$0xff]
      %v252 = vld [vmem:[%s165 + $0x288] sm:$0xff]
      %v253 = vld [vmem:[%s165 + $0x290] sm:$0xff]
      %v254 = vld [vmem:[%s165 + $0x298] sm:$0xff]
      %v255 = vld [vmem:[%s165 + $0x2a0] sm:$0xff]
      %v256 = vld [vmem:[%s165 + $0x2a8] sm:$0xff]
      %v257 = vld [vmem:[%s165 + $0x2b0] sm:$0xff]
      %v258 = vld [vmem:[%s165 + $0x2b8] sm:$0xff]
      %v259 = vld [vmem:[%s165 + $0x2c0] sm:$0xff]
      %v260 = vld [vmem:[%s165 + $0x2c8] sm:$0xff]
      %v261 = vld [vmem:[%s165 + $0x2d0] sm:$0xff]
      %v262 = vld [vmem:[%s165 + $0x2d8] sm:$0xff]
      %v263 = vld [vmem:[%s165 + $0x2e0] sm:$0xff]
      %v264 = vld [vmem:[%s165 + $0x2e8] sm:$0xff]
      %v265 = vld [vmem:[%s165 + $0x2f0] sm:$0xff]
      %v266 = vld [vmem:[%s165 + $0x2f8] sm:$0xff]
      %v267 = vld [vmem:[%s165 + $0x300] sm:$0xff]
      %v268 = vld [vmem:[%s165 + $0x308] sm:$0xff]
      %v269 = vld [vmem:[%s165 + $0x310] sm:$0xff]
      %v270 = vld [vmem:[%s165 + $0x318] sm:$0xff]
      %v271 = vld [vmem:[%s165 + $0x320] sm:$0xff]
      %v272 = vld [vmem:[%s165 + $0x328] sm:$0xff]
      %v273 = vld [vmem:[%s165 + $0x330] sm:$0xff]
      %v274 = vld [vmem:[%s165 + $0x338] sm:$0xff]
      %v275 = vld [vmem:[%s165 + $0x340] sm:$0xff]
      %v276 = vld [vmem:[%s165 + $0x348] sm:$0xff]
      %v277 = vld [vmem:[%s165 + $0x350] sm:$0xff]
      %v278 = vld [vmem:[%s165 + $0x358] sm:$0xff]
      %v279 = vld [vmem:[%s165 + $0x360] sm:$0xff]
      %v280 = vld [vmem:[%s165 + $0x368] sm:$0xff]
      %v281 = vld [vmem:[%s165 + $0x370] sm:$0xff]
      %v282 = vld [vmem:[%s165 + $0x378] sm:$0xff]
      %v283 = vld [vmem:[%s165 + $0x380] sm:$0xff]
      %v284 = vld [vmem:[%s165 + $0x388] sm:$0xff]
      %v285 = vld [vmem:[%s165 + $0x390] sm:$0xff]
      %v286 = vld [vmem:[%s165 + $0x398] sm:$0xff]
      %v287 = vld [vmem:[%s165 + $0x3a0] sm:$0xff]
      %v288 = vld [vmem:[%s165 + $0x3a8] sm:$0xff]
      %v289 = vld [vmem:[%s165 + $0x3b0] sm:$0xff]
      %v290 = vld [vmem:[%s165 + $0x3b8] sm:$0xff]
      %v291 = vld [vmem:[%s165 + $0x3c0] sm:$0xff]
      %v292 = vld [vmem:[%s165 + $0x3c8] sm:$0xff]
      %v293 = vld [vmem:[%s165 + $0x3d0] sm:$0xff]
      %v294 = vld [vmem:[%s165 + $0x3d8] sm:$0xff]
      %v295 = vld [vmem:[%s165 + $0x3e0] sm:$0xff]
      %v296 = vld [vmem:[%s165 + $0x3e8] sm:$0xff]
      %v297 = vld [vmem:[%s165 + $0x3f0] sm:$0xff]
      %v298 = vld [vmem:[%s165 + $0x3f8] sm:$0xff]
      %v299 = vld [vmem:[%s165 + $0x400] sm:$0xff]
      %v300 = vld [vmem:[%s165 + $0x408] sm:$0xff]
      %v301 = vld [vmem:[%s165 + $0x410] sm:$0xff]
      %v302 = vld [vmem:[%s165 + $0x418] sm:$0xff]
      %v303 = vld [vmem:[%s165 + $0x420] sm:$0xff]
      %v304 = vld [vmem:[%s165 + $0x428] sm:$0xff]
      %v305 = vld [vmem:[%s165 + $0x430] sm:$0xff]
      %v306 = vld [vmem:[%s165 + $0x438] sm:$0xff]
      %v307 = vld [vmem:[%s165 + $0x440] sm:$0xff]
      %v308 = vld [vmem:[%s165 + $0x448] sm:$0xff]
      %v309 = vld [vmem:[%s165 + $0x450] sm:$0xff]
      %v310 = vld [vmem:[%s165 + $0x458] sm:$0xff]
      %v311 = vld [vmem:[%s165 + $0x460] sm:$0xff]
      %v312 = vld [vmem:[%s165 + $0x468] sm:$0xff]
      %v313 = vld [vmem:[%s165 + $0x470] sm:$0xff]
      %v314 = vld [vmem:[%s165 + $0x478] sm:$0xff]
      %v315 = vld [vmem:[%s165 + $0x480] sm:$0xff]
      %v316 = vld [vmem:[%s165 + $0x488] sm:$0xff]
      %v317 = vld [vmem:[%s165 + $0x490] sm:$0xff]
      %v318 = vld [vmem:[%s165 + $0x498] sm:$0xff]
      %v319 = vld [vmem:[%s165 + $0x4a0] sm:$0xff]
      %v320 = vld [vmem:[%s165 + $0x4a8] sm:$0xff]
      %v321 = vld [vmem:[%s165 + $0x4b0] sm:$0xff]
      %v322 = vld [vmem:[%s165 + $0x4b8] sm:$0xff]
      %v323 = vld [vmem:[%s165 + $0x4c0] sm:$0xff]
      %v324 = vld [vmem:[%s165 + $0x4c8] sm:$0xff]
      %v325 = vld [vmem:[%s165 + $0x4d0] sm:$0xff]
      %v326 = vld [vmem:[%s165 + $0x4d8] sm:$0xff]
      %v327 = vld [vmem:[%s165 + $0x4e0] sm:$0xff]
      %v328 = vld [vmem:[%s165 + $0x4e8] sm:$0xff]
      %v329 = vld [vmem:[%s165 + $0x4f0] sm:$0xff]
      %v330 = vld [vmem:[%s165 + $0x4f8] sm:$0xff]
      %v331 = vld [vmem:[%s165 + $0x500] sm:$0xff]
      %v332 = vld [vmem:[%s165 + $0x508] sm:$0xff]
      %v333 = vld [vmem:[%s165 + $0x510] sm:$0xff]
      %v334 = vld [vmem:[%s165 + $0x518] sm:$0xff]
      %v335 = vld [vmem:[%s165 + $0x520] sm:$0xff]
      %v336 = vld [vmem:[%s165 + $0x528] sm:$0xff]
      %v337 = vld [vmem:[%s165 + $0x530] sm:$0xff]
      %v338 = vld [vmem:[%s165 + $0x538] sm:$0xff]
      %v339 = vld [vmem:[%s165 + $0x540] sm:$0xff]
      %v340 = vld [vmem:[%s165 + $0x548] sm:$0xff]
      %v341 = vld [vmem:[%s165 + $0x550] sm:$0xff]
      %v342 = vld [vmem:[%s165 + $0x558] sm:$0xff]
      %v343 = vld [vmem:[%s165 + $0x560] sm:$0xff]
      %v344 = vld [vmem:[%s165 + $0x568] sm:$0xff]
      %v345 = vld [vmem:[%s165 + $0x570] sm:$0xff]
      %v346 = vld [vmem:[%s165 + $0x578] sm:$0xff]
      %v347 = vld [vmem:[%s165 + $0x580] sm:$0xff]
      %v348 = vld [vmem:[%s165 + $0x588] sm:$0xff]
      %v349 = vld [vmem:[%s165 + $0x590] sm:$0xff]
      %v350 = vld [vmem:[%s165 + $0x598] sm:$0xff]
      %v351 = vld [vmem:[%s165 + $0x5a0] sm:$0xff]
      %v352 = vld [vmem:[%s165 + $0x5a8] sm:$0xff]
      %v353 = vld [vmem:[%s165 + $0x5b0] sm:$0xff]
      %v354 = vld [vmem:[%s165 + $0x5b8] sm:$0xff]
      %v355 = vld [vmem:[%s165 + $0x5c0] sm:$0xff]
      %v356 = vld [vmem:[%s165 + $0x5c8] sm:$0xff]
      %v357 = vld [vmem:[%s165 + $0x5d0] sm:$0xff]
      %v358 = vld [vmem:[%s165 + $0x5d8] sm:$0xff]
      %v359 = vld [vmem:[%s165 + $0x5e0] sm:$0xff]
      %v360 = vld [vmem:[%s165 + $0x5e8] sm:$0xff]
      %v361 = vld [vmem:[%s165 + $0x5f0] sm:$0xff]
      %v362 = vld [vmem:[%s165 + $0x5f8] sm:$0xff]
      %v363 = vld [vmem:[%s165 + $0x600] sm:$0xff]
      %v364 = vld [vmem:[%s165 + $0x608] sm:$0xff]
      %v365 = vld [vmem:[%s165 + $0x610] sm:$0xff]
      %v366 = vld [vmem:[%s165 + $0x618] sm:$0xff]
      %v367 = vld [vmem:[%s165 + $0x620] sm:$0xff]
      %v368 = vld [vmem:[%s165 + $0x628] sm:$0xff]
      %v369 = vld [vmem:[%s165 + $0x630] sm:$0xff]
      %v370 = vld [vmem:[%s165 + $0x638] sm:$0xff]
      %v371 = vld [vmem:[%s165 + $0x640] sm:$0xff]
      %v372 = vld [vmem:[%s165 + $0x648] sm:$0xff]
      %v373 = vld [vmem:[%s165 + $0x650] sm:$0xff]
      %v374 = vld [vmem:[%s165 + $0x658] sm:$0xff]
      %v375 = vld [vmem:[%s165 + $0x660] sm:$0xff]
      %v376 = vld [vmem:[%s165 + $0x668] sm:$0xff]
      %v377 = vld [vmem:[%s165 + $0x670] sm:$0xff]
      %v378 = vld [vmem:[%s165 + $0x678] sm:$0xff]
      %v379 = vld [vmem:[%s165 + $0x680] sm:$0xff]
      %v380 = vld [vmem:[%s165 + $0x688] sm:$0xff]
      %v381 = vld [vmem:[%s165 + $0x690] sm:$0xff]
      %v382 = vld [vmem:[%s165 + $0x698] sm:$0xff]
      %v383 = vld [vmem:[%s165 + $0x6a0] sm:$0xff]
      %v384 = vld [vmem:[%s165 + $0x6a8] sm:$0xff]
      %v385 = vld [vmem:[%s165 + $0x6b0] sm:$0xff]
      %v386 = vld [vmem:[%s165 + $0x6b8] sm:$0xff]
      %v387 = vld [vmem:[%s165 + $0x6c0] sm:$0xff]
      %v388 = vld [vmem:[%s165 + $0x6c8] sm:$0xff]
      %v389 = vld [vmem:[%s165 + $0x6d0] sm:$0xff]
      %v390 = vld [vmem:[%s165 + $0x6d8] sm:$0xff]
      %v391 = vld [vmem:[%s165 + $0x6e0] sm:$0xff]
      %v392 = vld [vmem:[%s165 + $0x6e8] sm:$0xff]
      %v393 = vld [vmem:[%s165 + $0x6f0] sm:$0xff]
      %v394 = vld [vmem:[%s165 + $0x6f8] sm:$0xff]
      %v395 = vld [vmem:[%s165 + $0x700] sm:$0xff]
      %v396 = vld [vmem:[%s165 + $0x708] sm:$0xff]
      %v397 = vld [vmem:[%s165 + $0x710] sm:$0xff]
      %v398 = vld [vmem:[%s165 + $0x718] sm:$0xff]
      %v399 = vld [vmem:[%s165 + $0x720] sm:$0xff]
      %v400 = vld [vmem:[%s165 + $0x728] sm:$0xff]
      %v401 = vld [vmem:[%s165 + $0x730] sm:$0xff]
      %v402 = vld [vmem:[%s165 + $0x738] sm:$0xff]
      %v403 = vld [vmem:[%s165 + $0x740] sm:$0xff]
      %v404 = vld [vmem:[%s165 + $0x748] sm:$0xff]
      %v405 = vld [vmem:[%s165 + $0x750] sm:$0xff]
      %v406 = vld [vmem:[%s165 + $0x758] sm:$0xff]
      %v407 = vld [vmem:[%s165 + $0x760] sm:$0xff]
      %v408 = vld [vmem:[%s165 + $0x768] sm:$0xff]
      %v409 = vld [vmem:[%s165 + $0x770] sm:$0xff]
      %v410 = vld [vmem:[%s165 + $0x778] sm:$0xff]
      %v411 = vld [vmem:[%s165 + $0x780] sm:$0xff]
      %v412 = vld [vmem:[%s165 + $0x788] sm:$0xff]
      %v413 = vld [vmem:[%s165 + $0x790] sm:$0xff]
      %v414 = vld [vmem:[%s165 + $0x798] sm:$0xff]
      %v415 = vld [vmem:[%s165 + $0x7a0] sm:$0xff]
      %v416 = vld [vmem:[%s165 + $0x7a8] sm:$0xff]
      %v417 = vld [vmem:[%s165 + $0x7b0] sm:$0xff]
      %v418 = vld [vmem:[%s165 + $0x7b8] sm:$0xff]
      %v419 = vld [vmem:[%s165 + $0x7c0] sm:$0xff]
      %v420 = vld [vmem:[%s165 + $0x7c8] sm:$0xff]
      %v421 = vld [vmem:[%s165 + $0x7d0] sm:$0xff]
      %v422 = vld [vmem:[%s165 + $0x7d8] sm:$0xff]
      %v423 = vld [vmem:[%s165 + $0x7e0] sm:$0xff]
      %v424 = vld [vmem:[%s165 + $0x7e8] sm:$0xff]
      %v425 = vld [vmem:[%s165 + $0x7f0] sm:$0xff]
      %v426 = vld [vmem:[%s165 + $0x7f8] sm:$0xff]
      %v427 = vld [vmem:[%s165 + $0x800] sm:$0xff]
      %v428 = vld [vmem:[%s165 + $0x808] sm:$0xff]
      %v429 = vld [vmem:[%s165 + $0x810] sm:$0xff]
      %v430 = vld [vmem:[%s165 + $0x818] sm:$0xff]
      %v431 = vld [vmem:[%s165 + $0x820] sm:$0xff]
      %v432 = vld [vmem:[%s165 + $0x828] sm:$0xff]
      %v433 = vld [vmem:[%s165 + $0x830] sm:$0xff]
      %v434 = vld [vmem:[%s165 + $0x838] sm:$0xff]
      %v435 = vld [vmem:[%s165 + $0x840] sm:$0xff]
      %v436 = vld [vmem:[%s165 + $0x848] sm:$0xff]
      %v437 = vld [vmem:[%s165 + $0x850] sm:$0xff]
      %v438 = vld [vmem:[%s165 + $0x858] sm:$0xff]
      %v439 = vld [vmem:[%s165 + $0x860] sm:$0xff]
      %v440 = vld [vmem:[%s165 + $0x868] sm:$0xff]
      %v441 = vld [vmem:[%s165 + $0x870] sm:$0xff]
      %v442 = vld [vmem:[%s165 + $0x878] sm:$0xff]
      %v443 = vld [vmem:[%s165 + $0x880] sm:$0xff]
      %v444 = vld [vmem:[%s165 + $0x888] sm:$0xff]
      %v445 = vld [vmem:[%s165 + $0x890] sm:$0xff]
      %v446 = vld [vmem:[%s165 + $0x898] sm:$0xff]
      %v447 = vld [vmem:[%s165 + $0x8a0] sm:$0xff]
      %v448 = vld [vmem:[%s165 + $0x8a8] sm:$0xff]
      %v449 = vld [vmem:[%s165 + $0x8b0] sm:$0xff]
      %v450 = vld [vmem:[%s165 + $0x8b8] sm:$0xff]
      %v451 = vld [vmem:[%s165 + $0x8c0] sm:$0xff]
      %v452 = vld [vmem:[%s165 + $0x8c8] sm:$0xff]
      %v453 = vld [vmem:[%s165 + $0x8d0] sm:$0xff]
      %v454 = vld [vmem:[%s165 + $0x8d8] sm:$0xff]
      %v455 = vld [vmem:[%s165 + $0x8e0] sm:$0xff]
      %v456 = vld [vmem:[%s165 + $0x8e8] sm:$0xff]
      %v457 = vld [vmem:[%s165 + $0x8f0] sm:$0xff]
      %v458 = vld [vmem:[%s165 + $0x8f8] sm:$0xff]
      %v459 = vld [vmem:[%s165 + $0x900] sm:$0xff]
      %v460 = vld [vmem:[%s165 + $0x908] sm:$0xff]
      %v461 = vld [vmem:[%s165 + $0x910] sm:$0xff]
      %v462 = vld [vmem:[%s165 + $0x918] sm:$0xff]
      %v463 = vld [vmem:[%s165 + $0x920] sm:$0xff]
      %v464 = vld [vmem:[%s165 + $0x928] sm:$0xff]
      %v465 = vld [vmem:[%s165 + $0x930] sm:$0xff]
      %v466 = vld [vmem:[%s165 + $0x938] sm:$0xff]
      %v467 = vld [vmem:[%s165 + $0x940] sm:$0xff]
      %v468 = vld [vmem:[%s165 + $0x948] sm:$0xff]
      %v469 = vld [vmem:[%s165 + $0x950] sm:$0xff]
      %v470 = vld [vmem:[%s165 + $0x958] sm:$0xff]
      %v471 = vld [vmem:[%s165 + $0x960] sm:$0xff]
      %v472 = vld [vmem:[%s165 + $0x968] sm:$0xff]
      %v473 = vld [vmem:[%s165 + $0x970] sm:$0xff]
      %v474 = vld [vmem:[%s165 + $0x978] sm:$0xff]
      %v475 = vld [vmem:[%s165 + $0x980] sm:$0xff]
      %v476 = vld [vmem:[%s165 + $0x988] sm:$0xff]
      %v477 = vld [vmem:[%s165 + $0x990] sm:$0xff]
      %v478 = vld [vmem:[%s165 + $0x998] sm:$0xff]
      %v479 = vld [vmem:[%s165 + $0x9a0] sm:$0xff]
      %v480 = vld [vmem:[%s165 + $0x9a8] sm:$0xff]
      %v481 = vld [vmem:[%s165 + $0x9b0] sm:$0xff]
      %v482 = vld [vmem:[%s165 + $0x9b8] sm:$0xff]
      %v483 = vld [vmem:[%s165 + $0x9c0] sm:$0xff]
      %v484 = vld [vmem:[%s165 + $0x9c8] sm:$0xff]
      %v485 = vld [vmem:[%s165 + $0x9d0] sm:$0xff]
      %v486 = vld [vmem:[%s165 + $0x9d8] sm:$0xff]
      %v487 = vld [vmem:[%s165 + $0x9e0] sm:$0xff]
      %v488 = vld [vmem:[%s165 + $0x9e8] sm:$0xff]
      %v489 = vld [vmem:[%s165 + $0x9f0] sm:$0xff]
      %v490 = vld [vmem:[%s165 + $0x9f8] sm:$0xff]
      %v491 = vld [vmem:[%s165 + $0xa00] sm:$0xff]
      %v492 = vld [vmem:[%s165 + $0xa08] sm:$0xff]
      %v493 = vld [vmem:[%s165 + $0xa10] sm:$0xff]
      %v494 = vld [vmem:[%s165 + $0xa18] sm:$0xff]
      %v495 = vld [vmem:[%s165 + $0xa20] sm:$0xff]
      %v496 = vld [vmem:[%s165 + $0xa28] sm:$0xff]
      %v497 = vld [vmem:[%s165 + $0xa30] sm:$0xff]
      %v498 = vld [vmem:[%s165 + $0xa38] sm:$0xff]
      %v499 = vld [vmem:[%s165 + $0xa40] sm:$0xff]
      %v500 = vld [vmem:[%s165 + $0xa48] sm:$0xff]
      %v501 = vld [vmem:[%s165 + $0xa50] sm:$0xff]
      %v502 = vld [vmem:[%s165 + $0xa58] sm:$0xff]
      %v503 = vld [vmem:[%s165 + $0xa60] sm:$0xff]
      %v504 = vld [vmem:[%s165 + $0xa68] sm:$0xff]
      %v505 = vld [vmem:[%s165 + $0xa70] sm:$0xff]
      %v506 = vld [vmem:[%s165 + $0xa78] sm:$0xff]
      %v507 = vld [vmem:[%s165 + $0xa80] sm:$0xff]
      %v508 = vld [vmem:[%s165 + $0xa88] sm:$0xff]
      %v509 = vld [vmem:[%s165 + $0xa90] sm:$0xff]
      %v510 = vld [vmem:[%s165 + $0xa98] sm:$0xff]
      %v511 = vld [vmem:[%s165 + $0xaa0] sm:$0xff]
      %v512 = vld [vmem:[%s165 + $0xaa8] sm:$0xff]
      %v513 = vld [vmem:[%s165 + $0xab0] sm:$0xff]
      %v514 = vld [vmem:[%s165 + $0xab8] sm:$0xff]
      %v515 = vld [vmem:[%s165 + $0xac0] sm:$0xff]
      %v516 = vld [vmem:[%s165 + $0xac8] sm:$0xff]
      %v517 = vld [vmem:[%s165 + $0xad0] sm:$0xff]
      %v518 = vld [vmem:[%s165 + $0xad8] sm:$0xff]
      %v519 = vld [vmem:[%s165 + $0xae0] sm:$0xff]
      %v520 = vld [vmem:[%s165 + $0xae8] sm:$0xff]
      %v521 = vld [vmem:[%s165 + $0xaf0] sm:$0xff]
      %v522 = vld [vmem:[%s165 + $0xaf8] sm:$0xff]
      %v523 = vld [vmem:[%s165 + $0xb00] sm:$0xff]
      %v524 = vld [vmem:[%s165 + $0xb08] sm:$0xff]
      %v525 = vld [vmem:[%s165 + $0xb10] sm:$0xff]
      %v526 = vld [vmem:[%s165 + $0xb18] sm:$0xff]
      %v527 = vld [vmem:[%s165 + $0xb20] sm:$0xff]
      %v528 = vld [vmem:[%s165 + $0xb28] sm:$0xff]
      %v529 = vld [vmem:[%s165 + $0xb30] sm:$0xff]
      %v530 = vld [vmem:[%s165 + $0xb38] sm:$0xff]
      %v531 = vld [vmem:[%s165 + $0xb40] sm:$0xff]
      %v532 = vld [vmem:[%s165 + $0xb48] sm:$0xff]
      %v533 = vld [vmem:[%s165 + $0xb50] sm:$0xff]
      %v534 = vld [vmem:[%s165 + $0xb58] sm:$0xff]
      %v535 = vld [vmem:[%s165 + $0xb60] sm:$0xff]
      %v536 = vld [vmem:[%s165 + $0xb68] sm:$0xff]
      %v537 = vld [vmem:[%s165 + $0xb70] sm:$0xff]
      %v538 = vld [vmem:[%s165 + $0xb78] sm:$0xff]
      %v539 = vld [vmem:[%s165 + $0xb80] sm:$0xff]
      %v540 = vld [vmem:[%s165 + $0xb88] sm:$0xff]
      %v541 = vld [vmem:[%s165 + $0xb90] sm:$0xff]
      %v542 = vld [vmem:[%s165 + $0xb98] sm:$0xff]
      %v543 = vld [vmem:[%s165 + $0xba0] sm:$0xff]
      %v544 = vld [vmem:[%s165 + $0xba8] sm:$0xff]
      %v545 = vld [vmem:[%s165 + $0xbb0] sm:$0xff]
      %v546 = vld [vmem:[%s165 + $0xbb8] sm:$0xff]
      %v547 = vld [vmem:[%s165 + $0xbc0] sm:$0xff]
      %v548 = vld [vmem:[%s165 + $0xbc8] sm:$0xff]
      %v549 = vld [vmem:[%s165 + $0xbd0] sm:$0xff]
      %v550 = vld [vmem:[%s165 + $0xbd8] sm:$0xff]
      %v551 = vld [vmem:[%s165 + $0xbe0] sm:$0xff]
      %v552 = vld [vmem:[%s165 + $0xbe8] sm:$0xff]
      %v553 = vld [vmem:[%s165 + $0xbf0] sm:$0xff]
      %v554 = vld [vmem:[%s165 + $0xbf8] sm:$0xff]
      %v555 = vld [vmem:[%s165 + $0xc00] sm:$0xff]
      %v556 = vld [vmem:[%s165 + $0xc08] sm:$0xff]
      %v557 = vld [vmem:[%s165 + $0xc10] sm:$0xff]
      %v558 = vld [vmem:[%s165 + $0xc18] sm:$0xff]
      %v559 = vld [vmem:[%s165 + $0xc20] sm:$0xff]
      %v560 = vld [vmem:[%s165 + $0xc28] sm:$0xff]
      %v561 = vld [vmem:[%s165 + $0xc30] sm:$0xff]
      %v562 = vld [vmem:[%s165 + $0xc38] sm:$0xff]
      %v563 = vld [vmem:[%s165 + $0xc40] sm:$0xff]
      %v564 = vld [vmem:[%s165 + $0xc48] sm:$0xff]
      %v565 = vld [vmem:[%s165 + $0xc50] sm:$0xff]
      %v566 = vld [vmem:[%s165 + $0xc58] sm:$0xff]
      %v567 = vld [vmem:[%s165 + $0xc60] sm:$0xff]
      %v568 = vld [vmem:[%s165 + $0xc68] sm:$0xff]
      %v569 = vld [vmem:[%s165 + $0xc70] sm:$0xff]
      %v570 = vld [vmem:[%s165 + $0xc78] sm:$0xff]
      %v571 = vld [vmem:[%s1] sm:$0xff]
      %v572 = vld [vmem:[%s1 + $0x8] sm:$0xff]
      %v573 = vld [vmem:[%s1 + $0x10] sm:$0xff]
      %v574 = vld [vmem:[%s1 + $0x18] sm:$0xff]
      %v575 = vld [vmem:[%s1 + $0x20] sm:$0xff]
      %v576 = vld [vmem:[%s1 + $0x28] sm:$0xff]
      %v577 = vld [vmem:[%s1 + $0x30] sm:$0xff]
      %v578 = vld [vmem:[%s1 + $0x38] sm:$0xff]
      %v579 = vld [vmem:[%s2] sm:$0xff]
      %v580 = vld [vmem:[%s2 + $0x8] sm:$0xff]
      %582 = vset.pattern.permute.xlu0 0
      %583 = vperm.xlu0 %582, %v579
      %v584 = vpop.permute.xlu0 %583
      %587 = vset.pattern.permute.xlu0 0
      %588 = vperm.xlu0 %587, %v580
      %v589 = vpop.permute.xlu0 %588
      %vm591 = vcmask 130048
      %v593 = vsel %vm591, %v574, 0
      %v596 = vsel %vm591, %v578, 0
      %598 = vmatprep.subr.mxu0 %v172
      %599 = vmatpush1.msra.mxu0 %v171
      %600 = vmatprep.subr.mxu0 %v180
      %601 = vmatpush1.msra.mxu0 %v179
      %602 = vmatprep.subr.mxu0 %v188
      %603 = vmatpush1.msra.mxu0 %v187
      %604 = vmatprep.subr.mxu0 %v196
      %605 = vmatpush1.msra.mxu0 %v195
      %606 = vmatprep.subr.mxu0 %v204
      %607 = vmatpush1.msra.mxu0 %v203
      %608 = vmatprep.subr.mxu0 %v212
      %609 = vmatpush1.msra.mxu0 %v211
      %610 = vmatprep.subr.mxu0 %v220
      %611 = vmatpush1.msra.mxu0 %v219
      %612 = vmatprep.subr.mxu0 %v228
      %613 = vmatpush1.msra.mxu0 %v227
      %614 = vmatprep.subr.mxu0 %v236
      %615 = vmatpush1.msra.mxu0 %v235
      %616 = vmatprep.subr.mxu0 %v244
      %617 = vmatpush1.msra.mxu0 %v243
      %618 = vmatprep.subr.mxu0 %v252
      %619 = vmatpush1.msra.mxu0 %v251
      %620 = vmatprep.subr.mxu0 %v260
      %621 = vmatpush1.msra.mxu0 %v259
      %622 = vmatprep.subr.mxu0 %v268
      %623 = vmatpush1.msra.mxu0 %v267
      %624 = vmatprep.subr.mxu0 %v276
      %625 = vmatpush1.msra.mxu0 %v275
      %626 = vmatprep.subr.mxu0 %v284
      %627 = vmatpush1.msra.mxu0 %v283
      %628 = vmatprep.subr.mxu0 %v292
      %629 = vmatpush1.msra.mxu0 %v291
      %630 = vmatprep.subr.mxu0 %v300
      %631 = vmatpush1.msra.mxu0 %v299
      %632 = vmatprep.subr.mxu0 %v308
      %633 = vmatpush1.msra.mxu0 %v307
      %634 = vmatprep.subr.mxu0 %v316
      %635 = vmatpush1.msra.mxu0 %v315
      %636 = vmatprep.subr.mxu0 %v324
      %637 = vmatpush1.msra.mxu0 %v323
      %638 = vmatprep.subr.mxu0 %v332
      %639 = vmatpush1.msra.mxu0 %v331
      %640 = vmatprep.subr.mxu0 %v340
      %641 = vmatpush1.msra.mxu0 %v339
      %642 = vmatprep.subr.mxu0 %v348
      %643 = vmatpush1.msra.mxu0 %v347
      %644 = vmatprep.subr.mxu0 %v356
      %645 = vmatpush1.msra.mxu0 %v355
      %646 = vmatprep.subr.mxu0 %v364
      %647 = vmatpush1.msra.mxu0 %v363
      %648 = vmatprep.subr.mxu0 %v372
      %649 = vmatpush1.msra.mxu0 %v371
      %650 = vmatprep.subr.mxu0 %v380
      %651 = vmatpush1.msra.mxu0 %v379
      %652 = vmatprep.subr.mxu0 %v388
      %653 = vmatpush1.msra.mxu0 %v387
      %654 = vmatprep.subr.mxu0 %v396
      %655 = vmatpush1.msra.mxu0 %v395
      %656 = vmatprep.subr.mxu0 %v404
      %657 = vmatpush1.msra.mxu0 %v403
      %658 = vmatprep.subr.mxu0 %v412
      %659 = vmatpush1.msra.mxu0 %v411
      %660 = vmatprep.subr.mxu0 %v420
      %661 = vmatpush1.msra.mxu0 %v419
      %662 = vmatprep.mubr.f32.mxu0 %v572
      %663 = vmatmul.mubr.f32.gmra.mrb[0].mxu0 %v571
      %v664 = vpop.f32.mrb[0].mxu0
      %v665 = vadd.f32 %v584, %v664
      %v666 = vpop.f32.mrb[0].mxu0
      %v667 = vadd.f32 %v584, %v666
      %668 = vmatprep.mubr.f32.mxu0 %v576
      %669 = vmatmul.mubr.f32.gmra.mrb[0].mxu0 %v575
      %v670 = vpop.f32.mrb[0].mxu0
      %v671 = vadd.f32 %v589, %v670
      %v672 = vpop.f32.mrb[0].mxu0
      %v673 = vadd.f32 %v589, %v672
      %674 = vdwg.mxu0
      %675 = vmatprep.subr.mxu0 %v428
      %676 = vmatpush1.msra.mxu0 %v427
      %677 = vmatprep.subr.mxu0 %v436
      %678 = vmatpush1.msra.mxu0 %v435
      %679 = vmatprep.subr.mxu0 %v444
      %680 = vmatpush1.msra.mxu0 %v443
      %681 = vmatprep.subr.mxu0 %v452
      %682 = vmatpush1.msra.mxu0 %v451
      %683 = vmatprep.subr.mxu0 %v460
      %684 = vmatpush1.msra.mxu0 %v459
      %685 = vmatprep.subr.mxu0 %v468
      %686 = vmatpush1.msra.mxu0 %v467
      %687 = vmatprep.subr.mxu0 %v476
      %688 = vmatpush1.msra.mxu0 %v475
      %689 = vmatprep.subr.mxu0 %v484
      %690 = vmatpush1.msra.mxu0 %v483
      %691 = vmatprep.subr.mxu0 %v492
      %692 = vmatpush1.msra.mxu0 %v491
      %693 = vmatprep.subr.mxu0 %v500
      %694 = vmatpush1.msra.mxu0 %v499
      %695 = vmatprep.subr.mxu0 %v508
      %696 = vmatpush1.msra.mxu0 %v507
      %697 = vmatprep.subr.mxu0 %v516
      %698 = vmatpush1.msra.mxu0 %v515
      %699 = vmatprep.subr.mxu0 %v524
      %700 = vmatpush1.msra.mxu0 %v523
      %701 = vmatprep.subr.mxu0 %v532
      %702 = vmatpush1.msra.mxu0 %v531
      %703 = vmatprep.subr.mxu0 %v540
      %704 = vmatpush1.msra.mxu0 %v539
      %705 = vmatprep.subr.mxu0 %v548
      %706 = vmatpush1.msra.mxu0 %v547
      %707 = vmatprep.subr.mxu0 %v556
      %708 = vmatpush1.msra.mxu0 %v555
      %709 = vmatprep.subr.mxu0 %v564
      %710 = vmatpush1.msra.mxu0 %v563
      %711 = vmatprep.subr.mxu0 0.0
      %712 = vmatpush1.msra.mxu0 0.0
      %713 = vmatprep.subr.mxu0 0.0
      %714 = vmatpush1.msra.mxu0 0.0
      %715 = vmatprep.subr.mxu0 0.0
      %716 = vmatpush1.msra.mxu0 0.0
      %717 = vmatprep.subr.mxu0 0.0
      %718 = vmatpush1.msra.mxu0 0.0
      %719 = vmatprep.subr.mxu0 0.0
      %720 = vmatpush1.msra.mxu0 0.0
      %721 = vmatprep.subr.mxu0 0.0
      %722 = vmatpush1.msra.mxu0 0.0
      %723 = vmatprep.subr.mxu0 0.0
      %724 = vmatpush1.msra.mxu0 0.0
      %725 = vmatprep.subr.mxu0 0.0
      %726 = vmatpush1.msra.mxu0 0.0
      %727 = vmatprep.subr.mxu0 0.0
      %728 = vmatpush1.msra.mxu0 0.0
      %729 = vmatprep.subr.mxu0 0.0
      %730 = vmatpush1.msra.mxu0 0.0
      %731 = vmatprep.subr.mxu0 0.0
      %732 = vmatpush1.msra.mxu0 0.0
      %733 = vmatprep.subr.mxu0 0.0
      %734 = vmatpush1.msra.mxu0 0.0
      %735 = vmatprep.subr.mxu0 0.0
      %736 = vmatpush1.msra.mxu0 0.0
      %737 = vmatprep.subr.mxu0 0.0
      %738 = vmatpush1.msra.mxu0 0.0
      %739 = vmatprep.mubr.f32.mxu0 %v593
      %740 = vmatmul.mubr.f32.gmra.mrb[0].mxu0 %v573
      %v741 = vpop.f32.mrb[0].mxu0
      %v742 = vadd.f32 %v665, %v741
      %v743 = vpop.f32.mrb[0].mxu0
      %v744 = vadd.f32 %v667, %v743
      %745 = vmatprep.mubr.f32.mxu0 %v596
      %746 = vmatmul.mubr.f32.gmra.mrb[0].mxu0 %v577
      %v747 = vpop.f32.mrb[0].mxu0
      %v748 = vadd.f32 %v671, %v747
      %v749 = vpop.f32.mrb[0].mxu0
      %v750 = vadd.f32 %v673, %v749
      %751 = vdwg.mxu0
      %752 = vmatprep.subr.mxu0 %v174
      %753 = vmatpush1.msra.mxu0 %v173
      %754 = vmatprep.subr.mxu0 %v182
      %755 = vmatpush1.msra.mxu0 %v181
      %756 = vmatprep.subr.mxu0 %v190
      %757 = vmatpush1.msra.mxu0 %v189
      %758 = vmatprep.subr.mxu0 %v198
      %759 = vmatpush1.msra.mxu0 %v197
      %760 = vmatprep.subr.mxu0 %v206
      %761 = vmatpush1.msra.mxu0 %v205
      %762 = vmatprep.subr.mxu0 %v214
      %763 = vmatpush1.msra.mxu0 %v213
      %764 = vmatprep.subr.mxu0 %v222
      %765 = vmatpush1.msra.mxu0 %v221
      %766 = vmatprep.subr.mxu0 %v230
      %767 = vmatpush1.msra.mxu0 %v229
      %768 = vmatprep.subr.mxu0 %v238
      %769 = vmatpush1.msra.mxu0 %v237
      %770 = vmatprep.subr.mxu0 %v246
      %771 = vmatpush1.msra.mxu0 %v245
      %772 = vmatprep.subr.mxu0 %v254
      %773 = vmatpush1.msra.mxu0 %v253
      %774 = vmatprep.subr.mxu0 %v262
      %775 = vmatpush1.msra.mxu0 %v261
      %776 = vmatprep.subr.mxu0 %v270
      %777 = vmatpush1.msra.mxu0 %v269
      %778 = vmatprep.subr.mxu0 %v278
      %779 = vmatpush1.msra.mxu0 %v277
      %780 = vmatprep.subr.mxu0 %v286
      %781 = vmatpush1.msra.mxu0 %v285
      %782 = vmatprep.subr.mxu0 %v294
      %783 = vmatpush1.msra.mxu0 %v293
      %784 = vmatprep.subr.mxu0 %v302
      %785 = vmatpush1.msra.mxu0 %v301
      %786 = vmatprep.subr.mxu0 %v310
      %787 = vmatpush1.msra.mxu0 %v309
      %788 = vmatprep.subr.mxu0 %v318
      %789 = vmatpush1.msra.mxu0 %v317
      %790 = vmatprep.subr.mxu0 %v326
      %791 = vmatpush1.msra.mxu0 %v325
      %792 = vmatprep.subr.mxu0 %v334
      %793 = vmatpush1.msra.mxu0 %v333
      %794 = vmatprep.subr.mxu0 %v342
      %795 = vmatpush1.msra.mxu0 %v341
      %796 = vmatprep.subr.mxu0 %v350
      %797 = vmatpush1.msra.mxu0 %v349
      %798 = vmatprep.subr.mxu0 %v358
      %799 = vmatpush1.msra.mxu0 %v357
      %800 = vmatprep.subr.mxu0 %v366
      %801 = vmatpush1.msra.mxu0 %v365
      %802 = vmatprep.subr.mxu0 %v374
      %803 = vmatpush1.msra.mxu0 %v373
      %804 = vmatprep.subr.mxu0 %v382
      %805 = vmatpush1.msra.mxu0 %v381
      %806 = vmatprep.subr.mxu0 %v390
      %807 = vmatpush1.msra.mxu0 %v389
      %808 = vmatprep.subr.mxu0 %v398
      %809 = vmatpush1.msra.mxu0 %v397
      %810 = vmatprep.subr.mxu0 %v406
      %811 = vmatpush1.msra.mxu0 %v405
      %812 = vmatprep.subr.mxu0 %v414
      %813 = vmatpush1.msra.mxu0 %v413
      %814 = vmatprep.subr.mxu0 %v422
      %815 = vmatpush1.msra.mxu0 %v421
      %816 = vmatprep.mubr.f32.mxu0 %v572
      %817 = vmatmul.mubr.f32.gmra.mrb[0].mxu0 %v571
      %v818 = vpop.f32.mrb[0].mxu0
      %v819 = vadd.f32 %v584, %v818
      %v820 = vpop.f32.mrb[0].mxu0
      %v821 = vadd.f32 %v584, %v820
      %822 = vmatprep.mubr.f32.mxu0 %v576
      %823 = vmatmul.mubr.f32.gmra.mrb[0].mxu0 %v575
      %v824 = vpop.f32.mrb[0].mxu0
      %v825 = vadd.f32 %v589, %v824
      %v826 = vpop.f32.mrb[0].mxu0
      %v827 = vadd.f32 %v589, %v826
      %828 = vdwg.mxu0
      %829 = vmatprep.subr.mxu0 %v430
      %830 = vmatpush1.msra.mxu0 %v429
      %831 = vmatprep.subr.mxu0 %v438
      %832 = vmatpush1.msra.mxu0 %v437
      %833 = vmatprep.subr.mxu0 %v446
      %834 = vmatpush1.msra.mxu0 %v445
      %835 = vmatprep.subr.mxu0 %v454
      %836 = vmatpush1.msra.mxu0 %v453
      %837 = vmatprep.subr.mxu0 %v462
      %838 = vmatpush1.msra.mxu0 %v461
      %839 = vmatprep.subr.mxu0 %v470
      %840 = vmatpush1.msra.mxu0 %v469
      %841 = vmatprep.subr.mxu0 %v478
      %842 = vmatpush1.msra.mxu0 %v477
      %843 = vmatprep.subr.mxu0 %v486
      %844 = vmatpush1.msra.mxu0 %v485
      %845 = vmatprep.subr.mxu0 %v494
      %846 = vmatpush1.msra.mxu0 %v493
      %847 = vmatprep.subr.mxu0 %v502
      %848 = vmatpush1.msra.mxu0 %v501
      %849 = vmatprep.subr.mxu0 %v510
      %850 = vmatpush1.msra.mxu0 %v509
      %851 = vmatprep.subr.mxu0 %v518
      %852 = vmatpush1.msra.mxu0 %v517
      %853 = vmatprep.subr.mxu0 %v526
      %854 = vmatpush1.msra.mxu0 %v525
      %855 = vmatprep.subr.mxu0 %v534
      %856 = vmatpush1.msra.mxu0 %v533
      %857 = vmatprep.subr.mxu0 %v542
      %858 = vmatpush1.msra.mxu0 %v541
      %859 = vmatprep.subr.mxu0 %v550
      %860 = vmatpush1.msra.mxu0 %v549
      %861 = vmatprep.subr.mxu0 %v558
      %862 = vmatpush1.msra.mxu0 %v557
      %863 = vmatprep.subr.mxu0 %v566
      %864 = vmatpush1.msra.mxu0 %v565
      %865 = vmatprep.subr.mxu0 0.0
      %866 = vmatpush1.msra.mxu0 0.0
      %867 = vmatprep.subr.mxu0 0.0
      %868 = vmatpush1.msra.mxu0 0.0
      %869 = vmatprep.subr.mxu0 0.0
      %870 = vmatpush1.msra.mxu0 0.0
      %871 = vmatprep.subr.mxu0 0.0
      %872 = vmatpush1.msra.mxu0 0.0
      %873 = vmatprep.subr.mxu0 0.0
      %874 = vmatpush1.msra.mxu0 0.0
      %875 = vmatprep.subr.mxu0 0.0
      %876 = vmatpush1.msra.mxu0 0.0
      %877 = vmatprep.subr.mxu0 0.0
      %878 = vmatpush1.msra.mxu0 0.0
      %879 = vmatprep.subr.mxu0 0.0
      %880 = vmatpush1.msra.mxu0 0.0
      %881 = vmatprep.subr.mxu0 0.0
      %882 = vmatpush1.msra.mxu0 0.0
      %883 = vmatprep.subr.mxu0 0.0
      %884 = vmatpush1.msra.mxu0 0.0
      %885 = vmatprep.subr.mxu0 0.0
      %886 = vmatpush1.msra.mxu0 0.0
      %887 = vmatprep.subr.mxu0 0.0
      %888 = vmatpush1.msra.mxu0 0.0
      %889 = vmatprep.subr.mxu0 0.0
      %890 = vmatpush1.msra.mxu0 0.0
      %891 = vmatprep.subr.mxu0 0.0
      %892 = vmatpush1.msra.mxu0 0.0
      %893 = vmatprep.mubr.f32.mxu0 %v593
      %894 = vmatmul.mubr.f32.gmra.mrb[0].mxu0 %v573
      %v895 = vpop.f32.mrb[0].mxu0
      %v896 = vadd.f32 %v819, %v895
      %v897 = vpop.f32.mrb[0].mxu0
      %v898 = vadd.f32 %v821, %v897
      %899 = vmatprep.mubr.f32.mxu0 %v596
      %900 = vmatmul.mubr.f32.gmra.mrb[0].mxu0 %v577
      %v901 = vpop.f32.mrb[0].mxu0
      %v902 = vadd.f32 %v825, %v901
      %v903 = vpop.f32.mrb[0].mxu0
      %v904 = vadd.f32 %v827, %v903
      %905 = vdwg.mxu0
      %906 = vmatprep.subr.mxu0 %v176
      %907 = vmatpush1.msra.mxu0 %v175
      %908 = vmatprep.subr.mxu0 %v184
      %909 = vmatpush1.msra.mxu0 %v183
      %910 = vmatprep.subr.mxu0 %v192
      %911 = vmatpush1.msra.mxu0 %v191
      %912 = vmatprep.subr.mxu0 %v200
      %913 = vmatpush1.msra.mxu0 %v199
      %914 = vmatprep.subr.mxu0 %v208
      %915 = vmatpush1.msra.mxu0 %v207
      %916 = vmatprep.subr.mxu0 %v216
      %917 = vmatpush1.msra.mxu0 %v215
      %918 = vmatprep.subr.mxu0 %v224
      %919 = vmatpush1.msra.mxu0 %v223
      %920 = vmatprep.subr.mxu0 %v232
      %921 = vmatpush1.msra.mxu0 %v231
      %922 = vmatprep.subr.mxu0 %v240
      %923 = vmatpush1.msra.mxu0 %v239
      %924 = vmatprep.subr.mxu0 %v248
      %925 = vmatpush1.msra.mxu0 %v247
      %926 = vmatprep.subr.mxu0 %v256
      %927 = vmatpush1.msra.mxu0 %v255
      %928 = vmatprep.subr.mxu0 %v264
      %929 = vmatpush1.msra.mxu0 %v263
      %930 = vmatprep.subr.mxu0 %v272
      %931 = vmatpush1.msra.mxu0 %v271
      %932 = vmatprep.subr.mxu0 %v280
      %933 = vmatpush1.msra.mxu0 %v279
      %934 = vmatprep.subr.mxu0 %v288
      %935 = vmatpush1.msra.mxu0 %v287
      %936 = vmatprep.subr.mxu0 %v296
      %937 = vmatpush1.msra.mxu0 %v295
      %938 = vmatprep.subr.mxu0 %v304
      %939 = vmatpush1.msra.mxu0 %v303
      %940 = vmatprep.subr.mxu0 %v312
      %941 = vmatpush1.msra.mxu0 %v311
      %942 = vmatprep.subr.mxu0 %v320
      %943 = vmatpush1.msra.mxu0 %v319
      %944 = vmatprep.subr.mxu0 %v328
      %945 = vmatpush1.msra.mxu0 %v327
      %946 = vmatprep.subr.mxu0 %v336
      %947 = vmatpush1.msra.mxu0 %v335
      %948 = vmatprep.subr.mxu0 %v344
      %949 = vmatpush1.msra.mxu0 %v343
      %950 = vmatprep.subr.mxu0 %v352
      %951 = vmatpush1.msra.mxu0 %v351
      %952 = vmatprep.subr.mxu0 %v360
      %953 = vmatpush1.msra.mxu0 %v359
      %954 = vmatprep.subr.mxu0 %v368
      %955 = vmatpush1.msra.mxu0 %v367
      %956 = vmatprep.subr.mxu0 %v376
      %957 = vmatpush1.msra.mxu0 %v375
      %958 = vmatprep.subr.mxu0 %v384
      %959 = vmatpush1.msra.mxu0 %v383
      %960 = vmatprep.subr.mxu0 %v392
      %961 = vmatpush1.msra.mxu0 %v391
      %962 = vmatprep.subr.mxu0 %v400
      %963 = vmatpush1.msra.mxu0 %v399
      %964 = vmatprep.subr.mxu0 %v408
      %965 = vmatpush1.msra.mxu0 %v407
      %966 = vmatprep.subr.mxu0 %v416
      %967 = vmatpush1.msra.mxu0 %v415
      %968 = vmatprep.subr.mxu0 %v424
      %969 = vmatpush1.msra.mxu0 %v423
      %970 = vmatprep.mubr.f32.mxu0 %v572
      %971 = vmatmul.mubr.f32.gmra.mrb[0].mxu0 %v571
      %v972 = vpop.f32.mrb[0].mxu0
      %v973 = vadd.f32 %v584, %v972
      %v974 = vpop.f32.mrb[0].mxu0
      %v975 = vadd.f32 %v584, %v974
      %976 = vmatprep.mubr.f32.mxu0 %v576
      %977 = vmatmul.mubr.f32.gmra.mrb[0].mxu0 %v575
      %v978 = vpop.f32.mrb[0].mxu0
      %v979 = vadd.f32 %v589, %v978
      %v980 = vpop.f32.mrb[0].mxu0
      %v981 = vadd.f32 %v589, %v980
      %982 = vdwg.mxu0
      %983 = vmatprep.subr.mxu0 %v432
      %984 = vmatpush1.msra.mxu0 %v431
      %985 = vmatprep.subr.mxu0 %v440
      %986 = vmatpush1.msra.mxu0 %v439
      %987 = vmatprep.subr.mxu0 %v448
      %988 = vmatpush1.msra.mxu0 %v447
      %989 = vmatprep.subr.mxu0 %v456
      %990 = vmatpush1.msra.mxu0 %v455
      %991 = vmatprep.subr.mxu0 %v464
      %992 = vmatpush1.msra.mxu0 %v463
      %993 = vmatprep.subr.mxu0 %v472
      %994 = vmatpush1.msra.mxu0 %v471
      %995 = vmatprep.subr.mxu0 %v480
      %996 = vmatpush1.msra.mxu0 %v479
      %997 = vmatprep.subr.mxu0 %v488
      %998 = vmatpush1.msra.mxu0 %v487
      %999 = vmatprep.subr.mxu0 %v496
      %1000 = vmatpush1.msra.mxu0 %v495
      %1001 = vmatprep.subr.mxu0 %v504
      %1002 = vmatpush1.msra.mxu0 %v503
      %1003 = vmatprep.subr.mxu0 %v512
      %1004 = vmatpush1.msra.mxu0 %v511
      %1005 = vmatprep.subr.mxu0 %v520
      %1006 = vmatpush1.msra.mxu0 %v519
      %1007 = vmatprep.subr.mxu0 %v528
      %1008 = vmatpush1.msra.mxu0 %v527
      %1009 = vmatprep.subr.mxu0 %v536
      %1010 = vmatpush1.msra.mxu0 %v535
      %1011 = vmatprep.subr.mxu0 %v544
      %1012 = vmatpush1.msra.mxu0 %v543
      %1013 = vmatprep.subr.mxu0 %v552
      %1014 = vmatpush1.msra.mxu0 %v551
      %1015 = vmatprep.subr.mxu0 %v560
      %1016 = vmatpush1.msra.mxu0 %v559
      %1017 = vmatprep.subr.mxu0 %v568
      %1018 = vmatpush1.msra.mxu0 %v567
      %1019 = vmatprep.subr.mxu0 0.0
      %1020 = vmatpush1.msra.mxu0 0.0
      %1021 = vmatprep.subr.mxu0 0.0
      %1022 = vmatpush1.msra.mxu0 0.0
      %1023 = vmatprep.subr.mxu0 0.0
      %1024 = vmatpush1.msra.mxu0 0.0
      %1025 = vmatprep.subr.mxu0 0.0
      %1026 = vmatpush1.msra.mxu0 0.0
      %1027 = vmatprep.subr.mxu0 0.0
      %1028 = vmatpush1.msra.mxu0 0.0
      %1029 = vmatprep.subr.mxu0 0.0
      %1030 = vmatpush1.msra.mxu0 0.0
      %1031 = vmatprep.subr.mxu0 0.0
      %1032 = vmatpush1.msra.mxu0 0.0
      %1033 = vmatprep.subr.mxu0 0.0
      %1034 = vmatpush1.msra.mxu0 0.0
      %1035 = vmatprep.subr.mxu0 0.0
      %1036 = vmatpush1.msra.mxu0 0.0
      %1037 = vmatprep.subr.mxu0 0.0
      %1038 = vmatpush1.msra.mxu0 0.0
      %1039 = vmatprep.subr.mxu0 0.0
      %1040 = vmatpush1.msra.mxu0 0.0
      %1041 = vmatprep.subr.mxu0 0.0
      %1042 = vmatpush1.msra.mxu0 0.0
      %1043 = vmatprep.subr.mxu0 0.0
      %1044 = vmatpush1.msra.mxu0 0.0
      %1045 = vmatprep.subr.mxu0 0.0
      %1046 = vmatpush1.msra.mxu0 0.0
      %1047 = vmatprep.mubr.f32.mxu0 %v593
      %1048 = vmatmul.mubr.f32.gmra.mrb[0].mxu0 %v573
      %v1049 = vpop.f32.mrb[0].mxu0
      %v1050 = vadd.f32 %v973, %v1049
      %v1051 = vpop.f32.mrb[0].mxu0
      %v1052 = vadd.f32 %v975, %v1051
      %1053 = vmatprep.mubr.f32.mxu0 %v596
      %1054 = vmatmul.mubr.f32.gmra.mrb[0].mxu0 %v577
      %v1055 = vpop.f32.mrb[0].mxu0
      %v1056 = vadd.f32 %v979, %v1055
      %v1057 = vpop.f32.mrb[0].mxu0
      %v1058 = vadd.f32 %v981, %v1057
      %1059 = vdwg.mxu0
      %1060 = vmatprep.subr.mxu0 %v178
      %1061 = vmatpush1.msra.mxu0 %v177
      %1062 = vmatprep.subr.mxu0 %v186
      %1063 = vmatpush1.msra.mxu0 %v185
      %1064 = vmatprep.subr.mxu0 %v194
      %1065 = vmatpush1.msra.mxu0 %v193
      %1066 = vmatprep.subr.mxu0 %v202
      %1067 = vmatpush1.msra.mxu0 %v201
      %1068 = vmatprep.subr.mxu0 %v210
      %1069 = vmatpush1.msra.mxu0 %v209
      %1070 = vmatprep.subr.mxu0 %v218
      %1071 = vmatpush1.msra.mxu0 %v217
      %1072 = vmatprep.subr.mxu0 %v226
      %1073 = vmatpush1.msra.mxu0 %v225
      %1074 = vmatprep.subr.mxu0 %v234
      %1075 = vmatpush1.msra.mxu0 %v233
      %1076 = vmatprep.subr.mxu0 %v242
      %1077 = vmatpush1.msra.mxu0 %v241
      %1078 = vmatprep.subr.mxu0 %v250
      %1079 = vmatpush1.msra.mxu0 %v249
      %1080 = vmatprep.subr.mxu0 %v258
      %1081 = vmatpush1.msra.mxu0 %v257
      %1082 = vmatprep.subr.mxu0 %v266
      %1083 = vmatpush1.msra.mxu0 %v265
      %1084 = vmatprep.subr.mxu0 %v274
      %1085 = vmatpush1.msra.mxu0 %v273
      %1086 = vmatprep.subr.mxu0 %v282
      %1087 = vmatpush1.msra.mxu0 %v281
      %1088 = vmatprep.subr.mxu0 %v290
      %1089 = vmatpush1.msra.mxu0 %v289
      %1090 = vmatprep.subr.mxu0 %v298
      %1091 = vmatpush1.msra.mxu0 %v297
      %1092 = vmatprep.subr.mxu0 %v306
      %1093 = vmatpush1.msra.mxu0 %v305
      %1094 = vmatprep.subr.mxu0 %v314
      %1095 = vmatpush1.msra.mxu0 %v313
      %1096 = vmatprep.subr.mxu0 %v322
      %1097 = vmatpush1.msra.mxu0 %v321
      %1098 = vmatprep.subr.mxu0 %v330
      %1099 = vmatpush1.msra.mxu0 %v329
      %1100 = vmatprep.subr.mxu0 %v338
      %1101 = vmatpush1.msra.mxu0 %v337
      %1102 = vmatprep.subr.mxu0 %v346
      %1103 = vmatpush1.msra.mxu0 %v345
      %1104 = vmatprep.subr.mxu0 %v354
      %1105 = vmatpush1.msra.mxu0 %v353
      %1106 = vmatprep.subr.mxu0 %v362
      %1107 = vmatpush1.msra.mxu0 %v361
      %1108 = vmatprep.subr.mxu0 %v370
      %1109 = vmatpush1.msra.mxu0 %v369
      %1110 = vmatprep.subr.mxu0 %v378
      %1111 = vmatpush1.msra.mxu0 %v377
      %1112 = vmatprep.subr.mxu0 %v386
      %1113 = vmatpush1.msra.mxu0 %v385
      %1114 = vmatprep.subr.mxu0 %v394
      %1115 = vmatpush1.msra.mxu0 %v393
      %1116 = vmatprep.subr.mxu0 %v402
      %1117 = vmatpush1.msra.mxu0 %v401
      %1118 = vmatprep.subr.mxu0 %v410
      %1119 = vmatpush1.msra.mxu0 %v409
      %1120 = vmatprep.subr.mxu0 %v418
      %1121 = vmatpush1.msra.mxu0 %v417
      %1122 = vmatprep.subr.mxu0 %v426
      %1123 = vmatpush1.msra.mxu0 %v425
      %1124 = vmatprep.mubr.f32.mxu0 %v572
      %1125 = vmatmul.mubr.f32.gmra.mrb[0].mxu0 %v571
      %v1126 = vpop.f32.mrb[0].mxu0
      %v1127 = vadd.f32 %v584, %v1126
      %v1128 = vpop.f32.mrb[0].mxu0
      %v1129 = vadd.f32 %v584, %v1128
      %1130 = vmatprep.mubr.f32.mxu0 %v576
      %1131 = vmatmul.mubr.f32.gmra.mrb[0].mxu0 %v575
      %v1132 = vpop.f32.mrb[0].mxu0
      %v1133 = vadd.f32 %v589, %v1132
      %v1134 = vpop.f32.mrb[0].mxu0
      %v1135 = vadd.f32 %v589, %v1134
      %1136 = vdwg.mxu0
      %1137 = vmatprep.subr.mxu0 %v434
      %1138 = vmatpush1.msra.mxu0 %v433
      %1139 = vmatprep.subr.mxu0 %v442
      %1140 = vmatpush1.msra.mxu0 %v441
      %1141 = vmatprep.subr.mxu0 %v450
      %1142 = vmatpush1.msra.mxu0 %v449
      %1143 = vmatprep.subr.mxu0 %v458
      %1144 = vmatpush1.msra.mxu0 %v457
      %1145 = vmatprep.subr.mxu0 %v466
      %1146 = vmatpush1.msra.mxu0 %v465
      %1147 = vmatprep.subr.mxu0 %v474
      %1148 = vmatpush1.msra.mxu0 %v473
      %1149 = vmatprep.subr.mxu0 %v482
      %1150 = vmatpush1.msra.mxu0 %v481
      %1151 = vmatprep.subr.mxu0 %v490
      %1152 = vmatpush1.msra.mxu0 %v489
      %1153 = vmatprep.subr.mxu0 %v498
      %1154 = vmatpush1.msra.mxu0 %v497
      %1155 = vmatprep.subr.mxu0 %v506
      %1156 = vmatpush1.msra.mxu0 %v505
      %1157 = vmatprep.subr.mxu0 %v514
      %1158 = vmatpush1.msra.mxu0 %v513
      %1159 = vmatprep.subr.mxu0 %v522
      %1160 = vmatpush1.msra.mxu0 %v521
      %1161 = vmatprep.subr.mxu0 %v530
      %1162 = vmatpush1.msra.mxu0 %v529
      %1163 = vmatprep.subr.mxu0 %v538
      %1164 = vmatpush1.msra.mxu0 %v537
      %1165 = vmatprep.subr.mxu0 %v546
      %1166 = vmatpush1.msra.mxu0 %v545
      %1167 = vmatprep.subr.mxu0 %v554
      %1168 = vmatpush1.msra.mxu0 %v553
      %1169 = vmatprep.subr.mxu0 %v562
      %1170 = vmatpush1.msra.mxu0 %v561
      %1171 = vmatprep.subr.mxu0 %v570
      %1172 = vmatpush1.msra.mxu0 %v569
      %1173 = vmatprep.subr.mxu0 0.0
      %1174 = vmatpush1.msra.mxu0 0.0
      %1175 = vmatprep.subr.mxu0 0.0
      %1176 = vmatpush1.msra.mxu0 0.0
      %1177 = vmatprep.subr.mxu0 0.0
      %1178 = vmatpush1.msra.mxu0 0.0
      %1179 = vmatprep.subr.mxu0 0.0
      %1180 = vmatpush1.msra.mxu0 0.0
      %1181 = vmatprep.subr.mxu0 0.0
      %1182 = vmatpush1.msra.mxu0 0.0
      %1183 = vmatprep.subr.mxu0 0.0
      %1184 = vmatpush1.msra.mxu0 0.0
      %1185 = vmatprep.subr.mxu0 0.0
      %1186 = vmatpush1.msra.mxu0 0.0
      %1187 = vmatprep.subr.mxu0 0.0
      %1188 = vmatpush1.msra.mxu0 0.0
      %1189 = vmatprep.subr.mxu0 0.0
      %1190 = vmatpush1.msra.mxu0 0.0
      %1191 = vmatprep.subr.mxu0 0.0
      %1192 = vmatpush1.msra.mxu0 0.0
      %1193 = vmatprep.subr.mxu0 0.0
      %1194 = vmatpush1.msra.mxu0 0.0
      %1195 = vmatprep.subr.mxu0 0.0
      %1196 = vmatpush1.msra.mxu0 0.0
      %1197 = vmatprep.subr.mxu0 0.0
      %1198 = vmatpush1.msra.mxu0 0.0
      %1199 = vmatprep.subr.mxu0 0.0
      %1200 = vmatpush1.msra.mxu0 0.0
      %1201 = vmatprep.mubr.f32.mxu0 %v593
      %1202 = vmatmul.mubr.f32.gmra.mrb[0].mxu0 %v573
      %v1203 = vpop.f32.mrb[0].mxu0
      %v1204 = vadd.f32 %v1127, %v1203
      %v1205 = vpop.f32.mrb[0].mxu0
      %v1206 = vadd.f32 %v1129, %v1205
      %1207 = vmatprep.mubr.f32.mxu0 %v596
      %1208 = vmatmul.mubr.f32.gmra.mrb[0].mxu0 %v577
      %v1209 = vpop.f32.mrb[0].mxu0
      %v1210 = vadd.f32 %v1133, %v1209
      %v1211 = vpop.f32.mrb[0].mxu0
      %v1212 = vadd.f32 %v1135, %v1211
      %1213 = vdwg.mxu0
      %v1214 = vmax.f32 %v742, 0.0
      %v1215 = vmax.f32 %v744, 0.0
      %v1216 = vmax.f32 %v896, 0.0
      %v1217 = vmax.f32 %v898, 0.0
      %v1218 = vmax.f32 %v1050, 0.0
      %v1219 = vmax.f32 %v1052, 0.0
      %v1220 = vmax.f32 %v1204, 0.0
      %v1221 = vmax.f32 %v1206, 0.0
      %v1222 = vmax.f32 %v748, 0.0
      %v1223 = vmax.f32 %v750, 0.0
      %v1224 = vmax.f32 %v902, 0.0
      %v1225 = vmax.f32 %v904, 0.0
      %v1226 = vmax.f32 %v1056, 0.0
      %v1227 = vmax.f32 %v1058, 0.0
      %v1228 = vmax.f32 %v1210, 0.0
      %v1229 = vmax.f32 %v1212, 0.0
      %v1230 = vmax.f32 %v1214, %v1216
      %v1231 = vmax.f32 %v1215, %v1217
      %v1232 = vmax.f32 %v1222, %v1224
      %v1233 = vmax.f32 %v1223, %v1225
      %v1234 = vmax.f32 %v1218, %v1220
      %v1235 = vmax.f32 %v1219, %v1221
      %v1236 = vmax.f32 %v1226, %v1228
      %v1237 = vmax.f32 %v1227, %v1229
      %v1238 = vmax.f32 %v1230, %v1234
      %v1239 = vmax.f32 %v1231, %v1235
      %v1240 = vmax.f32 %v1232, %v1236
      %v1241 = vmax.f32 %v1233, %v1237
      %1242 = vst [vmem:[%s170] sm:$0xff] %v1238
      %1243 = vst [vmem:[%s170 + $0x8] sm:$0xff] %v1239
      %1244 = vst [vmem:[%s170 + $0x10] sm:$0xff] %v1240
      %1245 = vst [vmem:[%s170 + $0x18] sm:$0xff] %v1241
      %p1246 = scmp.lt.s32.totalorder %s14, 1
      %s1247 = scalar_select %p1246, %s14, 1
      %s1248 = smul.addr %s1247, 4
      %s1249 = smul.addr %s1248, 8
      %s1250 = scalar_lea.vmem %s3, %s1249
      // Predicated region
      $region33: #{ggcnn4_forward.9} parent=31 // pred_check
        %p1251 = pneg %p100
      $region34: #{ggcnn4_forward.9} parent=31 // pred_check_branch
        %1253 = sbr.rel (%p1251) target = $region36
      $region35: #{ggcnn4_forward.9} parent=31 // pred_region
        _
      $region36: #{ggcnn4_forward.9} parent=31 // pred_fallthru
        _
    $region32: #{ggcnn4_forward.9} parent=5 // pred_fallthru
      _
    %p1254 = scmp.le.s32.totalorder 2, %s9
    // Predicated region
    $region37: #{ggcnn4_forward.9} parent=5 // pred_check
      %p1255 = pneg %p1254
    $region38: #{ggcnn4_forward.9} parent=5 // pred_check_branch
      %1257 = sbr.rel (%p1255) target = $region40
    $region39: #{ggcnn4_forward.9} parent=5 // pred_region
      %s1258 = ssub.s32 %s9, 2
      // Predicated region
      $region41: #{ggcnn4_forward.9} parent=39 // pred_check
        %p1259 = pneg %p106
      $region42: #{ggcnn4_forward.9} parent=39 // pred_check_branch
        %1261 = sbr.rel (%p1259) target = $region44
      $region43: #{ggcnn4_forward.9} parent=39 // pred_region
        %p1262 = scmp.lt.s32.totalorder %s15, 1
        %s1263 = scalar_select %p1262, %s15, 1
        %s1264 = smul.addr %s1263, 4
        %s1265 = smul.addr %s1264, 8
        %s1266 = scalar_lea.vmem %s3, %s1265
      $region44: #{ggcnn4_forward.9} parent=39 // pred_fallthru
        _
    $region40: #{ggcnn4_forward.9} parent=5 // pred_fallthru
      _
  $region6: #{ggcnn4_forward.9} parent=0 // loop_footer
    %s13 = sadd.s32 1, %s9
  $region7: #{ggcnn4_forward.9} parent=0 // loop_footer_branch
    %8 = sbr.rel target = $region3
  $region8: #{ggcnn4_forward.9} parent=0 // loop_exit
    _

// kernel: ggcnn4_forward.10
$region0: #{ggcnn4_forward.10}
  #allocation0 [shape = 'u32[]', space=smem, size = 0x4, offset = 0x4, fixed_abs, tag = 'smem constant byte address 0x4 - core index']
  #allocation1 [shape = 'u32[144,128]{1,0:T(1,128)}', space=vmem, size = 0x12000, scoped, tag = 'internal scratch']
  %s0 = inlined_call_operand.vmem [shape: f32[2,400,256], index: 0, kind: input, shape index: {}]
  %s1 = inlined_call_operand.vmem [shape: f32[16,400], index: 1, kind: input, shape index: {}]
  %s2 = inlined_call_operand.vmem [shape: f32[16,1], index: 2, kind: input, shape index: {}]
  %s3 = inlined_call_operand.vmem [shape: f32[2,16,256], index: 3, kind: output, shape index: {}]
  %s4 = sld [smem:[#allocation0]]
  $region45: #{ggcnn4_forward.10} parent=0
    _
  %s6 = ssub.s32 1, %s4
  %s7 = scalar_select 0, %s6, %s4
  loop: start=0, step=1, limit=4
  $region2: #{ggcnn4_forward.10} parent=0 // loop_pre_header
    _
  $region3: #{ggcnn4_forward.10} parent=0 // loop_header
    %s9 = sphi 0, %s13
    %p10 = scmp.ge.s32.totalorder %s9, 4
    %s19 = sphi 0, %s21
    %s22 = sphi 0, %s19
    %s23 = sphi 0, %s22
    %s39 = sphi 0, %s23
    %s43 = sphi 0, %s43
    %s45 = sphi 0, %s43
    %s46 = sphi 0, %s45
    %s60 = sphi 0, %s46
    %s64 = sphi 0, %s64
    %s66 = sphi 0, %s64
    %s67 = sphi 0, %s66
    %s81 = sphi 0, %s67
    %s87 = sphi 0, %s89
    %s90 = sphi 0, %s87
    %s91 = sphi 0, %s90
    %s107 = sphi 0, %s91
  $region4: #{ggcnn4_forward.10} parent=0 // loop_header_branch
    %12 = sbr.rel (%p10) target = $region8
  $region5: #{ggcnn4_forward.10} parent=0 // loop_body
    %s14 = ssub.s32 %s9, 1
    %s15 = ssub.s32 %s9, 2
    %s16 = sadd.s32 %s9, 1
    %s17 = ssub.s32 %s9, %s16
    %p18 = scmp.eq.s32.totalorder %s17, 0
    %s20 = sadd.s32 %s19, 1
    %s21 = scalar_select %p18, %s19, %s20
    %p24 = pneg %p18
    %p25 = scmp.eq.s32.totalorder %s9, 1
    %p26 = por %p24, %p25
    %p27 = scmp.ne.s32.totalorder %s19, %s22
    %p28 = scmp.eq.s32.totalorder %s9, 0
    %p29 = por %p27, %p28
    %p30 = scmp.ne.s32.totalorder %s19, %s22
    %p31 = scmp.eq.s32.totalorder %s14, 1
    %p32 = por %p30, %p31
    %p33 = scmp.ne.s32.totalorder %s22, %s23
    %p34 = scmp.eq.s32.totalorder %s14, 0
    %p35 = por %p33, %p34
    %p36 = scmp.ne.s32.totalorder %s22, %s23
    %p37 = scmp.eq.s32.totalorder %s15, 1
    %p38 = por %p36, %p37
    %p40 = scmp.ne.s32.totalorder %s23, %s39
    %p41 = scmp.eq.s32.totalorder %s15, 0
    %p42 = por %p40, %p41
    %s44 = sadd.s32 %s43, 1
    %p47 = scmp.eq.s32.totalorder %s9, 1
    %p48 = scmp.ne.s32.totalorder %s43, %s45
    %p49 = scmp.eq.s32.totalorder %s9, 0
    %p50 = por %p48, %p49
    %p51 = scmp.ne.s32.totalorder %s43, %s45
    %p52 = scmp.eq.s32.totalorder %s14, 1
    %p53 = por %p51, %p52
    %p54 = scmp.ne.s32.totalorder %s45, %s46
    %p55 = scmp.eq.s32.totalorder %s14, 0
    %p56 = por %p54, %p55
    %p57 = scmp.ne.s32.totalorder %s45, %s46
    %p58 = scmp.eq.s32.totalorder %s15, 1
    %p59 = por %p57, %p58
    %p61 = scmp.ne.s32.totalorder %s46, %s60
    %p62 = scmp.eq.s32.totalorder %s15, 0
    %p63 = por %p61, %p62
    %s65 = sadd.s32 %s64, 1
    %p68 = scmp.eq.s32.totalorder %s9, 1
    %p69 = scmp.ne.s32.totalorder %s64, %s66
    %p70 = scmp.eq.s32.totalorder %s9, 0
    %p71 = por %p69, %p70
    %p72 = scmp.ne.s32.totalorder %s64, %s66
    %p73 = scmp.eq.s32.totalorder %s14, 1
    %p74 = por %p72, %p73
    %p75 = scmp.ne.s32.totalorder %s66, %s67
    %p76 = scmp.eq.s32.totalorder %s14, 0
    %p77 = por %p75, %p76
    %p78 = scmp.ne.s32.totalorder %s66, %s67
    %p79 = scmp.eq.s32.totalorder %s15, 1
    %p80 = por %p78, %p79
    %p82 = scmp.ne.s32.totalorder %s67, %s81
    %p83 = scmp.eq.s32.totalorder %s15, 0
    %p84 = por %p82, %p83
    %s85 = ssub.s32 %s9, %s16
    %p86 = scmp.eq.s32.totalorder %s85, 0
    %s88 = sadd.s32 %s87, 1
    %s89 = scalar_select %p86, %s87, %s88
    %p92 = pneg %p86
    %p93 = scmp.eq.s32.totalorder %s9, 1
    %p94 = por %p92, %p93
    %p95 = scmp.ne.s32.totalorder %s87, %s90
    %p96 = scmp.eq.s32.totalorder %s9, 0
    %p97 = por %p95, %p96
    %p98 = scmp.ne.s32.totalorder %s87, %s90
    %p99 = scmp.eq.s32.totalorder %s14, 1
    %p100 = por %p98, %p99
    %p101 = scmp.ne.s32.totalorder %s90, %s91
    %p102 = scmp.eq.s32.totalorder %s14, 0
    %p103 = por %p101, %p102
    %p104 = scmp.ne.s32.totalorder %s90, %s91
    %p105 = scmp.eq.s32.totalorder %s15, 1
    %p106 = por %p104, %p105
    %p108 = scmp.ne.s32.totalorder %s91, %s107
    %p109 = scmp.eq.s32.totalorder %s15, 0
    %p110 = por %p108, %p109
    %p111 = scmp.le.s32.totalorder 1, %s9
    %p112 = scmp.lt.s32.totalorder %s9, 3
    %p113 = pnand %p111, %p112
    %p114 = pneg %p113
    // Predicated region
    $region9: #{ggcnn4_forward.10} parent=5 // pred_check
      _
    $region10: #{ggcnn4_forward.10} parent=5 // pred_check_branch
      %116 = sbr.rel (%p113) target = $region12
    $region11: #{ggcnn4_forward.10} parent=5 // pred_region
      %s117 = ssub.s32 %s9, 1
      // Predicated region
      $region13: #{ggcnn4_forward.10} parent=11 // pred_check
        %p118 = pneg %p56
      $region14: #{ggcnn4_forward.10} parent=11 // pred_check_branch
        %120 = sbr.rel (%p118) target = $region16
      $region15: #{ggcnn4_forward.10} parent=11 // pred_region
        _
      $region16: #{ggcnn4_forward.10} parent=11 // pred_fallthru
        _
      // Predicated region
      $region17: #{ggcnn4_forward.10} parent=11 // pred_check
        %p121 = pneg %p77
      $region18: #{ggcnn4_forward.10} parent=11 // pred_check_branch
        %123 = sbr.rel (%p121) target = $region20
      $region19: #{ggcnn4_forward.10} parent=11 // pred_region
        _
      $region20: #{ggcnn4_forward.10} parent=11 // pred_fallthru
        _
    $region12: #{ggcnn4_forward.10} parent=5 // pred_fallthru
      _
    %p124 = scmp.lt.s32.totalorder %s9, 2
    // Predicated region
    $region21: #{ggcnn4_forward.10} parent=5 // pred_check
      %p125 = pneg %p124
    $region22: #{ggcnn4_forward.10} parent=5 // pred_check_branch
      %127 = sbr.rel (%p125) target = $region24
    $region23: #{ggcnn4_forward.10} parent=5 // pred_region
      // Predicated region
      $region25: #{ggcnn4_forward.10} parent=23 // pred_check
        %p128 = pneg %p29
      $region26: #{ggcnn4_forward.10} parent=23 // pred_check_branch
        %130 = sbr.rel (%p128) target = $region28
      $region27: #{ggcnn4_forward.10} parent=23 // pred_region
        %p131 = scmp.lt.s32.totalorder %s9, 1
        %s132 = scalar_select %p131, %s9, 1
        %s133 = smul.addr %s132, 100
        %s134 = smul.addr %s133, 8
        %s135 = scalar_lea.vmem %s0, %s134
      $region28: #{ggcnn4_forward.10} parent=23 // pred_fallthru
        _
    $region24: #{ggcnn4_forward.10} parent=5 // pred_fallthru
      _
    %p136 = scmp.le.s32.totalorder 1, %s9
    %p137 = scmp.lt.s32.totalorder %s9, 3
    %p138 = pnand %p136, %p137
    %p139 = pneg %p138
    // Predicated region
    $region29: #{ggcnn4_forward.10} parent=5 // pred_check
      _
    $region30: #{ggcnn4_forward.10} parent=5 // pred_check_branch
      %141 = sbr.rel (%p138) target = $region32
    $region31: #{ggcnn4_forward.10} parent=5 // pred_region
      %s142 = ssub.s32 %s9, 1
      %p143 = scmp.lt.s32.totalorder %s14, 1
      %s144 = scalar_select %p143, %s14, 1
      %s145 = smul.addr %s144, 100
      %s146 = smul.addr %s145, 8
      %s147 = scalar_lea.vmem %s0, %s146
      %p148 = pneg %p35
      %p149 = pneg %p32
      %p150 = pneg %p56
      %p151 = pneg %p53
      %p152 = pneg %p77
      %p153 = pneg %p74
      %p154 = pneg %p103
      %p155 = pneg %p100
      %p156 = scmp.lt.s32.totalorder %s14, 1
      %s157 = scalar_select %p156, %s14, 1
      %s158 = smul.addr %s157, 4
      %s159 = smul.addr %s158, 8
      %s160 = scalar_lea.vmem %s3, %s159
      %p161 = scmp.lt.s32.totalorder %s14, 1
      %s162 = scalar_select %p161, %s14, 1
      %s163 = smul.addr %s162, 100
      %s164 = smul.addr %s163, 8
      %s165 = scalar_lea.vmem %s0, %s164
      %p166 = scmp.lt.s32.totalorder %s14, 1
      %s167 = scalar_select %p166, %s14, 1
      %s168 = smul.addr %s167, 4
      %s169 = smul.addr %s168, 8
      %s170 = scalar_lea.vmem %s3, %s169
      %v171 = vld [vmem:[%s165] sm:$0xff]
      %v172 = vld [vmem:[%s165 + $0x8] sm:$0xff]
      %v173 = vld [vmem:[%s165 + $0x10] sm:$0xff]
      %v174 = vld [vmem:[%s165 + $0x18] sm:$0xff]
      %v175 = vld [vmem:[%s165 + $0x20] sm:$0xff]
      %v176 = vld [vmem:[%s165 + $0x28] sm:$0xff]
      %v177 = vld [vmem:[%s165 + $0x30] sm:$0xff]
      %v178 = vld [vmem:[%s165 + $0x38] sm:$0xff]
      %v179 = vld [vmem:[%s165 + $0x40] sm:$0xff]
      %v180 = vld [vmem:[%s165 + $0x48] sm:$0xff]
      %v181 = vld [vmem:[%s165 + $0x50] sm:$0xff]
      %v182 = vld [vmem:[%s165 + $0x58] sm:$0xff]
      %v183 = vld [vmem:[%s165 + $0x60] sm:$0xff]
      %v184 = vld [vmem:[%s165 + $0x68] sm:$0xff]
      %v185 = vld [vmem:[%s165 + $0x70] sm:$0xff]
      %v186 = vld [vmem:[%s165 + $0x78] sm:$0xff]
      %v187 = vld [vmem:[%s165 + $0x80] sm:$0xff]
      %v188 = vld [vmem:[%s165 + $0x88] sm:$0xff]
      %v189 = vld [vmem:[%s165 + $0x90] sm:$0xff]
      %v190 = vld [vmem:[%s165 + $0x98] sm:$0xff]
      %v191 = vld [vmem:[%s165 + $0xa0] sm:$0xff]
      %v192 = vld [vmem:[%s165 + $0xa8] sm:$0xff]
      %v193 = vld [vmem:[%s165 + $0xb0] sm:$0xff]
      %v194 = vld [vmem:[%s165 + $0xb8] sm:$0xff]
      %v195 = vld [vmem:[%s165 + $0xc0] sm:$0xff]
      %v196 = vld [vmem:[%s165 + $0xc8] sm:$0xff]
      %v197 = vld [vmem:[%s165 + $0xd0] sm:$0xff]
      %v198 = vld [vmem:[%s165 + $0xd8] sm:$0xff]
      %v199 = vld [vmem:[%s165 + $0xe0] sm:$0xff]
      %v200 = vld [vmem:[%s165 + $0xe8] sm:$0xff]
      %v201 = vld [vmem:[%s165 + $0xf0] sm:$0xff]
      %v202 = vld [vmem:[%s165 + $0xf8] sm:$0xff]
      %v203 = vld [vmem:[%s165 + $0x100] sm:$0xff]
      %v204 = vld [vmem:[%s165 + $0x108] sm:$0xff]
      %v205 = vld [vmem:[%s165 + $0x110] sm:$0xff]
      %v206 = vld [vmem:[%s165 + $0x118] sm:$0xff]
      %v207 = vld [vmem:[%s165 + $0x120] sm:$0xff]
      %v208 = vld [vmem:[%s165 + $0x128] sm:$0xff]
      %v209 = vld [vmem:[%s165 + $0x130] sm:$0xff]
      %v210 = vld [vmem:[%s165 + $0x138] sm:$0xff]
      %v211 = vld [vmem:[%s165 + $0x140] sm:$0xff]
      %v212 = vld [vmem:[%s165 + $0x148] sm:$0xff]
      %v213 = vld [vmem:[%s165 + $0x150] sm:$0xff]
      %v214 = vld [vmem:[%s165 + $0x158] sm:$0xff]
      %v215 = vld [vmem:[%s165 + $0x160] sm:$0xff]
      %v216 = vld [vmem:[%s165 + $0x168] sm:$0xff]
      %v217 = vld [vmem:[%s165 + $0x170] sm:$0xff]
      %v218 = vld [vmem:[%s165 + $0x178] sm:$0xff]
      %v219 = vld [vmem:[%s165 + $0x180] sm:$0xff]
      %v220 = vld [vmem:[%s165 + $0x188] sm:$0xff]
      %v221 = vld [vmem:[%s165 + $0x190] sm:$0xff]
      %v222 = vld [vmem:[%s165 + $0x198] sm:$0xff]
      %v223 = vld [vmem:[%s165 + $0x1a0] sm:$0xff]
      %v224 = vld [vmem:[%s165 + $0x1a8] sm:$0xff]
      %v225 = vld [vmem:[%s165 + $0x1b0] sm:$0xff]
      %v226 = vld [vmem:[%s165 + $0x1b8] sm:$0xff]
      %v227 = vld [vmem:[%s165 + $0x1c0] sm:$0xff]
      %v228 = vld [vmem:[%s165 + $0x1c8] sm:$0xff]
      %v229 = vld [vmem:[%s165 + $0x1d0] sm:$0xff]
      %v230 = vld [vmem:[%s165 + $0x1d8] sm:$0xff]
      %v231 = vld [vmem:[%s165 + $0x1e0] sm:$0xff]
      %v232 = vld [vmem:[%s165 + $0x1e8] sm:$0xff]
      %v233 = vld [vmem:[%s165 + $0x1f0] sm:$0xff]
      %v234 = vld [vmem:[%s165 + $0x1f8] sm:$0xff]
      %v235 = vld [vmem:[%s165 + $0x200] sm:$0xff]
      %v236 = vld [vmem:[%s165 + $0x208] sm:$0xff]
      %v237 = vld [vmem:[%s165 + $0x210] sm:$0xff]
      %v238 = vld [vmem:[%s165 + $0x218] sm:$0xff]
      %v239 = vld [vmem:[%s165 + $0x220] sm:$0xff]
      %v240 = vld [vmem:[%s165 + $0x228] sm:$0xff]
      %v241 = vld [vmem:[%s165 + $0x230] sm:$0xff]
      %v242 = vld [vmem:[%s165 + $0x238] sm:$0xff]
      %v243 = vld [vmem:[%s165 + $0x240] sm:$0xff]
      %v244 = vld [vmem:[%s165 + $0x248] sm:$0xff]
      %v245 = vld [vmem:[%s165 + $0x250] sm:$0xff]
      %v246 = vld [vmem:[%s165 + $0x258] sm:$0xff]
      %v247 = vld [vmem:[%s165 + $0x260] sm:$0xff]
      %v248 = vld [vmem:[%s165 + $0x268] sm:$0xff]
      %v249 = vld [vmem:[%s165 + $0x270] sm:$0xff]
      %v250 = vld [vmem:[%s165 + $0x278] sm:$0xff]
      %v251 = vld [vmem:[%s165 + $0x280] sm:$0xff]
      %v252 = vld [vmem:[%s165 + $0x288] sm:$0xff]
      %v253 = vld [vmem:[%s165 + $0x290] sm:$0xff]
      %v254 = vld [vmem:[%s165 + $0x298] sm:$0xff]
      %v255 = vld [vmem:[%s165 + $0x2a0] sm:$0xff]
      %v256 = vld [vmem:[%s165 + $0x2a8] sm:$0xff]
      %v257 = vld [vmem:[%s165 + $0x2b0] sm:$0xff]
      %v258 = vld [vmem:[%s165 + $0x2b8] sm:$0xff]
      %v259 = vld [vmem:[%s165 + $0x2c0] sm:$0xff]
      %v260 = vld [vmem:[%s165 + $0x2c8] sm:$0xff]
      %v261 = vld [vmem:[%s165 + $0x2d0] sm:$0xff]
      %v262 = vld [vmem:[%s165 + $0x2d8] sm:$0xff]
      %v263 = vld [vmem:[%s165 + $0x2e0] sm:$0xff]
      %v264 = vld [vmem:[%s165 + $0x2e8] sm:$0xff]
      %v265 = vld [vmem:[%s165 + $0x2f0] sm:$0xff]
      %v266 = vld [vmem:[%s165 + $0x2f8] sm:$0xff]
      %v267 = vld [vmem:[%s165 + $0x300] sm:$0xff]
      %v268 = vld [vmem:[%s165 + $0x308] sm:$0xff]
      %v269 = vld [vmem:[%s165 + $0x310] sm:$0xff]
      %v270 = vld [vmem:[%s165 + $0x318] sm:$0xff]
      %v271 = vld [vmem:[%s1] sm:$0xff]
      %v272 = vld [vmem:[%s1 + $0x8] sm:$0xff]
      %v273 = vld [vmem:[%s1 + $0x10] sm:$0xff]
      %v274 = vld [vmem:[%s1 + $0x18] sm:$0xff]
      %v275 = vld [vmem:[%s1 + $0x20] sm:$0xff]
      %v276 = vld [vmem:[%s1 + $0x28] sm:$0xff]
      %v277 = vld [vmem:[%s1 + $0x30] sm:$0xff]
      %v278 = vld [vmem:[%s1 + $0x38] sm:$0xff]
      %v279 = vld [vmem:[%s2] sm:$0xff]
      %v280 = vld [vmem:[%s2 + $0x8] sm:$0xff]
      %282 = vset.pattern.permute.xlu0 0
      %283 = vperm.xlu0 %282, %v279
      %v284 = vpop.permute.xlu0 %283
      %287 = vset.pattern.permute.xlu0 0
      %288 = vperm.xlu0 %287, %v280
      %v289 = vpop.permute.xlu0 %288
      %vm291 = vcmask 130048
      %v293 = vsel %vm291, %v274, 0
      %v296 = vsel %vm291, %v278, 0
      %298 = vmatprep.subr.mxu0 %v172
      %299 = vmatpush1.msra.mxu0 %v171
      %300 = vmatprep.subr.mxu0 %v174
      %301 = vmatpush1.msra.mxu0 %v173
      %302 = vmatprep.subr.mxu0 %v176
      %303 = vmatpush1.msra.mxu0 %v175
      %304 = vmatprep.subr.mxu0 %v178
      %305 = vmatpush1.msra.mxu0 %v177
      %306 = vmatprep.subr.mxu0 %v180
      %307 = vmatpush1.msra.mxu0 %v179
      %308 = vmatprep.subr.mxu0 %v182
      %309 = vmatpush1.msra.mxu0 %v181
      %310 = vmatprep.subr.mxu0 %v184
      %311 = vmatpush1.msra.mxu0 %v183
      %312 = vmatprep.subr.mxu0 %v186
      %313 = vmatpush1.msra.mxu0 %v185
      %314 = vmatprep.subr.mxu0 %v188
      %315 = vmatpush1.msra.mxu0 %v187
      %316 = vmatprep.subr.mxu0 %v190
      %317 = vmatpush1.msra.mxu0 %v189
      %318 = vmatprep.subr.mxu0 %v192
      %319 = vmatpush1.msra.mxu0 %v191
      %320 = vmatprep.subr.mxu0 %v194
      %321 = vmatpush1.msra.mxu0 %v193
      %322 = vmatprep.subr.mxu0 %v196
      %323 = vmatpush1.msra.mxu0 %v195
      %324 = vmatprep.subr.mxu0 %v198
      %325 = vmatpush1.msra.mxu0 %v197
      %326 = vmatprep.subr.mxu0 %v200
      %327 = vmatpush1.msra.mxu0 %v199
      %328 = vmatprep.subr.mxu0 %v202
      %329 = vmatpush1.msra.mxu0 %v201
      %330 = vmatprep.subr.mxu0 %v204
      %331 = vmatpush1.msra.mxu0 %v203
      %332 = vmatprep.subr.mxu0 %v206
      %333 = vmatpush1.msra.mxu0 %v205
      %334 = vmatprep.subr.mxu0 %v208
      %335 = vmatpush1.msra.mxu0 %v207
      %336 = vmatprep.subr.mxu0 %v210
      %337 = vmatpush1.msra.mxu0 %v209
      %338 = vmatprep.subr.mxu0 %v212
      %339 = vmatpush1.msra.mxu0 %v211
      %340 = vmatprep.subr.mxu0 %v214
      %341 = vmatpush1.msra.mxu0 %v213
      %342 = vmatprep.subr.mxu0 %v216
      %343 = vmatpush1.msra.mxu0 %v215
      %344 = vmatprep.subr.mxu0 %v218
      %345 = vmatpush1.msra.mxu0 %v217
      %346 = vmatprep.subr.mxu0 %v220
      %347 = vmatpush1.msra.mxu0 %v219
      %348 = vmatprep.subr.mxu0 %v222
      %349 = vmatpush1.msra.mxu0 %v221
      %350 = vmatprep.subr.mxu0 %v224
      %351 = vmatpush1.msra.mxu0 %v223
      %352 = vmatprep.subr.mxu0 %v226
      %353 = vmatpush1.msra.mxu0 %v225
      %354 = vmatprep.subr.mxu0 %v228
      %355 = vmatpush1.msra.mxu0 %v227
      %356 = vmatprep.subr.mxu0 %v230
      %357 = vmatpush1.msra.mxu0 %v229
      %358 = vmatprep.subr.mxu0 %v232
      %359 = vmatpush1.msra.mxu0 %v231
      %360 = vmatprep.subr.mxu0 %v234
      %361 = vmatpush1.msra.mxu0 %v233
      %362 = vmatprep.mubr.f32.mxu0 %v272
      %363 = vmatmul.mubr.f32.gmra.mrb[0].mxu0 %v271
      %v364 = vpop.f32.mrb[0].mxu0
      %v365 = vadd.f32 %v284, %v364
      %v366 = vpop.f32.mrb[0].mxu0
      %v367 = vadd.f32 %v284, %v366
      %368 = vmatprep.mubr.f32.mxu0 %v276
      %369 = vmatmul.mubr.f32.gmra.mrb[0].mxu0 %v275
      %v370 = vpop.f32.mrb[0].mxu0
      %v371 = vadd.f32 %v289, %v370
      %v372 = vpop.f32.mrb[0].mxu0
      %v373 = vadd.f32 %v289, %v372
      %374 = vdwg.mxu0
      %375 = vmatprep.subr.mxu0 %v236
      %376 = vmatpush1.msra.mxu0 %v235
      %377 = vmatprep.subr.mxu0 %v238
      %378 = vmatpush1.msra.mxu0 %v237
      %379 = vmatprep.subr.mxu0 %v240
      %380 = vmatpush1.msra.mxu0 %v239
      %381 = vmatprep.subr.mxu0 %v242
      %382 = vmatpush1.msra.mxu0 %v241
      %383 = vmatprep.subr.mxu0 %v244
      %384 = vmatpush1.msra.mxu0 %v243
      %385 = vmatprep.subr.mxu0 %v246
      %386 = vmatpush1.msra.mxu0 %v245
      %387 = vmatprep.subr.mxu0 %v248
      %388 = vmatpush1.msra.mxu0 %v247
      %389 = vmatprep.subr.mxu0 %v250
      %390 = vmatpush1.msra.mxu0 %v249
      %391 = vmatprep.subr.mxu0 %v252
      %392 = vmatpush1.msra.mxu0 %v251
      %393 = vmatprep.subr.mxu0 %v254
      %394 = vmatpush1.msra.mxu0 %v253
      %395 = vmatprep.subr.mxu0 %v256
      %396 = vmatpush1.msra.mxu0 %v255
      %397 = vmatprep.subr.mxu0 %v258
      %398 = vmatpush1.msra.mxu0 %v257
      %399 = vmatprep.subr.mxu0 %v260
      %400 = vmatpush1.msra.mxu0 %v259
      %401 = vmatprep.subr.mxu0 %v262
      %402 = vmatpush1.msra.mxu0 %v261
      %403 = vmatprep.subr.mxu0 %v264
      %404 = vmatpush1.msra.mxu0 %v263
      %405 = vmatprep.subr.mxu0 %v266
      %406 = vmatpush1.msra.mxu0 %v265
      %407 = vmatprep.subr.mxu0 %v268
      %408 = vmatpush1.msra.mxu0 %v267
      %409 = vmatprep.subr.mxu0 %v270
      %410 = vmatpush1.msra.mxu0 %v269
      %411 = vmatprep.subr.mxu0 0.0
      %412 = vmatpush1.msra.mxu0 0.0
      %413 = vmatprep.subr.mxu0 0.0
      %414 = vmatpush1.msra.mxu0 0.0
      %415 = vmatprep.subr.mxu0 0.0
      %416 = vmatpush1.msra.mxu0 0.0
      %417 = vmatprep.subr.mxu0 0.0
      %418 = vmatpush1.msra.mxu0 0.0
      %419 = vmatprep.subr.mxu0 0.0
      %420 = vmatpush1.msra.mxu0 0.0
      %421 = vmatprep.subr.mxu0 0.0
      %422 = vmatpush1.msra.mxu0 0.0
      %423 = vmatprep.subr.mxu0 0.0
      %424 = vmatpush1.msra.mxu0 0.0
      %425 = vmatprep.subr.mxu0 0.0
      %426 = vmatpush1.msra.mxu0 0.0
      %427 = vmatprep.subr.mxu0 0.0
      %428 = vmatpush1.msra.mxu0 0.0
      %429 = vmatprep.subr.mxu0 0.0
      %430 = vmatpush1.msra.mxu0 0.0
      %431 = vmatprep.subr.mxu0 0.0
      %432 = vmatpush1.msra.mxu0 0.0
      %433 = vmatprep.subr.mxu0 0.0
      %434 = vmatpush1.msra.mxu0 0.0
      %435 = vmatprep.subr.mxu0 0.0
      %436 = vmatpush1.msra.mxu0 0.0
      %437 = vmatprep.subr.mxu0 0.0
      %438 = vmatpush1.msra.mxu0 0.0
      %439 = vmatprep.mubr.f32.mxu0 %v293
      %440 = vmatmul.mubr.f32.gmra.mrb[0].mxu0 %v273
      %v441 = vpop.f32.mrb[0].mxu0
      %v442 = vadd.f32 %v365, %v441
      %v443 = vpop.f32.mrb[0].mxu0
      %v444 = vadd.f32 %v367, %v443
      %445 = vmatprep.mubr.f32.mxu0 %v296
      %446 = vmatmul.mubr.f32.gmra.mrb[0].mxu0 %v277
      %v447 = vpop.f32.mrb[0].mxu0
      %v448 = vadd.f32 %v371, %v447
      %v449 = vpop.f32.mrb[0].mxu0
      %v450 = vadd.f32 %v373, %v449
      %451 = vdwg.mxu0
      %v452 = vmax.f32 %v442, 0.0
      %v453 = vmax.f32 %v444, 0.0
      %v454 = vmax.f32 %v448, 0.0
      %v455 = vmax.f32 %v450, 0.0
      %456 = vst [vmem:[%s170] sm:$0xff] %v452
      %457 = vst [vmem:[%s170 + $0x8] sm:$0xff] %v453
      %458 = vst [vmem:[%s170 + $0x10] sm:$0xff] %v454
      %459 = vst [vmem:[%s170 + $0x18] sm:$0xff] %v455
      %p460 = scmp.lt.s32.totalorder %s14, 1
      %s461 = scalar_select %p460, %s14, 1
      %s462 = smul.addr %s461, 4
      %s463 = smul.addr %s462, 8
      %s464 = scalar_lea.vmem %s3, %s463
      // Predicated region
      $region33: #{ggcnn4_forward.10} parent=31 // pred_check
        %p465 = pneg %p100
      $region34: #{ggcnn4_forward.10} parent=31 // pred_check_branch
        %467 = sbr.rel (%p465) target = $region36
      $region35: #{ggcnn4_forward.10} parent=31 // pred_region
        _
      $region36: #{ggcnn4_forward.10} parent=31 // pred_fallthru
        _
    $region32: #{ggcnn4_forward.10} parent=5 // pred_fallthru
      _
    %p468 = scmp.le.s32.totalorder 2, %s9
    // Predicated region
    $region37: #{ggcnn4_forward.10} parent=5 // pred_check
      %p469 = pneg %p468
    $region38: #{ggcnn4_forward.10} parent=5 // pred_check_branch
      %471 = sbr.rel (%p469) target = $region40
    $region39: #{ggcnn4_forward.10} parent=5 // pred_region
      %s472 = ssub.s32 %s9, 2
      // Predicated region
      $region41: #{ggcnn4_forward.10} parent=39 // pred_check
        %p473 = pneg %p106
      $region42: #{ggcnn4_forward.10} parent=39 // pred_check_branch
        %475 = sbr.rel (%p473) target = $region44
      $region43: #{ggcnn4_forward.10} parent=39 // pred_region
        %p476 = scmp.lt.s32.totalorder %s15, 1
        %s477 = scalar_select %p476, %s15, 1
        %s478 = smul.addr %s477, 4
        %s479 = smul.addr %s478, 8
        %s480 = scalar_lea.vmem %s3, %s479
      $region44: #{ggcnn4_forward.10} parent=39 // pred_fallthru
        _
    $region40: #{ggcnn4_forward.10} parent=5 // pred_fallthru
      _
  $region6: #{ggcnn4_forward.10} parent=0 // loop_footer
    %s13 = sadd.s32 1, %s9
  $region7: #{ggcnn4_forward.10} parent=0 // loop_footer_branch
    %8 = sbr.rel target = $region3
  $region8: #{ggcnn4_forward.10} parent=0 // loop_exit
    _

// kernel: ggcnn4_forward.11
$region0: #{ggcnn4_forward.11}
  #allocation0 [shape = 'u32[]', space=smem, size = 0x4, offset = 0x4, fixed_abs, tag = 'smem constant byte address 0x4 - core index']
  #allocation1 [shape = 'u32[144,128]{1,0:T(1,128)}', space=vmem, size = 0x12000, scoped, tag = 'internal scratch']
  %s0 = inlined_call_operand.vmem [shape: f32[2,400,256], index: 0, kind: input, shape index: {}]
  %s1 = inlined_call_operand.vmem [shape: f32[16,400], index: 1, kind: input, shape index: {}]
  %s2 = inlined_call_operand.vmem [shape: f32[16,1], index: 2, kind: input, shape index: {}]
  %s3 = inlined_call_operand.vmem [shape: f32[2,16,64], index: 3, kind: output, shape index: {}]
  %s4 = sld [smem:[#allocation0]]
  $region45: #{ggcnn4_forward.11} parent=0
    _
  %s6 = ssub.s32 1, %s4
  %s7 = scalar_select 0, %s6, %s4
  loop: start=0, step=1, limit=4
  $region2: #{ggcnn4_forward.11} parent=0 // loop_pre_header
    _
  $region3: #{ggcnn4_forward.11} parent=0 // loop_header
    %s9 = sphi 0, %s13
    %p10 = scmp.ge.s32.totalorder %s9, 4
    %s19 = sphi 0, %s21
    %s22 = sphi 0, %s19
    %s23 = sphi 0, %s22
    %s39 = sphi 0, %s23
    %s43 = sphi 0, %s43
    %s45 = sphi 0, %s43
    %s46 = sphi 0, %s45
    %s60 = sphi 0, %s46
    %s64 = sphi 0, %s64
    %s66 = sphi 0, %s64
    %s67 = sphi 0, %s66
    %s81 = sphi 0, %s67
    %s87 = sphi 0, %s89
    %s90 = sphi 0, %s87
    %s91 = sphi 0, %s90
    %s107 = sphi 0, %s91
  $region4: #{ggcnn4_forward.11} parent=0 // loop_header_branch
    %12 = sbr.rel (%p10) target = $region8
  $region5: #{ggcnn4_forward.11} parent=0 // loop_body
    %s14 = ssub.s32 %s9, 1
    %s15 = ssub.s32 %s9, 2
    %s16 = sadd.s32 %s9, 1
    %s17 = ssub.s32 %s9, %s16
    %p18 = scmp.eq.s32.totalorder %s17, 0
    %s20 = sadd.s32 %s19, 1
    %s21 = scalar_select %p18, %s19, %s20
    %p24 = pneg %p18
    %p25 = scmp.eq.s32.totalorder %s9, 1
    %p26 = por %p24, %p25
    %p27 = scmp.ne.s32.totalorder %s19, %s22
    %p28 = scmp.eq.s32.totalorder %s9, 0
    %p29 = por %p27, %p28
    %p30 = scmp.ne.s32.totalorder %s19, %s22
    %p31 = scmp.eq.s32.totalorder %s14, 1
    %p32 = por %p30, %p31
    %p33 = scmp.ne.s32.totalorder %s22, %s23
    %p34 = scmp.eq.s32.totalorder %s14, 0
    %p35 = por %p33, %p34
    %p36 = scmp.ne.s32.totalorder %s22, %s23
    %p37 = scmp.eq.s32.totalorder %s15, 1
    %p38 = por %p36, %p37
    %p40 = scmp.ne.s32.totalorder %s23, %s39
    %p41 = scmp.eq.s32.totalorder %s15, 0
    %p42 = por %p40, %p41
    %s44 = sadd.s32 %s43, 1
    %p47 = scmp.eq.s32.totalorder %s9, 1
    %p48 = scmp.ne.s32.totalorder %s43, %s45
    %p49 = scmp.eq.s32.totalorder %s9, 0
    %p50 = por %p48, %p49
    %p51 = scmp.ne.s32.totalorder %s43, %s45
    %p52 = scmp.eq.s32.totalorder %s14, 1
    %p53 = por %p51, %p52
    %p54 = scmp.ne.s32.totalorder %s45, %s46
    %p55 = scmp.eq.s32.totalorder %s14, 0
    %p56 = por %p54, %p55
    %p57 = scmp.ne.s32.totalorder %s45, %s46
    %p58 = scmp.eq.s32.totalorder %s15, 1
    %p59 = por %p57, %p58
    %p61 = scmp.ne.s32.totalorder %s46, %s60
    %p62 = scmp.eq.s32.totalorder %s15, 0
    %p63 = por %p61, %p62
    %s65 = sadd.s32 %s64, 1
    %p68 = scmp.eq.s32.totalorder %s9, 1
    %p69 = scmp.ne.s32.totalorder %s64, %s66
    %p70 = scmp.eq.s32.totalorder %s9, 0
    %p71 = por %p69, %p70
    %p72 = scmp.ne.s32.totalorder %s64, %s66
    %p73 = scmp.eq.s32.totalorder %s14, 1
    %p74 = por %p72, %p73
    %p75 = scmp.ne.s32.totalorder %s66, %s67
    %p76 = scmp.eq.s32.totalorder %s14, 0
    %p77 = por %p75, %p76
    %p78 = scmp.ne.s32.totalorder %s66, %s67
    %p79 = scmp.eq.s32.totalorder %s15, 1
    %p80 = por %p78, %p79
    %p82 = scmp.ne.s32.totalorder %s67, %s81
    %p83 = scmp.eq.s32.totalorder %s15, 0
    %p84 = por %p82, %p83
    %s85 = ssub.s32 %s9, %s16
    %p86 = scmp.eq.s32.totalorder %s85, 0
    %s88 = sadd.s32 %s87, 1
    %s89 = scalar_select %p86, %s87, %s88
    %p92 = pneg %p86
    %p93 = scmp.eq.s32.totalorder %s9, 1
    %p94 = por %p92, %p93
    %p95 = scmp.ne.s32.totalorder %s87, %s90
    %p96 = scmp.eq.s32.totalorder %s9, 0
    %p97 = por %p95, %p96
    %p98 = scmp.ne.s32.totalorder %s87, %s90
    %p99 = scmp.eq.s32.totalorder %s14, 1
    %p100 = por %p98, %p99
    %p101 = scmp.ne.s32.totalorder %s90, %s91
    %p102 = scmp.eq.s32.totalorder %s14, 0
    %p103 = por %p101, %p102
    %p104 = scmp.ne.s32.totalorder %s90, %s91
    %p105 = scmp.eq.s32.totalorder %s15, 1
    %p106 = por %p104, %p105
    %p108 = scmp.ne.s32.totalorder %s91, %s107
    %p109 = scmp.eq.s32.totalorder %s15, 0
    %p110 = por %p108, %p109
    %p111 = scmp.le.s32.totalorder 1, %s9
    %p112 = scmp.lt.s32.totalorder %s9, 3
    %p113 = pnand %p111, %p112
    %p114 = pneg %p113
    // Predicated region
    $region9: #{ggcnn4_forward.11} parent=5 // pred_check
      _
    $region10: #{ggcnn4_forward.11} parent=5 // pred_check_branch
      %116 = sbr.rel (%p113) target = $region12
    $region11: #{ggcnn4_forward.11} parent=5 // pred_region
      %s117 = ssub.s32 %s9, 1
      // Predicated region
      $region13: #{ggcnn4_forward.11} parent=11 // pred_check
        %p118 = pneg %p56
      $region14: #{ggcnn4_forward.11} parent=11 // pred_check_branch
        %120 = sbr.rel (%p118) target = $region16
      $region15: #{ggcnn4_forward.11} parent=11 // pred_region
        _
      $region16: #{ggcnn4_forward.11} parent=11 // pred_fallthru
        _
      // Predicated region
      $region17: #{ggcnn4_forward.11} parent=11 // pred_check
        %p121 = pneg %p77
      $region18: #{ggcnn4_forward.11} parent=11 // pred_check_branch
        %123 = sbr.rel (%p121) target = $region20
      $region19: #{ggcnn4_forward.11} parent=11 // pred_region
        _
      $region20: #{ggcnn4_forward.11} parent=11 // pred_fallthru
        _
    $region12: #{ggcnn4_forward.11} parent=5 // pred_fallthru
      _
    %p124 = scmp.lt.s32.totalorder %s9, 2
    // Predicated region
    $region21: #{ggcnn4_forward.11} parent=5 // pred_check
      %p125 = pneg %p124
    $region22: #{ggcnn4_forward.11} parent=5 // pred_check_branch
      %127 = sbr.rel (%p125) target = $region24
    $region23: #{ggcnn4_forward.11} parent=5 // pred_region
      // Predicated region
      $region25: #{ggcnn4_forward.11} parent=23 // pred_check
        %p128 = pneg %p29
      $region26: #{ggcnn4_forward.11} parent=23 // pred_check_branch
        %130 = sbr.rel (%p128) target = $region28
      $region27: #{ggcnn4_forward.11} parent=23 // pred_region
        %p131 = scmp.lt.s32.totalorder %s9, 1
        %s132 = scalar_select %p131, %s9, 1
        %s133 = smul.addr %s132, 100
        %s134 = smul.addr %s133, 8
        %s135 = scalar_lea.vmem %s0, %s134
      $region28: #{ggcnn4_forward.11} parent=23 // pred_fallthru
        _
    $region24: #{ggcnn4_forward.11} parent=5 // pred_fallthru
      _
    %p136 = scmp.le.s32.totalorder 1, %s9
    %p137 = scmp.lt.s32.totalorder %s9, 3
    %p138 = pnand %p136, %p137
    %p139 = pneg %p138
    // Predicated region
    $region29: #{ggcnn4_forward.11} parent=5 // pred_check
      _
    $region30: #{ggcnn4_forward.11} parent=5 // pred_check_branch
      %141 = sbr.rel (%p138) target = $region32
    $region31: #{ggcnn4_forward.11} parent=5 // pred_region
      %s142 = ssub.s32 %s9, 1
      %p143 = scmp.lt.s32.totalorder %s14, 1
      %s144 = scalar_select %p143, %s14, 1
      %s145 = smul.addr %s144, 100
      %s146 = smul.addr %s145, 8
      %s147 = scalar_lea.vmem %s0, %s146
      %p148 = pneg %p35
      %p149 = pneg %p32
      %p150 = pneg %p56
      %p151 = pneg %p53
      %p152 = pneg %p77
      %p153 = pneg %p74
      %p154 = pneg %p103
      %p155 = pneg %p100
      %p156 = scmp.lt.s32.totalorder %s14, 1
      %s157 = scalar_select %p156, %s14, 1
      %s158 = smul.addr %s157, 2
      %s159 = smul.addr %s158, 8
      %s160 = scalar_lea.vmem %s3, %s159
      %p161 = scmp.lt.s32.totalorder %s14, 1
      %s162 = scalar_select %p161, %s14, 1
      %s163 = smul.addr %s162, 100
      %s164 = smul.addr %s163, 8
      %s165 = scalar_lea.vmem %s0, %s164
      %p166 = scmp.lt.s32.totalorder %s14, 1
      %s167 = scalar_select %p166, %s14, 1
      %s168 = smul.addr %s167, 2
      %s169 = smul.addr %s168, 8
      %s170 = scalar_lea.vmem %s3, %s169
      %v171 = vld [vmem:[%s165] sm:$0xff]
      %v172 = vld [vmem:[%s165 + $0x8] sm:$0xff]
      %v173 = vld [vmem:[%s165 + $0x10] sm:$0xff]
      %v174 = vld [vmem:[%s165 + $0x18] sm:$0xff]
      %v175 = vld [vmem:[%s165 + $0x20] sm:$0xff]
      %v176 = vld [vmem:[%s165 + $0x28] sm:$0xff]
      %v177 = vld [vmem:[%s165 + $0x30] sm:$0xff]
      %v178 = vld [vmem:[%s165 + $0x38] sm:$0xff]
      %v179 = vld [vmem:[%s165 + $0x40] sm:$0xff]
      %v180 = vld [vmem:[%s165 + $0x48] sm:$0xff]
      %v181 = vld [vmem:[%s165 + $0x50] sm:$0xff]
      %v182 = vld [vmem:[%s165 + $0x58] sm:$0xff]
      %v183 = vld [vmem:[%s165 + $0x60] sm:$0xff]
      %v184 = vld [vmem:[%s165 + $0x68] sm:$0xff]
      %v185 = vld [vmem:[%s165 + $0x70] sm:$0xff]
      %v186 = vld [vmem:[%s165 + $0x78] sm:$0xff]
      %v187 = vld [vmem:[%s165 + $0x80] sm:$0xff]
      %v188 = vld [vmem:[%s165 + $0x88] sm:$0xff]
      %v189 = vld [vmem:[%s165 + $0x90] sm:$0xff]
      %v190 = vld [vmem:[%s165 + $0x98] sm:$0xff]
      %v191 = vld [vmem:[%s165 + $0xa0] sm:$0xff]
      %v192 = vld [vmem:[%s165 + $0xa8] sm:$0xff]
      %v193 = vld [vmem:[%s165 + $0xb0] sm:$0xff]
      %v194 = vld [vmem:[%s165 + $0xb8] sm:$0xff]
      %v195 = vld [vmem:[%s165 + $0xc0] sm:$0xff]
      %v196 = vld [vmem:[%s165 + $0xc8] sm:$0xff]
      %v197 = vld [vmem:[%s165 + $0xd0] sm:$0xff]
      %v198 = vld [vmem:[%s165 + $0xd8] sm:$0xff]
      %v199 = vld [vmem:[%s165 + $0xe0] sm:$0xff]
      %v200 = vld [vmem:[%s165 + $0xe8] sm:$0xff]
      %v201 = vld [vmem:[%s165 + $0xf0] sm:$0xff]
      %v202 = vld [vmem:[%s165 + $0xf8] sm:$0xff]
      %v203 = vld [vmem:[%s165 + $0x100] sm:$0xff]
      %v204 = vld [vmem:[%s165 + $0x108] sm:$0xff]
      %v205 = vld [vmem:[%s165 + $0x110] sm:$0xff]
      %v206 = vld [vmem:[%s165 + $0x118] sm:$0xff]
      %v207 = vld [vmem:[%s165 + $0x120] sm:$0xff]
      %v208 = vld [vmem:[%s165 + $0x128] sm:$0xff]
      %v209 = vld [vmem:[%s165 + $0x130] sm:$0xff]
      %v210 = vld [vmem:[%s165 + $0x138] sm:$0xff]
      %v211 = vld [vmem:[%s165 + $0x140] sm:$0xff]
      %v212 = vld [vmem:[%s165 + $0x148] sm:$0xff]
      %v213 = vld [vmem:[%s165 + $0x150] sm:$0xff]
      %v214 = vld [vmem:[%s165 + $0x158] sm:$0xff]
      %v215 = vld [vmem:[%s165 + $0x160] sm:$0xff]
      %v216 = vld [vmem:[%s165 + $0x168] sm:$0xff]
      %v217 = vld [vmem:[%s165 + $0x170] sm:$0xff]
      %v218 = vld [vmem:[%s165 + $0x178] sm:$0xff]
      %v219 = vld [vmem:[%s165 + $0x180] sm:$0xff]
      %v220 = vld [vmem:[%s165 + $0x188] sm:$0xff]
      %v221 = vld [vmem:[%s165 + $0x190] sm:$0xff]
      %v222 = vld [vmem:[%s165 + $0x198] sm:$0xff]
      %v223 = vld [vmem:[%s165 + $0x1a0] sm:$0xff]
      %v224 = vld [vmem:[%s165 + $0x1a8] sm:$0xff]
      %v225 = vld [vmem:[%s165 + $0x1b0] sm:$0xff]
      %v226 = vld [vmem:[%s165 + $0x1b8] sm:$0xff]
      %v227 = vld [vmem:[%s165 + $0x1c0] sm:$0xff]
      %v228 = vld [vmem:[%s165 + $0x1c8] sm:$0xff]
      %v229 = vld [vmem:[%s165 + $0x1d0] sm:$0xff]
      %v230 = vld [vmem:[%s165 + $0x1d8] sm:$0xff]
      %v231 = vld [vmem:[%s165 + $0x1e0] sm:$0xff]
      %v232 = vld [vmem:[%s165 + $0x1e8] sm:$0xff]
      %v233 = vld [vmem:[%s165 + $0x1f0] sm:$0xff]
      %v234 = vld [vmem:[%s165 + $0x1f8] sm:$0xff]
      %v235 = vld [vmem:[%s165 + $0x200] sm:$0xff]
      %v236 = vld [vmem:[%s165 + $0x208] sm:$0xff]
      %v237 = vld [vmem:[%s165 + $0x210] sm:$0xff]
      %v238 = vld [vmem:[%s165 + $0x218] sm:$0xff]
      %v239 = vld [vmem:[%s165 + $0x220] sm:$0xff]
      %v240 = vld [vmem:[%s165 + $0x228] sm:$0xff]
      %v241 = vld [vmem:[%s165 + $0x230] sm:$0xff]
      %v242 = vld [vmem:[%s165 + $0x238] sm:$0xff]
      %v243 = vld [vmem:[%s165 + $0x240] sm:$0xff]
      %v244 = vld [vmem:[%s165 + $0x248] sm:$0xff]
      %v245 = vld [vmem:[%s165 + $0x250] sm:$0xff]
      %v246 = vld [vmem:[%s165 + $0x258] sm:$0xff]
      %v247 = vld [vmem:[%s165 + $0x260] sm:$0xff]
      %v248 = vld [vmem:[%s165 + $0x268] sm:$0xff]
      %v249 = vld [vmem:[%s165 + $0x270] sm:$0xff]
      %v250 = vld [vmem:[%s165 + $0x278] sm:$0xff]
      %v251 = vld [vmem:[%s165 + $0x280] sm:$0xff]
      %v252 = vld [vmem:[%s165 + $0x288] sm:$0xff]
      %v253 = vld [vmem:[%s165 + $0x290] sm:$0xff]
      %v254 = vld [vmem:[%s165 + $0x298] sm:$0xff]
      %v255 = vld [vmem:[%s165 + $0x2a0] sm:$0xff]
      %v256 = vld [vmem:[%s165 + $0x2a8] sm:$0xff]
      %v257 = vld [vmem:[%s165 + $0x2b0] sm:$0xff]
      %v258 = vld [vmem:[%s165 + $0x2b8] sm:$0xff]
      %v259 = vld [vmem:[%s165 + $0x2c0] sm:$0xff]
      %v260 = vld [vmem:[%s165 + $0x2c8] sm:$0xff]
      %v261 = vld [vmem:[%s165 + $0x2d0] sm:$0xff]
      %v262 = vld [vmem:[%s165 + $0x2d8] sm:$0xff]
      %v263 = vld [vmem:[%s165 + $0x2e0] sm:$0xff]
      %v264 = vld [vmem:[%s165 + $0x2e8] sm:$0xff]
      %v265 = vld [vmem:[%s165 + $0x2f0] sm:$0xff]
      %v266 = vld [vmem:[%s165 + $0x2f8] sm:$0xff]
      %v267 = vld [vmem:[%s165 + $0x300] sm:$0xff]
      %v268 = vld [vmem:[%s165 + $0x308] sm:$0xff]
      %v269 = vld [vmem:[%s165 + $0x310] sm:$0xff]
      %v270 = vld [vmem:[%s165 + $0x318] sm:$0xff]
      %v271 = vld [vmem:[%s1] sm:$0xff]
      %v272 = vld [vmem:[%s1 + $0x8] sm:$0xff]
      %v273 = vld [vmem:[%s1 + $0x10] sm:$0xff]
      %v274 = vld [vmem:[%s1 + $0x18] sm:$0xff]
      %v275 = vld [vmem:[%s1 + $0x20] sm:$0xff]
      %v276 = vld [vmem:[%s1 + $0x28] sm:$0xff]
      %v277 = vld [vmem:[%s1 + $0x30] sm:$0xff]
      %v278 = vld [vmem:[%s1 + $0x38] sm:$0xff]
      %v279 = vld [vmem:[%s2] sm:$0xff]
      %v280 = vld [vmem:[%s2 + $0x8] sm:$0xff]
      %282 = vset.pattern.permute.xlu0 0
      %283 = vperm.xlu0 %282, %v279
      %v284 = vpop.permute.xlu0 %283
      %287 = vset.pattern.permute.xlu0 0
      %288 = vperm.xlu0 %287, %v280
      %v289 = vpop.permute.xlu0 %288
      %vm291 = vcmask 130048
      %v293 = vsel %vm291, %v274, 0
      %v296 = vsel %vm291, %v278, 0
      %298 = vmatprep.subr.mxu0 %v172
      %299 = vmatpush1.msra.mxu0 %v171
      %300 = vmatprep.subr.mxu0 %v174
      %301 = vmatpush1.msra.mxu0 %v173
      %302 = vmatprep.subr.mxu0 %v176
      %303 = vmatpush1.msra.mxu0 %v175
      %304 = vmatprep.subr.mxu0 %v178
      %305 = vmatpush1.msra.mxu0 %v177
      %306 = vmatprep.subr.mxu0 %v180
      %307 = vmatpush1.msra.mxu0 %v179
      %308 = vmatprep.subr.mxu0 %v182
      %309 = vmatpush1.msra.mxu0 %v181
      %310 = vmatprep.subr.mxu0 %v184
      %311 = vmatpush1.msra.mxu0 %v183
      %312 = vmatprep.subr.mxu0 %v186
      %313 = vmatpush1.msra.mxu0 %v185
      %314 = vmatprep.subr.mxu0 %v188
      %315 = vmatpush1.msra.mxu0 %v187
      %316 = vmatprep.subr.mxu0 %v190
      %317 = vmatpush1.msra.mxu0 %v189
      %318 = vmatprep.subr.mxu0 %v192
      %319 = vmatpush1.msra.mxu0 %v191
      %320 = vmatprep.subr.mxu0 %v194
      %321 = vmatpush1.msra.mxu0 %v193
      %322 = vmatprep.subr.mxu0 %v196
      %323 = vmatpush1.msra.mxu0 %v195
      %324 = vmatprep.subr.mxu0 %v198
      %325 = vmatpush1.msra.mxu0 %v197
      %326 = vmatprep.subr.mxu0 %v200
      %327 = vmatpush1.msra.mxu0 %v199
      %328 = vmatprep.subr.mxu0 %v202
      %329 = vmatpush1.msra.mxu0 %v201
      %330 = vmatprep.subr.mxu0 %v204
      %331 = vmatpush1.msra.mxu0 %v203
      %332 = vmatprep.subr.mxu0 %v206
      %333 = vmatpush1.msra.mxu0 %v205
      %334 = vmatprep.subr.mxu0 %v208
      %335 = vmatpush1.msra.mxu0 %v207
      %336 = vmatprep.subr.mxu0 %v210
      %337 = vmatpush1.msra.mxu0 %v209
      %338 = vmatprep.subr.mxu0 %v212
      %339 = vmatpush1.msra.mxu0 %v211
      %340 = vmatprep.subr.mxu0 %v214
      %341 = vmatpush1.msra.mxu0 %v213
      %342 = vmatprep.subr.mxu0 %v216
      %343 = vmatpush1.msra.mxu0 %v215
      %344 = vmatprep.subr.mxu0 %v218
      %345 = vmatpush1.msra.mxu0 %v217
      %346 = vmatprep.subr.mxu0 %v220
      %347 = vmatpush1.msra.mxu0 %v219
      %348 = vmatprep.subr.mxu0 %v222
      %349 = vmatpush1.msra.mxu0 %v221
      %350 = vmatprep.subr.mxu0 %v224
      %351 = vmatpush1.msra.mxu0 %v223
      %352 = vmatprep.subr.mxu0 %v226
      %353 = vmatpush1.msra.mxu0 %v225
      %354 = vmatprep.subr.mxu0 %v228
      %355 = vmatpush1.msra.mxu0 %v227
      %356 = vmatprep.subr.mxu0 %v230
      %357 = vmatpush1.msra.mxu0 %v229
      %358 = vmatprep.subr.mxu0 %v232
      %359 = vmatpush1.msra.mxu0 %v231
      %360 = vmatprep.subr.mxu0 %v234
      %361 = vmatpush1.msra.mxu0 %v233
      %362 = vmatprep.mubr.f32.mxu0 %v272
      %363 = vmatmul.mubr.f32.gmra.mrb[0].mxu0 %v271
      %v364 = vpop.f32.mrb[0].mxu0
      %v365 = vadd.f32 %v284, %v364
      %v366 = vpop.f32.mrb[0].mxu0
      %v367 = vadd.f32 %v284, %v366
      %368 = vmatprep.mubr.f32.mxu0 %v276
      %369 = vmatmul.mubr.f32.gmra.mrb[0].mxu0 %v275
      %v370 = vpop.f32.mrb[0].mxu0
      %v371 = vadd.f32 %v289, %v370
      %v372 = vpop.f32.mrb[0].mxu0
      %v373 = vadd.f32 %v289, %v372
      %374 = vdwg.mxu0
      %375 = vmatprep.subr.mxu0 %v236
      %376 = vmatpush1.msra.mxu0 %v235
      %377 = vmatprep.subr.mxu0 %v238
      %378 = vmatpush1.msra.mxu0 %v237
      %379 = vmatprep.subr.mxu0 %v240
      %380 = vmatpush1.msra.mxu0 %v239
      %381 = vmatprep.subr.mxu0 %v242
      %382 = vmatpush1.msra.mxu0 %v241
      %383 = vmatprep.subr.mxu0 %v244
      %384 = vmatpush1.msra.mxu0 %v243
      %385 = vmatprep.subr.mxu0 %v246
      %386 = vmatpush1.msra.mxu0 %v245
      %387 = vmatprep.subr.mxu0 %v248
      %388 = vmatpush1.msra.mxu0 %v247
      %389 = vmatprep.subr.mxu0 %v250
      %390 = vmatpush1.msra.mxu0 %v249
      %391 = vmatprep.subr.mxu0 %v252
      %392 = vmatpush1.msra.mxu0 %v251
      %393 = vmatprep.subr.mxu0 %v254
      %394 = vmatpush1.msra.mxu0 %v253
      %395 = vmatprep.subr.mxu0 %v256
      %396 = vmatpush1.msra.mxu0 %v255
      %397 = vmatprep.subr.mxu0 %v258
      %398 = vmatpush1.msra.mxu0 %v257
      %399 = vmatprep.subr.mxu0 %v260
      %400 = vmatpush1.msra.mxu0 %v259
      %401 = vmatprep.subr.mxu0 %v262
      %402 = vmatpush1.msra.mxu0 %v261
      %403 = vmatprep.subr.mxu0 %v264
      %404 = vmatpush1.msra.mxu0 %v263
      %405 = vmatprep.subr.mxu0 %v266
      %406 = vmatpush1.msra.mxu0 %v265
      %407 = vmatprep.subr.mxu0 %v268
      %408 = vmatpush1.msra.mxu0 %v267
      %409 = vmatprep.subr.mxu0 %v270
      %410 = vmatpush1.msra.mxu0 %v269
      %411 = vmatprep.subr.mxu0 0.0
      %412 = vmatpush1.msra.mxu0 0.0
      %413 = vmatprep.subr.mxu0 0.0
      %414 = vmatpush1.msra.mxu0 0.0
      %415 = vmatprep.subr.mxu0 0.0
      %416 = vmatpush1.msra.mxu0 0.0
      %417 = vmatprep.subr.mxu0 0.0
      %418 = vmatpush1.msra.mxu0 0.0
      %419 = vmatprep.subr.mxu0 0.0
      %420 = vmatpush1.msra.mxu0 0.0
      %421 = vmatprep.subr.mxu0 0.0
      %422 = vmatpush1.msra.mxu0 0.0
      %423 = vmatprep.subr.mxu0 0.0
      %424 = vmatpush1.msra.mxu0 0.0
      %425 = vmatprep.subr.mxu0 0.0
      %426 = vmatpush1.msra.mxu0 0.0
      %427 = vmatprep.subr.mxu0 0.0
      %428 = vmatpush1.msra.mxu0 0.0
      %429 = vmatprep.subr.mxu0 0.0
      %430 = vmatpush1.msra.mxu0 0.0
      %431 = vmatprep.subr.mxu0 0.0
      %432 = vmatpush1.msra.mxu0 0.0
      %433 = vmatprep.subr.mxu0 0.0
      %434 = vmatpush1.msra.mxu0 0.0
      %435 = vmatprep.subr.mxu0 0.0
      %436 = vmatpush1.msra.mxu0 0.0
      %437 = vmatprep.subr.mxu0 0.0
      %438 = vmatpush1.msra.mxu0 0.0
      %439 = vmatprep.mubr.f32.mxu0 %v293
      %440 = vmatmul.mubr.f32.gmra.mrb[0].mxu0 %v273
      %v441 = vpop.f32.mrb[0].mxu0
      %v442 = vadd.f32 %v365, %v441
      %v443 = vpop.f32.mrb[0].mxu0
      %v444 = vadd.f32 %v367, %v443
      %445 = vmatprep.mubr.f32.mxu0 %v296
      %446 = vmatmul.mubr.f32.gmra.mrb[0].mxu0 %v277
      %v447 = vpop.f32.mrb[0].mxu0
      %v448 = vadd.f32 %v371, %v447
      %v449 = vpop.f32.mrb[0].mxu0
      %v450 = vadd.f32 %v373, %v449
      %451 = vdwg.mxu0
      %v452 = vmax.f32 %v442, 0.0
      %v453 = vmax.f32 %v444, 0.0
      %v454 = vmax.f32 %v448, 0.0
      %v455 = vmax.f32 %v450, 0.0
      %458 = vrot.lane.b32.xlu0 %v452, 64
      %v459 = vpop.permute.xlu0 %458
      %460 = vrot.lane.b32.xlu0 %v454, 64
      %v461 = vpop.permute.xlu0 %460
      %v464 = vmax.f32 %v452, %v459
      %v465 = vmax.f32 %v454, %v461
      %468 = vrot.lane.b32.xlu0 %v453, 64
      %v469 = vpop.permute.xlu0 %468
      %470 = vrot.lane.b32.xlu0 %v455, 64
      %v471 = vpop.permute.xlu0 %470
      %v474 = vmax.f32 %v453, %v469
      %v475 = vmax.f32 %v455, %v471
      %v476 = vmax.f32 %v464, %v474
      %v477 = vmax.f32 %v465, %v475
      %vm478 = vcmask 523264
      %479 = vst.msk [vmem:[%s170] sm:$0xff] %vm478, %v476
      %480 = vst.msk [vmem:[%s170 + $0x8] sm:$0xff] %vm478, %v477
      %p481 = scmp.lt.s32.totalorder %s14, 1
      %s482 = scalar_select %p481, %s14, 1
      %s483 = smul.addr %s482, 2
      %s484 = smul.addr %s483, 8
      %s485 = scalar_lea.vmem %s3, %s484
      // Predicated region
      $region33: #{ggcnn4_forward.11} parent=31 // pred_check
        %p486 = pneg %p100
      $region34: #{ggcnn4_forward.11} parent=31 // pred_check_branch
        %488 = sbr.rel (%p486) target = $region36
      $region35: #{ggcnn4_forward.11} parent=31 // pred_region
        _
      $region36: #{ggcnn4_forward.11} parent=31 // pred_fallthru
        _
    $region32: #{ggcnn4_forward.11} parent=5 // pred_fallthru
      _
    %p489 = scmp.le.s32.totalorder 2, %s9
    // Predicated region
    $region37: #{ggcnn4_forward.11} parent=5 // pred_check
      %p490 = pneg %p489
    $region38: #{ggcnn4_forward.11} parent=5 // pred_check_branch
      %492 = sbr.rel (%p490) target = $region40
    $region39: #{ggcnn4_forward.11} parent=5 // pred_region
      %s493 = ssub.s32 %s9, 2
      // Predicated region
      $region41: #{ggcnn4_forward.11} parent=39 // pred_check
        %p494 = pneg %p106
      $region42: #{ggcnn4_forward.11} parent=39 // pred_check_branch
        %496 = sbr.rel (%p494) target = $region44
      $region43: #{ggcnn4_forward.11} parent=39 // pred_region
        %p497 = scmp.lt.s32.totalorder %s15, 1
        %s498 = scalar_select %p497, %s15, 1
        %s499 = smul.addr %s498, 2
        %s500 = smul.addr %s499, 8
        %s501 = scalar_lea.vmem %s3, %s500
      $region44: #{ggcnn4_forward.11} parent=39 // pred_fallthru
        _
    $region40: #{ggcnn4_forward.11} parent=5 // pred_fallthru
      _
  $region6: #{ggcnn4_forward.11} parent=0 // loop_footer
    %s13 = sadd.s32 1, %s9
  $region7: #{ggcnn4_forward.11} parent=0 // loop_footer_branch
    %8 = sbr.rel target = $region3
  $region8: #{ggcnn4_forward.11} parent=0 // loop_exit
    _

// kernel: ggcnn4_forward.12
$region0: #{ggcnn4_forward.12}
  #allocation0 [shape = 'u32[]', space=smem, size = 0x4, offset = 0x4, fixed_abs, tag = 'smem constant byte address 0x4 - core index']
  #allocation1 [shape = 'u32[144,128]{1,0:T(1,128)}', space=vmem, size = 0x12000, scoped, tag = 'internal scratch']
  %s0 = inlined_call_operand.vmem [shape: f32[2,400,64], index: 0, kind: input, shape index: {}]
  %s1 = inlined_call_operand.vmem [shape: f32[32,400], index: 1, kind: input, shape index: {}]
  %s2 = inlined_call_operand.vmem [shape: f32[32,1], index: 2, kind: input, shape index: {}]
  %s3 = inlined_call_operand.vmem [shape: f32[2,32,64], index: 3, kind: output, shape index: {}]
  %s4 = sld [smem:[#allocation0]]
  $region45: #{ggcnn4_forward.12} parent=0
    _
  %s6 = ssub.s32 1, %s4
  %s7 = scalar_select 0, %s6, %s4
  loop: start=0, step=1, limit=4
  $region2: #{ggcnn4_forward.12} parent=0 // loop_pre_header
    _
  $region3: #{ggcnn4_forward.12} parent=0 // loop_header
    %s9 = sphi 0, %s13
    %p10 = scmp.ge.s32.totalorder %s9, 4
    %s19 = sphi 0, %s21
    %s22 = sphi 0, %s19
    %s23 = sphi 0, %s22
    %s39 = sphi 0, %s23
    %s43 = sphi 0, %s43
    %s45 = sphi 0, %s43
    %s46 = sphi 0, %s45
    %s60 = sphi 0, %s46
    %s64 = sphi 0, %s64
    %s66 = sphi 0, %s64
    %s67 = sphi 0, %s66
    %s81 = sphi 0, %s67
    %s87 = sphi 0, %s89
    %s90 = sphi 0, %s87
    %s91 = sphi 0, %s90
    %s107 = sphi 0, %s91
  $region4: #{ggcnn4_forward.12} parent=0 // loop_header_branch
    %12 = sbr.rel (%p10) target = $region8
  $region5: #{ggcnn4_forward.12} parent=0 // loop_body
    %s14 = ssub.s32 %s9, 1
    %s15 = ssub.s32 %s9, 2
    %s16 = sadd.s32 %s9, 1
    %s17 = ssub.s32 %s9, %s16
    %p18 = scmp.eq.s32.totalorder %s17, 0
    %s20 = sadd.s32 %s19, 1
    %s21 = scalar_select %p18, %s19, %s20
    %p24 = pneg %p18
    %p25 = scmp.eq.s32.totalorder %s9, 1
    %p26 = por %p24, %p25
    %p27 = scmp.ne.s32.totalorder %s19, %s22
    %p28 = scmp.eq.s32.totalorder %s9, 0
    %p29 = por %p27, %p28
    %p30 = scmp.ne.s32.totalorder %s19, %s22
    %p31 = scmp.eq.s32.totalorder %s14, 1
    %p32 = por %p30, %p31
    %p33 = scmp.ne.s32.totalorder %s22, %s23
    %p34 = scmp.eq.s32.totalorder %s14, 0
    %p35 = por %p33, %p34
    %p36 = scmp.ne.s32.totalorder %s22, %s23
    %p37 = scmp.eq.s32.totalorder %s15, 1
    %p38 = por %p36, %p37
    %p40 = scmp.ne.s32.totalorder %s23, %s39
    %p41 = scmp.eq.s32.totalorder %s15, 0
    %p42 = por %p40, %p41
    %s44 = sadd.s32 %s43, 1
    %p47 = scmp.eq.s32.totalorder %s9, 1
    %p48 = scmp.ne.s32.totalorder %s43, %s45
    %p49 = scmp.eq.s32.totalorder %s9, 0
    %p50 = por %p48, %p49
    %p51 = scmp.ne.s32.totalorder %s43, %s45
    %p52 = scmp.eq.s32.totalorder %s14, 1
    %p53 = por %p51, %p52
    %p54 = scmp.ne.s32.totalorder %s45, %s46
    %p55 = scmp.eq.s32.totalorder %s14, 0
    %p56 = por %p54, %p55
    %p57 = scmp.ne.s32.totalorder %s45, %s46
    %p58 = scmp.eq.s32.totalorder %s15, 1
    %p59 = por %p57, %p58
    %p61 = scmp.ne.s32.totalorder %s46, %s60
    %p62 = scmp.eq.s32.totalorder %s15, 0
    %p63 = por %p61, %p62
    %s65 = sadd.s32 %s64, 1
    %p68 = scmp.eq.s32.totalorder %s9, 1
    %p69 = scmp.ne.s32.totalorder %s64, %s66
    %p70 = scmp.eq.s32.totalorder %s9, 0
    %p71 = por %p69, %p70
    %p72 = scmp.ne.s32.totalorder %s64, %s66
    %p73 = scmp.eq.s32.totalorder %s14, 1
    %p74 = por %p72, %p73
    %p75 = scmp.ne.s32.totalorder %s66, %s67
    %p76 = scmp.eq.s32.totalorder %s14, 0
    %p77 = por %p75, %p76
    %p78 = scmp.ne.s32.totalorder %s66, %s67
    %p79 = scmp.eq.s32.totalorder %s15, 1
    %p80 = por %p78, %p79
    %p82 = scmp.ne.s32.totalorder %s67, %s81
    %p83 = scmp.eq.s32.totalorder %s15, 0
    %p84 = por %p82, %p83
    %s85 = ssub.s32 %s9, %s16
    %p86 = scmp.eq.s32.totalorder %s85, 0
    %s88 = sadd.s32 %s87, 1
    %s89 = scalar_select %p86, %s87, %s88
    %p92 = pneg %p86
    %p93 = scmp.eq.s32.totalorder %s9, 1
    %p94 = por %p92, %p93
    %p95 = scmp.ne.s32.totalorder %s87, %s90
    %p96 = scmp.eq.s32.totalorder %s9, 0
    %p97 = por %p95, %p96
    %p98 = scmp.ne.s32.totalorder %s87, %s90
    %p99 = scmp.eq.s32.totalorder %s14, 1
    %p100 = por %p98, %p99
    %p101 = scmp.ne.s32.totalorder %s90, %s91
    %p102 = scmp.eq.s32.totalorder %s14, 0
    %p103 = por %p101, %p102
    %p104 = scmp.ne.s32.totalorder %s90, %s91
    %p105 = scmp.eq.s32.totalorder %s15, 1
    %p106 = por %p104, %p105
    %p108 = scmp.ne.s32.totalorder %s91, %s107
    %p109 = scmp.eq.s32.totalorder %s15, 0
    %p110 = por %p108, %p109
    %p111 = scmp.le.s32.totalorder 1, %s9
    %p112 = scmp.lt.s32.totalorder %s9, 3
    %p113 = pnand %p111, %p112
    %p114 = pneg %p113
    // Predicated region
    $region9: #{ggcnn4_forward.12} parent=5 // pred_check
      _
    $region10: #{ggcnn4_forward.12} parent=5 // pred_check_branch
      %116 = sbr.rel (%p113) target = $region12
    $region11: #{ggcnn4_forward.12} parent=5 // pred_region
      %s117 = ssub.s32 %s9, 1
      // Predicated region
      $region13: #{ggcnn4_forward.12} parent=11 // pred_check
        %p118 = pneg %p56
      $region14: #{ggcnn4_forward.12} parent=11 // pred_check_branch
        %120 = sbr.rel (%p118) target = $region16
      $region15: #{ggcnn4_forward.12} parent=11 // pred_region
        _
      $region16: #{ggcnn4_forward.12} parent=11 // pred_fallthru
        _
      // Predicated region
      $region17: #{ggcnn4_forward.12} parent=11 // pred_check
        %p121 = pneg %p77
      $region18: #{ggcnn4_forward.12} parent=11 // pred_check_branch
        %123 = sbr.rel (%p121) target = $region20
      $region19: #{ggcnn4_forward.12} parent=11 // pred_region
        _
      $region20: #{ggcnn4_forward.12} parent=11 // pred_fallthru
        _
    $region12: #{ggcnn4_forward.12} parent=5 // pred_fallthru
      _
    %p124 = scmp.lt.s32.totalorder %s9, 2
    // Predicated region
    $region21: #{ggcnn4_forward.12} parent=5 // pred_check
      %p125 = pneg %p124
    $region22: #{ggcnn4_forward.12} parent=5 // pred_check_branch
      %127 = sbr.rel (%p125) target = $region24
    $region23: #{ggcnn4_forward.12} parent=5 // pred_region
      // Predicated region
      $region25: #{ggcnn4_forward.12} parent=23 // pred_check
        %p128 = pneg %p29
      $region26: #{ggcnn4_forward.12} parent=23 // pred_check_branch
        %130 = sbr.rel (%p128) target = $region28
      $region27: #{ggcnn4_forward.12} parent=23 // pred_region
        %p131 = scmp.lt.s32.totalorder %s9, 1
        %s132 = scalar_select %p131, %s9, 1
        %s133 = smul.addr %s132, 50
        %s134 = smul.addr %s133, 8
        %s135 = scalar_lea.vmem %s0, %s134
      $region28: #{ggcnn4_forward.12} parent=23 // pred_fallthru
        _
    $region24: #{ggcnn4_forward.12} parent=5 // pred_fallthru
      _
    %p136 = scmp.le.s32.totalorder 1, %s9
    %p137 = scmp.lt.s32.totalorder %s9, 3
    %p138 = pnand %p136, %p137
    %p139 = pneg %p138
    // Predicated region
    $region29: #{ggcnn4_forward.12} parent=5 // pred_check
      _
    $region30: #{ggcnn4_forward.12} parent=5 // pred_check_branch
      %141 = sbr.rel (%p138) target = $region32
    $region31: #{ggcnn4_forward.12} parent=5 // pred_region
      %s142 = ssub.s32 %s9, 1
      %p143 = scmp.lt.s32.totalorder %s14, 1
      %s144 = scalar_select %p143, %s14, 1
      %s145 = smul.addr %s144, 50
      %s146 = smul.addr %s145, 8
      %s147 = scalar_lea.vmem %s0, %s146
      %p148 = pneg %p35
      %p149 = pneg %p32
      %p150 = pneg %p56
      %p151 = pneg %p53
      %p152 = pneg %p77
      %p153 = pneg %p74
      %p154 = pneg %p103
      %p155 = pneg %p100
      %p156 = scmp.lt.s32.totalorder %s14, 1
      %s157 = scalar_select %p156, %s14, 1
      %s158 = smul.addr %s157, 4
      %s159 = smul.addr %s158, 8
      %s160 = scalar_lea.vmem %s3, %s159
      %p161 = scmp.lt.s32.totalorder %s14, 1
      %s162 = scalar_select %p161, %s14, 1
      %s163 = smul.addr %s162, 50
      %s164 = smul.addr %s163, 8
      %s165 = scalar_lea.vmem %s0, %s164
      %p166 = scmp.lt.s32.totalorder %s14, 1
      %s167 = scalar_select %p166, %s14, 1
      %s168 = smul.addr %s167, 4
      %s169 = smul.addr %s168, 8
      %s170 = scalar_lea.vmem %s3, %s169
      %v171 = vld [vmem:[%s165] sm:$0xff]
      %v172 = vld [vmem:[%s165 + $0x8] sm:$0xff]
      %v173 = vld [vmem:[%s165 + $0x10] sm:$0xff]
      %v174 = vld [vmem:[%s165 + $0x18] sm:$0xff]
      %v175 = vld [vmem:[%s165 + $0x20] sm:$0xff]
      %v176 = vld [vmem:[%s165 + $0x28] sm:$0xff]
      %v177 = vld [vmem:[%s165 + $0x30] sm:$0xff]
      %v178 = vld [vmem:[%s165 + $0x38] sm:$0xff]
      %v179 = vld [vmem:[%s165 + $0x40] sm:$0xff]
      %v180 = vld [vmem:[%s165 + $0x48] sm:$0xff]
      %v181 = vld [vmem:[%s165 + $0x50] sm:$0xff]
      %v182 = vld [vmem:[%s165 + $0x58] sm:$0xff]
      %v183 = vld [vmem:[%s165 + $0x60] sm:$0xff]
      %v184 = vld [vmem:[%s165 + $0x68] sm:$0xff]
      %v185 = vld [vmem:[%s165 + $0x70] sm:$0xff]
      %v186 = vld [vmem:[%s165 + $0x78] sm:$0xff]
      %v187 = vld [vmem:[%s165 + $0x80] sm:$0xff]
      %v188 = vld [vmem:[%s165 + $0x88] sm:$0xff]
      %v189 = vld [vmem:[%s165 + $0x90] sm:$0xff]
      %v190 = vld [vmem:[%s165 + $0x98] sm:$0xff]
      %v191 = vld [vmem:[%s165 + $0xa0] sm:$0xff]
      %v192 = vld [vmem:[%s165 + $0xa8] sm:$0xff]
      %v193 = vld [vmem:[%s165 + $0xb0] sm:$0xff]
      %v194 = vld [vmem:[%s165 + $0xb8] sm:$0xff]
      %v195 = vld [vmem:[%s165 + $0xc0] sm:$0xff]
      %v196 = vld [vmem:[%s165 + $0xc8] sm:$0xff]
      %v197 = vld [vmem:[%s165 + $0xd0] sm:$0xff]
      %v198 = vld [vmem:[%s165 + $0xd8] sm:$0xff]
      %v199 = vld [vmem:[%s165 + $0xe0] sm:$0xff]
      %v200 = vld [vmem:[%s165 + $0xe8] sm:$0xff]
      %v201 = vld [vmem:[%s165 + $0xf0] sm:$0xff]
      %v202 = vld [vmem:[%s165 + $0xf8] sm:$0xff]
      %v203 = vld [vmem:[%s165 + $0x100] sm:$0xff]
      %v204 = vld [vmem:[%s165 + $0x108] sm:$0xff]
      %v205 = vld [vmem:[%s165 + $0x110] sm:$0xff]
      %v206 = vld [vmem:[%s165 + $0x118] sm:$0xff]
      %v207 = vld [vmem:[%s165 + $0x120] sm:$0xff]
      %v208 = vld [vmem:[%s165 + $0x128] sm:$0xff]
      %v209 = vld [vmem:[%s165 + $0x130] sm:$0xff]
      %v210 = vld [vmem:[%s165 + $0x138] sm:$0xff]
      %v211 = vld [vmem:[%s165 + $0x140] sm:$0xff]
      %v212 = vld [vmem:[%s165 + $0x148] sm:$0xff]
      %v213 = vld [vmem:[%s165 + $0x150] sm:$0xff]
      %v214 = vld [vmem:[%s165 + $0x158] sm:$0xff]
      %v215 = vld [vmem:[%s165 + $0x160] sm:$0xff]
      %v216 = vld [vmem:[%s165 + $0x168] sm:$0xff]
      %v217 = vld [vmem:[%s165 + $0x170] sm:$0xff]
      %v218 = vld [vmem:[%s165 + $0x178] sm:$0xff]
      %v219 = vld [vmem:[%s165 + $0x180] sm:$0xff]
      %v220 = vld [vmem:[%s165 + $0x188] sm:$0xff]
      %v221 = vld [vmem:[%s1] sm:$0xff]
      %v222 = vld [vmem:[%s1 + $0x8] sm:$0xff]
      %v223 = vld [vmem:[%s1 + $0x10] sm:$0xff]
      %v224 = vld [vmem:[%s1 + $0x18] sm:$0xff]
      %v225 = vld [vmem:[%s1 + $0x20] sm:$0xff]
      %v226 = vld [vmem:[%s1 + $0x28] sm:$0xff]
      %v227 = vld [vmem:[%s1 + $0x30] sm:$0xff]
      %v228 = vld [vmem:[%s1 + $0x38] sm:$0xff]
      %v229 = vld [vmem:[%s1 + $0x40] sm:$0xff]
      %v230 = vld [vmem:[%s1 + $0x48] sm:$0xff]
      %v231 = vld [vmem:[%s1 + $0x50] sm:$0xff]
      %v232 = vld [vmem:[%s1 + $0x58] sm:$0xff]
      %v233 = vld [vmem:[%s1 + $0x60] sm:$0xff]
      %v234 = vld [vmem:[%s1 + $0x68] sm:$0xff]
      %v235 = vld [vmem:[%s1 + $0x70] sm:$0xff]
      %v236 = vld [vmem:[%s1 + $0x78] sm:$0xff]
      %v237 = vld [vmem:[%s2] sm:$0xff]
      %v238 = vld [vmem:[%s2 + $0x8] sm:$0xff]
      %v239 = vld [vmem:[%s2 + $0x10] sm:$0xff]
      %v240 = vld [vmem:[%s2 + $0x18] sm:$0xff]
      %242 = vset.pattern.permute.xlu0 0
      %243 = vperm.xlu0 %242, %v237
      %v244 = vpop.permute.xlu0 %243
      %247 = vset.pattern.permute.xlu0 0
      %248 = vperm.xlu0 %247, %v238
      %v249 = vpop.permute.xlu0 %248
      %252 = vset.pattern.permute.xlu0 0
      %253 = vperm.xlu0 %252, %v239
      %v254 = vpop.permute.xlu0 %253
      %257 = vset.pattern.permute.xlu0 0
      %258 = vperm.xlu0 %257, %v240
      %v259 = vpop.permute.xlu0 %258
      %vm261 = vcmask 130048
      %v263 = vsel %vm261, %v224, 0
      %v266 = vsel %vm261, %v228, 0
      %v269 = vsel %vm261, %v232, 0
      %v272 = vsel %vm261, %v236, 0
      %274 = vmatprep.subr.mxu0 0.0
      %275 = vmatpush1.msra.mxu0 %v171
      %276 = vmatprep.subr.mxu0 0.0
      %277 = vmatpush1.msra.mxu0 %v172
      %278 = vmatprep.subr.mxu0 0.0
      %279 = vmatpush1.msra.mxu0 %v173
      %280 = vmatprep.subr.mxu0 0.0
      %281 = vmatpush1.msra.mxu0 %v174
      %282 = vmatprep.subr.mxu0 0.0
      %283 = vmatpush1.msra.mxu0 %v175
      %284 = vmatprep.subr.mxu0 0.0
      %285 = vmatpush1.msra.mxu0 %v176
      %286 = vmatprep.subr.mxu0 0.0
      %287 = vmatpush1.msra.mxu0 %v177
      %288 = vmatprep.subr.mxu0 0.0
      %289 = vmatpush1.msra.mxu0 %v178
      %290 = vmatprep.subr.mxu0 0.0
      %291 = vmatpush1.msra.mxu0 %v179
      %292 = vmatprep.subr.mxu0 0.0
      %293 = vmatpush1.msra.mxu0 %v180
      %294 = vmatprep.subr.mxu0 0.0
      %295 = vmatpush1.msra.mxu0 %v181
      %296 = vmatprep.subr.mxu0 0.0
      %297 = vmatpush1.msra.mxu0 %v182
      %298 = vmatprep.subr.mxu0 0.0
      %299 = vmatpush1.msra.mxu0 %v183
      %300 = vmatprep.subr.mxu0 0.0
      %301 = vmatpush1.msra.mxu0 %v184
      %302 = vmatprep.subr.mxu0 0.0
      %303 = vmatpush1.msra.mxu0 %v185
      %304 = vmatprep.subr.mxu0 0.0
      %305 = vmatpush1.msra.mxu0 %v186
      %306 = vmatprep.subr.mxu0 0.0
      %307 = vmatpush1.msra.mxu0 %v187
      %308 = vmatprep.subr.mxu0 0.0
      %309 = vmatpush1.msra.mxu0 %v188
      %310 = vmatprep.subr.mxu0 0.0
      %311 = vmatpush1.msra.mxu0 %v189
      %312 = vmatprep.subr.mxu0 0.0
      %313 = vmatpush1.msra.mxu0 %v190
      %314 = vmatprep.subr.mxu0 0.0
      %315 = vmatpush1.msra.mxu0 %v191
      %316 = vmatprep.subr.mxu0 0.0
      %317 = vmatpush1.msra.mxu0 %v192
      %318 = vmatprep.subr.mxu0 0.0
      %319 = vmatpush1.msra.mxu0 %v193
      %320 = vmatprep.subr.mxu0 0.0
      %321 = vmatpush1.msra.mxu0 %v194
      %322 = vmatprep.subr.mxu0 0.0
      %323 = vmatpush1.msra.mxu0 %v195
      %324 = vmatprep.subr.mxu0 0.0
      %325 = vmatpush1.msra.mxu0 %v196
      %326 = vmatprep.subr.mxu0 0.0
      %327 = vmatpush1.msra.mxu0 %v197
      %328 = vmatprep.subr.mxu0 0.0
      %329 = vmatpush1.msra.mxu0 %v198
      %330 = vmatprep.subr.mxu0 0.0
      %331 = vmatpush1.msra.mxu0 %v199
      %332 = vmatprep.subr.mxu0 0.0
      %333 = vmatpush1.msra.mxu0 %v200
      %334 = vmatprep.subr.mxu0 0.0
      %335 = vmatpush1.msra.mxu0 %v201
      %336 = vmatprep.subr.mxu0 0.0
      %337 = vmatpush1.msra.mxu0 %v202
      %338 = vmatprep.mubr.f32.mxu0 %v222
      %339 = vmatmul.mubr.f32.gmra.mrb[0].mxu0 %v221
      %v340 = vpop.f32.mrb[0].mxu0
      %v341 = vadd.f32 %v244, %v340
      %v342 = vpop.f32.mrb[0].mxu0
      %343 = vmatprep.mubr.f32.mxu0 %v226
      %344 = vmatmul.mubr.f32.gmra.mrb[0].mxu0 %v225
      %v345 = vpop.f32.mrb[0].mxu0
      %v346 = vadd.f32 %v249, %v345
      %v347 = vpop.f32.mrb[0].mxu0
      %348 = vmatprep.mubr.f32.mxu0 %v230
      %349 = vmatmul.mubr.f32.gmra.mrb[0].mxu0 %v229
      %v350 = vpop.f32.mrb[0].mxu0
      %v351 = vadd.f32 %v254, %v350
      %v352 = vpop.f32.mrb[0].mxu0
      %353 = vmatprep.mubr.f32.mxu0 %v234
      %354 = vmatmul.mubr.f32.gmra.mrb[0].mxu0 %v233
      %v355 = vpop.f32.mrb[0].mxu0
      %v356 = vadd.f32 %v259, %v355
      %v357 = vpop.f32.mrb[0].mxu0
      %358 = vdwg.mxu0
      %359 = vmatprep.subr.mxu0 0.0
      %360 = vmatpush1.msra.mxu0 %v203
      %361 = vmatprep.subr.mxu0 0.0
      %362 = vmatpush1.msra.mxu0 %v204
      %363 = vmatprep.subr.mxu0 0.0
      %364 = vmatpush1.msra.mxu0 %v205
      %365 = vmatprep.subr.mxu0 0.0
      %366 = vmatpush1.msra.mxu0 %v206
      %367 = vmatprep.subr.mxu0 0.0
      %368 = vmatpush1.msra.mxu0 %v207
      %369 = vmatprep.subr.mxu0 0.0
      %370 = vmatpush1.msra.mxu0 %v208
      %371 = vmatprep.subr.mxu0 0.0
      %372 = vmatpush1.msra.mxu0 %v209
      %373 = vmatprep.subr.mxu0 0.0
      %374 = vmatpush1.msra.mxu0 %v210
      %375 = vmatprep.subr.mxu0 0.0
      %376 = vmatpush1.msra.mxu0 %v211
      %377 = vmatprep.subr.mxu0 0.0
      %378 = vmatpush1.msra.mxu0 %v212
      %379 = vmatprep.subr.mxu0 0.0
      %380 = vmatpush1.msra.mxu0 %v213
      %381 = vmatprep.subr.mxu0 0.0
      %382 = vmatpush1.msra.mxu0 %v214
      %383 = vmatprep.subr.mxu0 0.0
      %384 = vmatpush1.msra.mxu0 %v215
      %385 = vmatprep.subr.mxu0 0.0
      %386 = vmatpush1.msra.mxu0 %v216
      %387 = vmatprep.subr.mxu0 0.0
      %388 = vmatpush1.msra.mxu0 %v217
      %389 = vmatprep.subr.mxu0 0.0
      %390 = vmatpush1.msra.mxu0 %v218
      %391 = vmatprep.subr.mxu0 0.0
      %392 = vmatpush1.msra.mxu0 %v219
      %393 = vmatprep.subr.mxu0 0.0
      %394 = vmatpush1.msra.mxu0 %v220
      %395 = vmatprep.subr.mxu0 0.0
      %396 = vmatpush1.msra.mxu0 0.0
      %397 = vmatprep.subr.mxu0 0.0
      %398 = vmatpush1.msra.mxu0 0.0
      %399 = vmatprep.subr.mxu0 0.0
      %400 = vmatpush1.msra.mxu0 0.0
      %401 = vmatprep.subr.mxu0 0.0
      %402 = vmatpush1.msra.mxu0 0.0
      %403 = vmatprep.subr.mxu0 0.0
      %404 = vmatpush1.msra.mxu0 0.0
      %405 = vmatprep.subr.mxu0 0.0
      %406 = vmatpush1.msra.mxu0 0.0
      %407 = vmatprep.subr.mxu0 0.0
      %408 = vmatpush1.msra.mxu0 0.0
      %409 = vmatprep.subr.mxu0 0.0
      %410 = vmatpush1.msra.mxu0 0.0
      %411 = vmatprep.subr.mxu0 0.0
      %412 = vmatpush1.msra.mxu0 0.0
      %413 = vmatprep.subr.mxu0 0.0
      %414 = vmatpush1.msra.mxu0 0.0
      %415 = vmatprep.subr.mxu0 0.0
      %416 = vmatpush1.msra.mxu0 0.0
      %417 = vmatprep.subr.mxu0 0.0
      %418 = vmatpush1.msra.mxu0 0.0
      %419 = vmatprep.subr.mxu0 0.0
      %420 = vmatpush1.msra.mxu0 0.0
      %421 = vmatprep.subr.mxu0 0.0
      %422 = vmatpush1.msra.mxu0 0.0
      %423 = vmatprep.mubr.f32.mxu0 %v263
      %424 = vmatmul.mubr.f32.gmra.mrb[0].mxu0 %v223
      %v425 = vpop.f32.mrb[0].mxu0
      %v426 = vadd.f32 %v341, %v425
      %v427 = vpop.f32.mrb[0].mxu0
      %428 = vmatprep.mubr.f32.mxu0 %v266
      %429 = vmatmul.mubr.f32.gmra.mrb[0].mxu0 %v227
      %v430 = vpop.f32.mrb[0].mxu0
      %v431 = vadd.f32 %v346, %v430
      %v432 = vpop.f32.mrb[0].mxu0
      %433 = vmatprep.mubr.f32.mxu0 %v269
      %434 = vmatmul.mubr.f32.gmra.mrb[0].mxu0 %v231
      %v435 = vpop.f32.mrb[0].mxu0
      %v436 = vadd.f32 %v351, %v435
      %v437 = vpop.f32.mrb[0].mxu0
      %438 = vmatprep.mubr.f32.mxu0 %v272
      %439 = vmatmul.mubr.f32.gmra.mrb[0].mxu0 %v235
      %v440 = vpop.f32.mrb[0].mxu0
      %v441 = vadd.f32 %v356, %v440
      %v442 = vpop.f32.mrb[0].mxu0
      %443 = vdwg.mxu0
      %v444 = vmax.f32 %v426, 0.0
      %v445 = vmax.f32 %v431, 0.0
      %v446 = vmax.f32 %v436, 0.0
      %v447 = vmax.f32 %v441, 0.0
      %vm448 = vcmask 523264
      %449 = vst.msk [vmem:[%s170] sm:$0xff] %vm448, %v444
      %450 = vst.msk [vmem:[%s170 + $0x8] sm:$0xff] %vm448, %v445
      %451 = vst.msk [vmem:[%s170 + $0x10] sm:$0xff] %vm448, %v446
      %452 = vst.msk [vmem:[%s170 + $0x18] sm:$0xff] %vm448, %v447
      %p453 = scmp.lt.s32.totalorder %s14, 1
      %s454 = scalar_select %p453, %s14, 1
      %s455 = smul.addr %s454, 4
      %s456 = smul.addr %s455, 8
      %s457 = scalar_lea.vmem %s3, %s456
      // Predicated region
      $region33: #{ggcnn4_forward.12} parent=31 // pred_check
        %p458 = pneg %p100
      $region34: #{ggcnn4_forward.12} parent=31 // pred_check_branch
        %460 = sbr.rel (%p458) target = $region36
      $region35: #{ggcnn4_forward.12} parent=31 // pred_region
        _
      $region36: #{ggcnn4_forward.12} parent=31 // pred_fallthru
        _
    $region32: #{ggcnn4_forward.12} parent=5 // pred_fallthru
      _
    %p461 = scmp.le.s32.totalorder 2, %s9
    // Predicated region
    $region37: #{ggcnn4_forward.12} parent=5 // pred_check
      %p462 = pneg %p461
    $region38: #{ggcnn4_forward.12} parent=5 // pred_check_branch
      %464 = sbr.rel (%p462) target = $region40
    $region39: #{ggcnn4_forward.12} parent=5 // pred_region
      %s465 = ssub.s32 %s9, 2
      // Predicated region
      $region41: #{ggcnn4_forward.12} parent=39 // pred_check
        %p466 = pneg %p106
      $region42: #{ggcnn4_forward.12} parent=39 // pred_check_branch
        %468 = sbr.rel (%p466) target = $region44
      $region43: #{ggcnn4_forward.12} parent=39 // pred_region
        %p469 = scmp.lt.s32.totalorder %s15, 1
        %s470 = scalar_select %p469, %s15, 1
        %s471 = smul.addr %s470, 4
        %s472 = smul.addr %s471, 8
        %s473 = scalar_lea.vmem %s3, %s472
      $region44: #{ggcnn4_forward.12} parent=39 // pred_fallthru
        _
    $region40: #{ggcnn4_forward.12} parent=5 // pred_fallthru
      _
  $region6: #{ggcnn4_forward.12} parent=0 // loop_footer
    %s13 = sadd.s32 1, %s9
  $region7: #{ggcnn4_forward.12} parent=0 // loop_footer_branch
    %8 = sbr.rel target = $region3
  $region8: #{ggcnn4_forward.12} parent=0 // loop_exit
    _

// kernel: ggcnn4_forward.13
$region0: #{ggcnn4_forward.13}
  #allocation0 [shape = 'u32[]', space=smem, size = 0x4, offset = 0x4, fixed_abs, tag = 'smem constant byte address 0x4 - core index']
  #allocation1 [shape = 'u32[144,128]{1,0:T(1,128)}', space=vmem, size = 0x12000, scoped, tag = 'internal scratch']
  %s0 = inlined_call_operand.vmem [shape: f32[2,800,64], index: 0, kind: input, shape index: {}]
  %s1 = inlined_call_operand.vmem [shape: f32[32,800], index: 1, kind: input, shape index: {}]
  %s2 = inlined_call_operand.vmem [shape: f32[32,1], index: 2, kind: input, shape index: {}]
  %s3 = inlined_call_operand.vmem [shape: f32[2,32,64], index: 3, kind: output, shape index: {}]
  %s4 = sld [smem:[#allocation0]]
  $region45: #{ggcnn4_forward.13} parent=0
    _
  %s6 = ssub.s32 1, %s4
  %s7 = scalar_select 0, %s6, %s4
  loop: start=0, step=1, limit=4
  $region2: #{ggcnn4_forward.13} parent=0 // loop_pre_header
    _
  $region3: #{ggcnn4_forward.13} parent=0 // loop_header
    %s9 = sphi 0, %s13
    %p10 = scmp.ge.s32.totalorder %s9, 4
    %s19 = sphi 0, %s21
    %s22 = sphi 0, %s19
    %s23 = sphi 0, %s22
    %s39 = sphi 0, %s23
    %s43 = sphi 0, %s43
    %s45 = sphi 0, %s43
    %s46 = sphi 0, %s45
    %s60 = sphi 0, %s46
    %s64 = sphi 0, %s64
    %s66 = sphi 0, %s64
    %s67 = sphi 0, %s66
    %s81 = sphi 0, %s67
    %s87 = sphi 0, %s89
    %s90 = sphi 0, %s87
    %s91 = sphi 0, %s90
    %s107 = sphi 0, %s91
  $region4: #{ggcnn4_forward.13} parent=0 // loop_header_branch
    %12 = sbr.rel (%p10) target = $region8
  $region5: #{ggcnn4_forward.13} parent=0 // loop_body
    %s14 = ssub.s32 %s9, 1
    %s15 = ssub.s32 %s9, 2
    %s16 = sadd.s32 %s9, 1
    %s17 = ssub.s32 %s9, %s16
    %p18 = scmp.eq.s32.totalorder %s17, 0
    %s20 = sadd.s32 %s19, 1
    %s21 = scalar_select %p18, %s19, %s20
    %p24 = pneg %p18
    %p25 = scmp.eq.s32.totalorder %s9, 1
    %p26 = por %p24, %p25
    %p27 = scmp.ne.s32.totalorder %s19, %s22
    %p28 = scmp.eq.s32.totalorder %s9, 0
    %p29 = por %p27, %p28
    %p30 = scmp.ne.s32.totalorder %s19, %s22
    %p31 = scmp.eq.s32.totalorder %s14, 1
    %p32 = por %p30, %p31
    %p33 = scmp.ne.s32.totalorder %s22, %s23
    %p34 = scmp.eq.s32.totalorder %s14, 0
    %p35 = por %p33, %p34
    %p36 = scmp.ne.s32.totalorder %s22, %s23
    %p37 = scmp.eq.s32.totalorder %s15, 1
    %p38 = por %p36, %p37
    %p40 = scmp.ne.s32.totalorder %s23, %s39
    %p41 = scmp.eq.s32.totalorder %s15, 0
    %p42 = por %p40, %p41
    %s44 = sadd.s32 %s43, 1
    %p47 = scmp.eq.s32.totalorder %s9, 1
    %p48 = scmp.ne.s32.totalorder %s43, %s45
    %p49 = scmp.eq.s32.totalorder %s9, 0
    %p50 = por %p48, %p49
    %p51 = scmp.ne.s32.totalorder %s43, %s45
    %p52 = scmp.eq.s32.totalorder %s14, 1
    %p53 = por %p51, %p52
    %p54 = scmp.ne.s32.totalorder %s45, %s46
    %p55 = scmp.eq.s32.totalorder %s14, 0
    %p56 = por %p54, %p55
    %p57 = scmp.ne.s32.totalorder %s45, %s46
    %p58 = scmp.eq.s32.totalorder %s15, 1
    %p59 = por %p57, %p58
    %p61 = scmp.ne.s32.totalorder %s46, %s60
    %p62 = scmp.eq.s32.totalorder %s15, 0
    %p63 = por %p61, %p62
    %s65 = sadd.s32 %s64, 1
    %p68 = scmp.eq.s32.totalorder %s9, 1
    %p69 = scmp.ne.s32.totalorder %s64, %s66
    %p70 = scmp.eq.s32.totalorder %s9, 0
    %p71 = por %p69, %p70
    %p72 = scmp.ne.s32.totalorder %s64, %s66
    %p73 = scmp.eq.s32.totalorder %s14, 1
    %p74 = por %p72, %p73
    %p75 = scmp.ne.s32.totalorder %s66, %s67
    %p76 = scmp.eq.s32.totalorder %s14, 0
    %p77 = por %p75, %p76
    %p78 = scmp.ne.s32.totalorder %s66, %s67
    %p79 = scmp.eq.s32.totalorder %s15, 1
    %p80 = por %p78, %p79
    %p82 = scmp.ne.s32.totalorder %s67, %s81
    %p83 = scmp.eq.s32.totalorder %s15, 0
    %p84 = por %p82, %p83
    %s85 = ssub.s32 %s9, %s16
    %p86 = scmp.eq.s32.totalorder %s85, 0
    %s88 = sadd.s32 %s87, 1
    %s89 = scalar_select %p86, %s87, %s88
    %p92 = pneg %p86
    %p93 = scmp.eq.s32.totalorder %s9, 1
    %p94 = por %p92, %p93
    %p95 = scmp.ne.s32.totalorder %s87, %s90
    %p96 = scmp.eq.s32.totalorder %s9, 0
    %p97 = por %p95, %p96
    %p98 = scmp.ne.s32.totalorder %s87, %s90
    %p99 = scmp.eq.s32.totalorder %s14, 1
    %p100 = por %p98, %p99
    %p101 = scmp.ne.s32.totalorder %s90, %s91
    %p102 = scmp.eq.s32.totalorder %s14, 0
    %p103 = por %p101, %p102
    %p104 = scmp.ne.s32.totalorder %s90, %s91
    %p105 = scmp.eq.s32.totalorder %s15, 1
    %p106 = por %p104, %p105
    %p108 = scmp.ne.s32.totalorder %s91, %s107
    %p109 = scmp.eq.s32.totalorder %s15, 0
    %p110 = por %p108, %p109
    %p111 = scmp.le.s32.totalorder 1, %s9
    %p112 = scmp.lt.s32.totalorder %s9, 3
    %p113 = pnand %p111, %p112
    %p114 = pneg %p113
    // Predicated region
    $region9: #{ggcnn4_forward.13} parent=5 // pred_check
      _
    $region10: #{ggcnn4_forward.13} parent=5 // pred_check_branch
      %116 = sbr.rel (%p113) target = $region12
    $region11: #{ggcnn4_forward.13} parent=5 // pred_region
      %s117 = ssub.s32 %s9, 1
      // Predicated region
      $region13: #{ggcnn4_forward.13} parent=11 // pred_check
        %p118 = pneg %p56
      $region14: #{ggcnn4_forward.13} parent=11 // pred_check_branch
        %120 = sbr.rel (%p118) target = $region16
      $region15: #{ggcnn4_forward.13} parent=11 // pred_region
        _
      $region16: #{ggcnn4_forward.13} parent=11 // pred_fallthru
        _
      // Predicated region
      $region17: #{ggcnn4_forward.13} parent=11 // pred_check
        %p121 = pneg %p77
      $region18: #{ggcnn4_forward.13} parent=11 // pred_check_branch
        %123 = sbr.rel (%p121) target = $region20
      $region19: #{ggcnn4_forward.13} parent=11 // pred_region
        _
      $region20: #{ggcnn4_forward.13} parent=11 // pred_fallthru
        _
    $region12: #{ggcnn4_forward.13} parent=5 // pred_fallthru
      _
    %p124 = scmp.lt.s32.totalorder %s9, 2
    // Predicated region
    $region21: #{ggcnn4_forward.13} parent=5 // pred_check
      %p125 = pneg %p124
    $region22: #{ggcnn4_forward.13} parent=5 // pred_check_branch
      %127 = sbr.rel (%p125) target = $region24
    $region23: #{ggcnn4_forward.13} parent=5 // pred_region
      // Predicated region
      $region25: #{ggcnn4_forward.13} parent=23 // pred_check
        %p128 = pneg %p29
      $region26: #{ggcnn4_forward.13} parent=23 // pred_check_branch
        %130 = sbr.rel (%p128) target = $region28
      $region27: #{ggcnn4_forward.13} parent=23 // pred_region
        %p131 = scmp.lt.s32.totalorder %s9, 1
        %s132 = scalar_select %p131, %s9, 1
        %s133 = smul.addr %s132, 100
        %s134 = smul.addr %s133, 8
        %s135 = scalar_lea.vmem %s0, %s134
      $region28: #{ggcnn4_forward.13} parent=23 // pred_fallthru
        _
    $region24: #{ggcnn4_forward.13} parent=5 // pred_fallthru
      _
    %p136 = scmp.le.s32.totalorder 1, %s9
    %p137 = scmp.lt.s32.totalorder %s9, 3
    %p138 = pnand %p136, %p137
    %p139 = pneg %p138
    // Predicated region
    $region29: #{ggcnn4_forward.13} parent=5 // pred_check
      _
    $region30: #{ggcnn4_forward.13} parent=5 // pred_check_branch
      %141 = sbr.rel (%p138) target = $region32
    $region31: #{ggcnn4_forward.13} parent=5 // pred_region
      %s142 = ssub.s32 %s9, 1
      %p143 = scmp.lt.s32.totalorder %s14, 1
      %s144 = scalar_select %p143, %s14, 1
      %s145 = smul.addr %s144, 100
      %s146 = smul.addr %s145, 8
      %s147 = scalar_lea.vmem %s0, %s146
      %p148 = pneg %p35
      %p149 = pneg %p32
      %p150 = pneg %p56
      %p151 = pneg %p53
      %p152 = pneg %p77
      %p153 = pneg %p74
      %p154 = pneg %p103
      %p155 = pneg %p100
      %p156 = scmp.lt.s32.totalorder %s14, 1
      %s157 = scalar_select %p156, %s14, 1
      %s158 = smul.addr %s157, 4
      %s159 = smul.addr %s158, 8
      %s160 = scalar_lea.vmem %s3, %s159
      %p161 = scmp.lt.s32.totalorder %s14, 1
      %s162 = scalar_select %p161, %s14, 1
      %s163 = smul.addr %s162, 100
      %s164 = smul.addr %s163, 8
      %s165 = scalar_lea.vmem %s0, %s164
      %p166 = scmp.lt.s32.totalorder %s14, 1
      %s167 = scalar_select %p166, %s14, 1
      %s168 = smul.addr %s167, 4
      %s169 = smul.addr %s168, 8
      %s170 = scalar_lea.vmem %s3, %s169
      %v171 = vld [vmem:[%s165] sm:$0xff]
      %v172 = vld [vmem:[%s165 + $0x8] sm:$0xff]
      %v173 = vld [vmem:[%s165 + $0x10] sm:$0xff]
      %v174 = vld [vmem:[%s165 + $0x18] sm:$0xff]
      %v175 = vld [vmem:[%s165 + $0x20] sm:$0xff]
      %v176 = vld [vmem:[%s165 + $0x28] sm:$0xff]
      %v177 = vld [vmem:[%s165 + $0x30] sm:$0xff]
      %v178 = vld [vmem:[%s165 + $0x38] sm:$0xff]
      %v179 = vld [vmem:[%s165 + $0x40] sm:$0xff]
      %v180 = vld [vmem:[%s165 + $0x48] sm:$0xff]
      %v181 = vld [vmem:[%s165 + $0x50] sm:$0xff]
      %v182 = vld [vmem:[%s165 + $0x58] sm:$0xff]
      %v183 = vld [vmem:[%s165 + $0x60] sm:$0xff]
      %v184 = vld [vmem:[%s165 + $0x68] sm:$0xff]
      %v185 = vld [vmem:[%s165 + $0x70] sm:$0xff]
      %v186 = vld [vmem:[%s165 + $0x78] sm:$0xff]
      %v187 = vld [vmem:[%s165 + $0x80] sm:$0xff]
      %v188 = vld [vmem:[%s165 + $0x88] sm:$0xff]
      %v189 = vld [vmem:[%s165 + $0x90] sm:$0xff]
      %v190 = vld [vmem:[%s165 + $0x98] sm:$0xff]
      %v191 = vld [vmem:[%s165 + $0xa0] sm:$0xff]
      %v192 = vld [vmem:[%s165 + $0xa8] sm:$0xff]
      %v193 = vld [vmem:[%s165 + $0xb0] sm:$0xff]
      %v194 = vld [vmem:[%s165 + $0xb8] sm:$0xff]
      %v195 = vld [vmem:[%s165 + $0xc0] sm:$0xff]
      %v196 = vld [vmem:[%s165 + $0xc8] sm:$0xff]
      %v197 = vld [vmem:[%s165 + $0xd0] sm:$0xff]
      %v198 = vld [vmem:[%s165 + $0xd8] sm:$0xff]
      %v199 = vld [vmem:[%s165 + $0xe0] sm:$0xff]
      %v200 = vld [vmem:[%s165 + $0xe8] sm:$0xff]
      %v201 = vld [vmem:[%s165 + $0xf0] sm:$0xff]
      %v202 = vld [vmem:[%s165 + $0xf8] sm:$0xff]
      %v203 = vld [vmem:[%s165 + $0x100] sm:$0xff]
      %v204 = vld [vmem:[%s165 + $0x108] sm:$0xff]
      %v205 = vld [vmem:[%s165 + $0x110] sm:$0xff]
      %v206 = vld [vmem:[%s165 + $0x118] sm:$0xff]
      %v207 = vld [vmem:[%s165 + $0x120] sm:$0xff]
      %v208 = vld [vmem:[%s165 + $0x128] sm:$0xff]
      %v209 = vld [vmem:[%s165 + $0x130] sm:$0xff]
      %v210 = vld [vmem:[%s165 + $0x138] sm:$0xff]
      %v211 = vld [vmem:[%s165 + $0x140] sm:$0xff]
      %v212 = vld [vmem:[%s165 + $0x148] sm:$0xff]
      %v213 = vld [vmem:[%s165 + $0x150] sm:$0xff]
      %v214 = vld [vmem:[%s165 + $0x158] sm:$0xff]
      %v215 = vld [vmem:[%s165 + $0x160] sm:$0xff]
      %v216 = vld [vmem:[%s165 + $0x168] sm:$0xff]
      %v217 = vld [vmem:[%s165 + $0x170] sm:$0xff]
      %v218 = vld [vmem:[%s165 + $0x178] sm:$0xff]
      %v219 = vld [vmem:[%s165 + $0x180] sm:$0xff]
      %v220 = vld [vmem:[%s165 + $0x188] sm:$0xff]
      %v221 = vld [vmem:[%s165 + $0x190] sm:$0xff]
      %v222 = vld [vmem:[%s165 + $0x198] sm:$0xff]
      %v223 = vld [vmem:[%s165 + $0x1a0] sm:$0xff]
      %v224 = vld [vmem:[%s165 + $0x1a8] sm:$0xff]
      %v225 = vld [vmem:[%s165 + $0x1b0] sm:$0xff]
      %v226 = vld [vmem:[%s165 + $0x1b8] sm:$0xff]
      %v227 = vld [vmem:[%s165 + $0x1c0] sm:$0xff]
      %v228 = vld [vmem:[%s165 + $0x1c8] sm:$0xff]
      %v229 = vld [vmem:[%s165 + $0x1d0] sm:$0xff]
      %v230 = vld [vmem:[%s165 + $0x1d8] sm:$0xff]
      %v231 = vld [vmem:[%s165 + $0x1e0] sm:$0xff]
      %v232 = vld [vmem:[%s165 + $0x1e8] sm:$0xff]
      %v233 = vld [vmem:[%s165 + $0x1f0] sm:$0xff]
      %v234 = vld [vmem:[%s165 + $0x1f8] sm:$0xff]
      %v235 = vld [vmem:[%s165 + $0x200] sm:$0xff]
      %v236 = vld [vmem:[%s165 + $0x208] sm:$0xff]
      %v237 = vld [vmem:[%s165 + $0x210] sm:$0xff]
      %v238 = vld [vmem:[%s165 + $0x218] sm:$0xff]
      %v239 = vld [vmem:[%s165 + $0x220] sm:$0xff]
      %v240 = vld [vmem:[%s165 + $0x228] sm:$0xff]
      %v241 = vld [vmem:[%s165 + $0x230] sm:$0xff]
      %v242 = vld [vmem:[%s165 + $0x238] sm:$0xff]
      %v243 = vld [vmem:[%s165 + $0x240] sm:$0xff]
      %v244 = vld [vmem:[%s165 + $0x248] sm:$0xff]
      %v245 = vld [vmem:[%s165 + $0x250] sm:$0xff]
      %v246 = vld [vmem:[%s165 + $0x258] sm:$0xff]
      %v247 = vld [vmem:[%s165 + $0x260] sm:$0xff]
      %v248 = vld [vmem:[%s165 + $0x268] sm:$0xff]
      %v249 = vld [vmem:[%s165 + $0x270] sm:$0xff]
      %v250 = vld [vmem:[%s165 + $0x278] sm:$0xff]
      %v251 = vld [vmem:[%s165 + $0x280] sm:$0xff]
      %v252 = vld [vmem:[%s165 + $0x288] sm:$0xff]
      %v253 = vld [vmem:[%s165 + $0x290] sm:$0xff]
      %v254 = vld [vmem:[%s165 + $0x298] sm:$0xff]
      %v255 = vld [vmem:[%s165 + $0x2a0] sm:$0xff]
      %v256 = vld [vmem:[%s165 + $0x2a8] sm:$0xff]
      %v257 = vld [vmem:[%s165 + $0x2b0] sm:$0xff]
      %v258 = vld [vmem:[%s165 + $0x2b8] sm:$0xff]
      %v259 = vld [vmem:[%s165 + $0x2c0] sm:$0xff]
      %v260 = vld [vmem:[%s165 + $0x2c8] sm:$0xff]
      %v261 = vld [vmem:[%s165 + $0x2d0] sm:$0xff]
      %v262 = vld [vmem:[%s165 + $0x2d8] sm:$0xff]
      %v263 = vld [vmem:[%s165 + $0x2e0] sm:$0xff]
      %v264 = vld [vmem:[%s165 + $0x2e8] sm:$0xff]
      %v265 = vld [vmem:[%s165 + $0x2f0] sm:$0xff]
      %v266 = vld [vmem:[%s165 + $0x2f8] sm:$0xff]
      %v267 = vld [vmem:[%s165 + $0x300] sm:$0xff]
      %v268 = vld [vmem:[%s165 + $0x308] sm:$0xff]
      %v269 = vld [vmem:[%s165 + $0x310] sm:$0xff]
      %v270 = vld [vmem:[%s165 + $0x318] sm:$0xff]
      %v271 = vld [vmem:[%s1] sm:$0xff]
      %v272 = vld [vmem:[%s1 + $0x8] sm:$0xff]
      %v273 = vld [vmem:[%s1 + $0x10] sm:$0xff]
      %v274 = vld [vmem:[%s1 + $0x18] sm:$0xff]
      %v275 = vld [vmem:[%s1 + $0x20] sm:$0xff]
      %v276 = vld [vmem:[%s1 + $0x28] sm:$0xff]
      %v277 = vld [vmem:[%s1 + $0x30] sm:$0xff]
      %v278 = vld [vmem:[%s1 + $0x38] sm:$0xff]
      %v279 = vld [vmem:[%s1 + $0x40] sm:$0xff]
      %v280 = vld [vmem:[%s1 + $0x48] sm:$0xff]
      %v281 = vld [vmem:[%s1 + $0x50] sm:$0xff]
      %v282 = vld [vmem:[%s1 + $0x58] sm:$0xff]
      %v283 = vld [vmem:[%s1 + $0x60] sm:$0xff]
      %v284 = vld [vmem:[%s1 + $0x68] sm:$0xff]
      %v285 = vld [vmem:[%s1 + $0x70] sm:$0xff]
      %v286 = vld [vmem:[%s1 + $0x78] sm:$0xff]
      %v287 = vld [vmem:[%s1 + $0x80] sm:$0xff]
      %v288 = vld [vmem:[%s1 + $0x88] sm:$0xff]
      %v289 = vld [vmem:[%s1 + $0x90] sm:$0xff]
      %v290 = vld [vmem:[%s1 + $0x98] sm:$0xff]
      %v291 = vld [vmem:[%s1 + $0xa0] sm:$0xff]
      %v292 = vld [vmem:[%s1 + $0xa8] sm:$0xff]
      %v293 = vld [vmem:[%s1 + $0xb0] sm:$0xff]
      %v294 = vld [vmem:[%s1 + $0xb8] sm:$0xff]
      %v295 = vld [vmem:[%s1 + $0xc0] sm:$0xff]
      %v296 = vld [vmem:[%s1 + $0xc8] sm:$0xff]
      %v297 = vld [vmem:[%s1 + $0xd0] sm:$0xff]
      %v298 = vld [vmem:[%s1 + $0xd8] sm:$0xff]
      %v299 = vld [vmem:[%s2] sm:$0xff]
      %v300 = vld [vmem:[%s2 + $0x8] sm:$0xff]
      %v301 = vld [vmem:[%s2 + $0x10] sm:$0xff]
      %v302 = vld [vmem:[%s2 + $0x18] sm:$0xff]
      %304 = vset.pattern.permute.xlu0 0
      %305 = vperm.xlu0 %304, %v299
      %v306 = vpop.permute.xlu0 %305
      %309 = vset.pattern.permute.xlu0 0
      %310 = vperm.xlu0 %309, %v300
      %v311 = vpop.permute.xlu0 %310
      %314 = vset.pattern.permute.xlu0 0
      %315 = vperm.xlu0 %314, %v301
      %v316 = vpop.permute.xlu0 %315
      %319 = vset.pattern.permute.xlu0 0
      %320 = vperm.xlu0 %319, %v302
      %v321 = vpop.permute.xlu0 %320
      %vm323 = vcmask 261120
      %v325 = vsel %vm323, %v277, 0
      %v328 = vsel %vm323, %v284, 0
      %v331 = vsel %vm323, %v291, 0
      %v334 = vsel %vm323, %v298, 0
      %336 = vmatprep.subr.mxu0 0.0
      %337 = vmatpush1.msra.mxu0 %v171
      %338 = vmatprep.subr.mxu0 0.0
      %339 = vmatpush1.msra.mxu0 %v172
      %340 = vmatprep.subr.mxu0 0.0
      %341 = vmatpush1.msra.mxu0 %v173
      %342 = vmatprep.subr.mxu0 0.0
      %343 = vmatpush1.msra.mxu0 %v174
      %344 = vmatprep.subr.mxu0 0.0
      %345 = vmatpush1.msra.mxu0 %v175
      %346 = vmatprep.subr.mxu0 0.0
      %347 = vmatpush1.msra.mxu0 %v176
      %348 = vmatprep.subr.mxu0 0.0
      %349 = vmatpush1.msra.mxu0 %v177
      %350 = vmatprep.subr.mxu0 0.0
      %351 = vmatpush1.msra.mxu0 %v178
      %352 = vmatprep.subr.mxu0 0.0
      %353 = vmatpush1.msra.mxu0 %v179
      %354 = vmatprep.subr.mxu0 0.0
      %355 = vmatpush1.msra.mxu0 %v180
      %356 = vmatprep.subr.mxu0 0.0
      %357 = vmatpush1.msra.mxu0 %v181
      %358 = vmatprep.subr.mxu0 0.0
      %359 = vmatpush1.msra.mxu0 %v182
      %360 = vmatprep.subr.mxu0 0.0
      %361 = vmatpush1.msra.mxu0 %v183
      %362 = vmatprep.subr.mxu0 0.0
      %363 = vmatpush1.msra.mxu0 %v184
      %364 = vmatprep.subr.mxu0 0.0
      %365 = vmatpush1.msra.mxu0 %v185
      %366 = vmatprep.subr.mxu0 0.0
      %367 = vmatpush1.msra.mxu0 %v186
      %368 = vmatprep.subr.mxu0 0.0
      %369 = vmatpush1.msra.mxu0 %v187
      %370 = vmatprep.subr.mxu0 0.0
      %371 = vmatpush1.msra.mxu0 %v188
      %372 = vmatprep.subr.mxu0 0.0
      %373 = vmatpush1.msra.mxu0 %v189
      %374 = vmatprep.subr.mxu0 0.0
      %375 = vmatpush1.msra.mxu0 %v190
      %376 = vmatprep.subr.mxu0 0.0
      %377 = vmatpush1.msra.mxu0 %v191
      %378 = vmatprep.subr.mxu0 0.0
      %379 = vmatpush1.msra.mxu0 %v192
      %380 = vmatprep.subr.mxu0 0.0
      %381 = vmatpush1.msra.mxu0 %v193
      %382 = vmatprep.subr.mxu0 0.0
      %383 = vmatpush1.msra.mxu0 %v194
      %384 = vmatprep.subr.mxu0 0.0
      %385 = vmatpush1.msra.mxu0 %v195
      %386 = vmatprep.subr.mxu0 0.0
      %387 = vmatpush1.msra.mxu0 %v196
      %388 = vmatprep.subr.mxu0 0.0
      %389 = vmatpush1.msra.mxu0 %v197
      %390 = vmatprep.subr.mxu0 0.0
      %391 = vmatpush1.msra.mxu0 %v198
      %392 = vmatprep.subr.mxu0 0.0
      %393 = vmatpush1.msra.mxu0 %v199
      %394 = vmatprep.subr.mxu0 0.0
      %395 = vmatpush1.msra.mxu0 %v200
      %396 = vmatprep.subr.mxu0 0.0
      %397 = vmatpush1.msra.mxu0 %v201
      %398 = vmatprep.subr.mxu0 0.0
      %399 = vmatpush1.msra.mxu0 %v202
      %400 = vmatprep.mubr.f32.mxu0 %v272
      %401 = vmatmul.mubr.f32.gmra.mrb[0].mxu0 %v271
      %v402 = vpop.f32.mrb[0].mxu0
      %v403 = vadd.f32 %v306, %v402
      %v404 = vpop.f32.mrb[0].mxu0
      %405 = vmatprep.mubr.f32.mxu0 %v279
      %406 = vmatmul.mubr.f32.gmra.mrb[0].mxu0 %v278
      %v407 = vpop.f32.mrb[0].mxu0
      %v408 = vadd.f32 %v311, %v407
      %v409 = vpop.f32.mrb[0].mxu0
      %410 = vmatprep.mubr.f32.mxu0 %v286
      %411 = vmatmul.mubr.f32.gmra.mrb[0].mxu0 %v285
      %v412 = vpop.f32.mrb[0].mxu0
      %v413 = vadd.f32 %v316, %v412
      %v414 = vpop.f32.mrb[0].mxu0
      %415 = vmatprep.mubr.f32.mxu0 %v293
      %416 = vmatmul.mubr.f32.gmra.mrb[0].mxu0 %v292
      %v417 = vpop.f32.mrb[0].mxu0
      %v418 = vadd.f32 %v321, %v417
      %v419 = vpop.f32.mrb[0].mxu0
      %420 = vdwg.mxu0
      %421 = vmatprep.subr.mxu0 0.0
      %422 = vmatpush1.msra.mxu0 %v203
      %423 = vmatprep.subr.mxu0 0.0
      %424 = vmatpush1.msra.mxu0 %v204
      %425 = vmatprep.subr.mxu0 0.0
      %426 = vmatpush1.msra.mxu0 %v205
      %427 = vmatprep.subr.mxu0 0.0
      %428 = vmatpush1.msra.mxu0 %v206
      %429 = vmatprep.subr.mxu0 0.0
      %430 = vmatpush1.msra.mxu0 %v207
      %431 = vmatprep.subr.mxu0 0.0
      %432 = vmatpush1.msra.mxu0 %v208
      %433 = vmatprep.subr.mxu0 0.0
      %434 = vmatpush1.msra.mxu0 %v209
      %435 = vmatprep.subr.mxu0 0.0
      %436 = vmatpush1.msra.mxu0 %v210
      %437 = vmatprep.subr.mxu0 0.0
      %438 = vmatpush1.msra.mxu0 %v211
      %439 = vmatprep.subr.mxu0 0.0
      %440 = vmatpush1.msra.mxu0 %v212
      %441 = vmatprep.subr.mxu0 0.0
      %442 = vmatpush1.msra.mxu0 %v213
      %443 = vmatprep.subr.mxu0 0.0
      %444 = vmatpush1.msra.mxu0 %v214
      %445 = vmatprep.subr.mxu0 0.0
      %446 = vmatpush1.msra.mxu0 %v215
      %447 = vmatprep.subr.mxu0 0.0
      %448 = vmatpush1.msra.mxu0 %v216
      %449 = vmatprep.subr.mxu0 0.0
      %450 = vmatpush1.msra.mxu0 %v217
      %451 = vmatprep.subr.mxu0 0.0
      %452 = vmatpush1.msra.mxu0 %v218
      %453 = vmatprep.subr.mxu0 0.0
      %454 = vmatpush1.msra.mxu0 %v219
      %455 = vmatprep.subr.mxu0 0.0
      %456 = vmatpush1.msra.mxu0 %v220
      %457 = vmatprep.subr.mxu0 0.0
      %458 = vmatpush1.msra.mxu0 %v221
      %459 = vmatprep.subr.mxu0 0.0
      %460 = vmatpush1.msra.mxu0 %v222
      %461 = vmatprep.subr.mxu0 0.0
      %462 = vmatpush1.msra.mxu0 %v223
      %463 = vmatprep.subr.mxu0 0.0
      %464 = vmatpush1.msra.mxu0 %v224
      %465 = vmatprep.subr.mxu0 0.0
      %466 = vmatpush1.msra.mxu0 %v225
      %467 = vmatprep.subr.mxu0 0.0
      %468 = vmatpush1.msra.mxu0 %v226
      %469 = vmatprep.subr.mxu0 0.0
      %470 = vmatpush1.msra.mxu0 %v227
      %471 = vmatprep.subr.mxu0 0.0
      %472 = vmatpush1.msra.mxu0 %v228
      %473 = vmatprep.subr.mxu0 0.0
      %474 = vmatpush1.msra.mxu0 %v229
      %475 = vmatprep.subr.mxu0 0.0
      %476 = vmatpush1.msra.mxu0 %v230
      %477 = vmatprep.subr.mxu0 0.0
      %478 = vmatpush1.msra.mxu0 %v231
      %479 = vmatprep.subr.mxu0 0.0
      %480 = vmatpush1.msra.mxu0 %v232
      %481 = vmatprep.subr.mxu0 0.0
      %482 = vmatpush1.msra.mxu0 %v233
      %483 = vmatprep.subr.mxu0 0.0
      %484 = vmatpush1.msra.mxu0 %v234
      %485 = vmatprep.mubr.f32.mxu0 %v274
      %486 = vmatmul.mubr.f32.gmra.mrb[0].mxu0 %v273
      %v487 = vpop.f32.mrb[0].mxu0
      %v488 = vadd.f32 %v403, %v487
      %v489 = vpop.f32.mrb[0].mxu0
      %490 = vmatprep.mubr.f32.mxu0 %v281
      %491 = vmatmul.mubr.f32.gmra.mrb[0].mxu0 %v280
      %v492 = vpop.f32.mrb[0].mxu0
      %v493 = vadd.f32 %v408, %v492
      %v494 = vpop.f32.mrb[0].mxu0
      %495 = vmatprep.mubr.f32.mxu0 %v288
      %496 = vmatmul.mubr.f32.gmra.mrb[0].mxu0 %v287
      %v497 = vpop.f32.mrb[0].mxu0
      %v498 = vadd.f32 %v413, %v497
      %v499 = vpop.f32.mrb[0].mxu0
      %500 = vmatprep.mubr.f32.mxu0 %v295
      %501 = vmatmul.mubr.f32.gmra.mrb[0].mxu0 %v294
      %v502 = vpop.f32.mrb[0].mxu0
      %v503 = vadd.f32 %v418, %v502
      %v504 = vpop.f32.mrb[0].mxu0
      %505 = vdwg.mxu0
      %506 = vmatprep.subr.mxu0 0.0
      %507 = vmatpush1.msra.mxu0 %v235
      %508 = vmatprep.subr.mxu0 0.0
      %509 = vmatpush1.msra.mxu0 %v236
      %510 = vmatprep.subr.mxu0 0.0
      %511 = vmatpush1.msra.mxu0 %v237
      %512 = vmatprep.subr.mxu0 0.0
      %513 = vmatpush1.msra.mxu0 %v238
      %514 = vmatprep.subr.mxu0 0.0
      %515 = vmatpush1.msra.mxu0 %v239
      %516 = vmatprep.subr.mxu0 0.0
      %517 = vmatpush1.msra.mxu0 %v240
      %518 = vmatprep.subr.mxu0 0.0
      %519 = vmatpush1.msra.mxu0 %v241
      %520 = vmatprep.subr.mxu0 0.0
      %521 = vmatpush1.msra.mxu0 %v242
      %522 = vmatprep.subr.mxu0 0.0
      %523 = vmatpush1.msra.mxu0 %v243
      %524 = vmatprep.subr.mxu0 0.0
      %525 = vmatpush1.msra.mxu0 %v244
      %526 = vmatprep.subr.mxu0 0.0
      %527 = vmatpush1.msra.mxu0 %v245
      %528 = vmatprep.subr.mxu0 0.0
      %529 = vmatpush1.msra.mxu0 %v246
      %530 = vmatprep.subr.mxu0 0.0
      %531 = vmatpush1.msra.mxu0 %v247
      %532 = vmatprep.subr.mxu0 0.0
      %533 = vmatpush1.msra.mxu0 %v248
      %534 = vmatprep.subr.mxu0 0.0
      %535 = vmatpush1.msra.mxu0 %v249
      %536 = vmatprep.subr.mxu0 0.0
      %537 = vmatpush1.msra.mxu0 %v250
      %538 = vmatprep.subr.mxu0 0.0
      %539 = vmatpush1.msra.mxu0 %v251
      %540 = vmatprep.subr.mxu0 0.0
      %541 = vmatpush1.msra.mxu0 %v252
      %542 = vmatprep.subr.mxu0 0.0
      %543 = vmatpush1.msra.mxu0 %v253
      %544 = vmatprep.subr.mxu0 0.0
      %545 = vmatpush1.msra.mxu0 %v254
      %546 = vmatprep.subr.mxu0 0.0
      %547 = vmatpush1.msra.mxu0 %v255
      %548 = vmatprep.subr.mxu0 0.0
      %549 = vmatpush1.msra.mxu0 %v256
      %550 = vmatprep.subr.mxu0 0.0
      %551 = vmatpush1.msra.mxu0 %v257
      %552 = vmatprep.subr.mxu0 0.0
      %553 = vmatpush1.msra.mxu0 %v258
      %554 = vmatprep.subr.mxu0 0.0
      %555 = vmatpush1.msra.mxu0 %v259
      %556 = vmatprep.subr.mxu0 0.0
      %557 = vmatpush1.msra.mxu0 %v260
      %558 = vmatprep.subr.mxu0 0.0
      %559 = vmatpush1.msra.mxu0 %v261
      %560 = vmatprep.subr.mxu0 0.0
      %561 = vmatpush1.msra.mxu0 %v262
      %562 = vmatprep.subr.mxu0 0.0
      %563 = vmatpush1.msra.mxu0 %v263
      %564 = vmatprep.subr.mxu0 0.0
      %565 = vmatpush1.msra.mxu0 %v264
      %566 = vmatprep.subr.mxu0 0.0
      %567 = vmatpush1.msra.mxu0 %v265
      %568 = vmatprep.subr.mxu0 0.0
      %569 = vmatpush1.msra.mxu0 %v266
      %570 = vmatprep.mubr.f32.mxu0 %v276
      %571 = vmatmul.mubr.f32.gmra.mrb[0].mxu0 %v275
      %v572 = vpop.f32.mrb[0].mxu0
      %v573 = vadd.f32 %v488, %v572
      %v574 = vpop.f32.mrb[0].mxu0
      %575 = vmatprep.mubr.f32.mxu0 %v283
      %576 = vmatmul.mubr.f32.gmra.mrb[0].mxu0 %v282
      %v577 = vpop.f32.mrb[0].mxu0
      %v578 = vadd.f32 %v493, %v577
      %v579 = vpop.f32.mrb[0].mxu0
      %580 = vmatprep.mubr.f32.mxu0 %v290
      %581 = vmatmul.mubr.f32.gmra.mrb[0].mxu0 %v289
      %v582 = vpop.f32.mrb[0].mxu0
      %v583 = vadd.f32 %v498, %v582
      %v584 = vpop.f32.mrb[0].mxu0
      %585 = vmatprep.mubr.f32.mxu0 %v297
      %586 = vmatmul.mubr.f32.gmra.mrb[0].mxu0 %v296
      %v587 = vpop.f32.mrb[0].mxu0
      %v588 = vadd.f32 %v503, %v587
      %v589 = vpop.f32.mrb[0].mxu0
      %590 = vdwg.mxu0
      %591 = vmatprep.subr.mxu0 0.0
      %592 = vmatpush1.msra.mxu0 %v267
      %593 = vmatprep.subr.mxu0 0.0
      %594 = vmatpush1.msra.mxu0 %v268
      %595 = vmatprep.subr.mxu0 0.0
      %596 = vmatpush1.msra.mxu0 %v269
      %597 = vmatprep.subr.mxu0 0.0
      %598 = vmatpush1.msra.mxu0 %v270
      %599 = vmatprep.subr.mxu0 0.0
      %600 = vmatpush1.msra.mxu0 0.0
      %601 = vmatprep.subr.mxu0 0.0
      %602 = vmatpush1.msra.mxu0 0.0
      %603 = vmatprep.subr.mxu0 0.0
      %604 = vmatpush1.msra.mxu0 0.0
      %605 = vmatprep.subr.mxu0 0.0
      %606 = vmatpush1.msra.mxu0 0.0
      %607 = vmatprep.subr.mxu0 0.0
      %608 = vmatpush1.msra.mxu0 0.0
      %609 = vmatprep.subr.mxu0 0.0
      %610 = vmatpush1.msra.mxu0 0.0
      %611 = vmatprep.subr.mxu0 0.0
      %612 = vmatpush1.msra.mxu0 0.0
      %613 = vmatprep.subr.mxu0 0.0
      %614 = vmatpush1.msra.mxu0 0.0
      %615 = vmatprep.subr.mxu0 0.0
      %616 = vmatpush1.msra.mxu0 0.0
      %617 = vmatprep.subr.mxu0 0.0
      %618 = vmatpush1.msra.mxu0 0.0
      %619 = vmatprep.subr.mxu0 0.0
      %620 = vmatpush1.msra.mxu0 0.0
      %621 = vmatprep.subr.mxu0 0.0
      %622 = vmatpush1.msra.mxu0 0.0
      %623 = vmatprep.subr.mxu0 0.0
      %624 = vmatpush1.msra.mxu0 0.0
      %625 = vmatprep.subr.mxu0 0.0
      %626 = vmatpush1.msra.mxu0 0.0
      %627 = vmatprep.subr.mxu0 0.0
      %628 = vmatpush1.msra.mxu0 0.0
      %629 = vmatprep.subr.mxu0 0.0
      %630 = vmatpush1.msra.mxu0 0.0
      %631 = vmatprep.subr.mxu0 0.0
      %632 = vmatpush1.msra.mxu0 0.0
      %633 = vmatprep.subr.mxu0 0.0
      %634 = vmatpush1.msra.mxu0 0.0
      %635 = vmatprep.subr.mxu0 0.0
      %636 = vmatpush1.msra.mxu0 0.0
      %637 = vmatprep.subr.mxu0 0.0
      %638 = vmatpush1.msra.mxu0 0.0
      %639 = vmatprep.subr.mxu0 0.0
      %640 = vmatpush1.msra.mxu0 0.0
      %641 = vmatprep.subr.mxu0 0.0
      %642 = vmatpush1.msra.mxu0 0.0
      %643 = vmatprep.subr.mxu0 0.0
      %644 = vmatpush1.msra.mxu0 0.0
      %645 = vmatprep.subr.mxu0 0.0
      %646 = vmatpush1.msra.mxu0 0.0
      %647 = vmatprep.subr.mxu0 0.0
      %648 = vmatpush1.msra.mxu0 0.0
      %649 = vmatprep.subr.mxu0 0.0
      %650 = vmatpush1.msra.mxu0 0.0
      %651 = vmatprep.subr.mxu0 0.0
      %652 = vmatpush1.msra.mxu0 0.0
      %653 = vmatprep.subr.mxu0 0.0
      %654 = vmatpush1.msra.mxu0 0.0
      %655 = vmatprep.mubr.f32.mxu0 0.0
      %656 = vmatmul.mubr.f32.gmra.mrb[0].mxu0 %v325
      %v657 = vpop.f32.mrb[0].mxu0
      %v658 = vadd.f32 %v573, %v657
      %v659 = vpop.f32.mrb[0].mxu0
      %660 = vmatprep.mubr.f32.mxu0 0.0
      %661 = vmatmul.mubr.f32.gmra.mrb[0].mxu0 %v328
      %v662 = vpop.f32.mrb[0].mxu0
      %v663 = vadd.f32 %v578, %v662
      %v664 = vpop.f32.mrb[0].mxu0
      %665 = vmatprep.mubr.f32.mxu0 0.0
      %666 = vmatmul.mubr.f32.gmra.mrb[0].mxu0 %v331
      %v667 = vpop.f32.mrb[0].mxu0
      %v668 = vadd.f32 %v583, %v667
      %v669 = vpop.f32.mrb[0].mxu0
      %670 = vmatprep.mubr.f32.mxu0 0.0
      %671 = vmatmul.mubr.f32.gmra.mrb[0].mxu0 %v334
      %v672 = vpop.f32.mrb[0].mxu0
      %v673 = vadd.f32 %v588, %v672
      %v674 = vpop.f32.mrb[0].mxu0
      %675 = vdwg.mxu0
      %v676 = vmax.f32 %v658, 0.0
      %v677 = vmax.f32 %v663, 0.0
      %v678 = vmax.f32 %v668, 0.0
      %v679 = vmax.f32 %v673, 0.0
      %vm680 = vcmask 523264
      %681 = vst.msk [vmem:[%s170] sm:$0xff] %vm680, %v676
      %682 = vst.msk [vmem:[%s170 + $0x8] sm:$0xff] %vm680, %v677
      %683 = vst.msk [vmem:[%s170 + $0x10] sm:$0xff] %vm680, %v678
      %684 = vst.msk [vmem:[%s170 + $0x18] sm:$0xff] %vm680, %v679
      %p685 = scmp.lt.s32.totalorder %s14, 1
      %s686 = scalar_select %p685, %s14, 1
      %s687 = smul.addr %s686, 4
      %s688 = smul.addr %s687, 8
      %s689 = scalar_lea.vmem %s3, %s688
      // Predicated region
      $region33: #{ggcnn4_forward.13} parent=31 // pred_check
        %p690 = pneg %p100
      $region34: #{ggcnn4_forward.13} parent=31 // pred_check_branch
        %692 = sbr.rel (%p690) target = $region36
      $region35: #{ggcnn4_forward.13} parent=31 // pred_region
        _
      $region36: #{ggcnn4_forward.13} parent=31 // pred_fallthru
        _
    $region32: #{ggcnn4_forward.13} parent=5 // pred_fallthru
      _
    %p693 = scmp.le.s32.totalorder 2, %s9
    // Predicated region
    $region37: #{ggcnn4_forward.13} parent=5 // pred_check
      %p694 = pneg %p693
    $region38: #{ggcnn4_forward.13} parent=5 // pred_check_branch
      %696 = sbr.rel (%p694) target = $region40
    $region39: #{ggcnn4_forward.13} parent=5 // pred_region
      %s697 = ssub.s32 %s9, 2
      // Predicated region
      $region41: #{ggcnn4_forward.13} parent=39 // pred_check
        %p698 = pneg %p106
      $region42: #{ggcnn4_forward.13} parent=39 // pred_check_branch
        %700 = sbr.rel (%p698) target = $region44
      $region43: #{ggcnn4_forward.13} parent=39 // pred_region
        %p701 = scmp.lt.s32.totalorder %s15, 1
        %s702 = scalar_select %p701, %s15, 1
        %s703 = smul.addr %s702, 4
        %s704 = smul.addr %s703, 8
        %s705 = scalar_lea.vmem %s3, %s704
      $region44: #{ggcnn4_forward.13} parent=39 // pred_fallthru
        _
    $region40: #{ggcnn4_forward.13} parent=5 // pred_fallthru
      _
  $region6: #{ggcnn4_forward.13} parent=0 // loop_footer
    %s13 = sadd.s32 1, %s9
  $region7: #{ggcnn4_forward.13} parent=0 // loop_footer_branch
    %8 = sbr.rel target = $region3
  $region8: #{ggcnn4_forward.13} parent=0 // loop_exit
    _

// kernel: tile.13
$region0: #{tile.13}
  #allocation0 [shape = 's32[1]{0}', space=sflag, size = 0x4, scoped, tag = 'scoped memory for tile.13']
  %s0 = inlined_call_operand.vmem [shape: f32[16], index: 0, kind: input, shape index: {}]
  %s1 = inlined_call_operand.vmem [shape: f32[4,16], index: 1, kind: output, shape index: {}]
  // Predicated region
  $region2: #{tile.13} parent=0 // pred_check
    _
  $region3: #{tile.13} parent=0 // pred_check_branch
    %3 = sbr.rel (0) target = $region5
  $region4: #{tile.13} parent=0 // pred_region
    _
  $region5: #{tile.13} parent=0 // pred_fallthru
    _
  %v4 = vld [vmem:[%s0] ss:$0 sm:$0xff]
  %5 = vst [vmem:[%s1] sm:$0xf] %v4

// kernel: tile.0
$region0: #{tile.0}
  %s0 = inlined_call_operand.vmem [shape: f32[4,16], index: 0, kind: input, shape index: {}]
  %s1 = inlined_call_operand.vmem [shape: f32[64,1], index: 1, kind: output, shape index: {}]
  $region1: #{tile.0} parent=0
    #allocation0 [shape = 'u8[4096]{0}', space=vmem, size = 0x1000, scoped, tag = 'scoped mem for input reshape']
    %s3 = sshllo.u32 0, 4
    %v4 = vld [vmem:[%s0] sm:%s3]
    %5 = vst [vmem:[#allocation0] sm:%s3] %v4
    %v6 = vld [vmem:[#allocation0] sm:$0xf]
    %vm7 = vcmask 7168
    %8 = vst.msk [vmem:[%s1] ss:$16 sm:$0x3] %vm7, %v6
    %9 = vst.msk [vmem:[%s1] ss:$16 sm:$0xc] %vm7, %v6
    %v10 = vld [vmem:[#allocation0] sm:$0xf]
    %11 = vrot.lane.b32.xlu0 %v10, 127
    %v12 = vpop.permute.xlu0 %11
    %vm13 = vcmask 7168
    %s14 = scalar_lea.vmem %s1, 1
    %15 = vst.msk [vmem:[%s14] ss:$16 sm:$0x3] %vm13, %v12
    %s16 = scalar_lea.vmem %s1, 1
    %17 = vst.msk [vmem:[%s16] ss:$16 sm:$0xc] %vm13, %v12
    %v18 = vld [vmem:[#allocation0] sm:$0xf]
    %19 = vrot.lane.b32.xlu0 %v18, 126
    %v20 = vpop.permute.xlu0 %19
    %vm21 = vcmask 7168
    %s22 = scalar_lea.vmem %s1, 2
    %23 = vst.msk [vmem:[%s22] ss:$16 sm:$0x3] %vm21, %v20
    %s24 = scalar_lea.vmem %s1, 2
    %25 = vst.msk [vmem:[%s24] ss:$16 sm:$0xc] %vm21, %v20
    %v26 = vld [vmem:[#allocation0] sm:$0xf]
    %27 = vrot.lane.b32.xlu0 %v26, 125
    %v28 = vpop.permute.xlu0 %27
    %vm29 = vcmask 7168
    %s30 = scalar_lea.vmem %s1, 3
    %31 = vst.msk [vmem:[%s30] ss:$16 sm:$0x3] %vm29, %v28
    %s32 = scalar_lea.vmem %s1, 3
    %33 = vst.msk [vmem:[%s32] ss:$16 sm:$0xc] %vm29, %v28
    %v34 = vld [vmem:[#allocation0] sm:$0xf]
    %35 = vrot.lane.b32.xlu0 %v34, 124
    %v36 = vpop.permute.xlu0 %35
    %vm37 = vcmask 7168
    %s38 = scalar_lea.vmem %s1, 4
    %39 = vst.msk [vmem:[%s38] ss:$16 sm:$0x3] %vm37, %v36
    %s40 = scalar_lea.vmem %s1, 4
    %41 = vst.msk [vmem:[%s40] ss:$16 sm:$0xc] %vm37, %v36
    %v42 = vld [vmem:[#allocation0] sm:$0xf]
    %43 = vrot.lane.b32.xlu0 %v42, 123
    %v44 = vpop.permute.xlu0 %43
    %vm45 = vcmask 7168
    %s46 = scalar_lea.vmem %s1, 5
    %47 = vst.msk [vmem:[%s46] ss:$16 sm:$0x3] %vm45, %v44
    %s48 = scalar_lea.vmem %s1, 5
    %49 = vst.msk [vmem:[%s48] ss:$16 sm:$0xc] %vm45, %v44
    %v50 = vld [vmem:[#allocation0] sm:$0xf]
    %51 = vrot.lane.b32.xlu0 %v50, 122
    %v52 = vpop.permute.xlu0 %51
    %vm53 = vcmask 7168
    %s54 = scalar_lea.vmem %s1, 6
    %55 = vst.msk [vmem:[%s54] ss:$16 sm:$0x3] %vm53, %v52
    %s56 = scalar_lea.vmem %s1, 6
    %57 = vst.msk [vmem:[%s56] ss:$16 sm:$0xc] %vm53, %v52
    %v58 = vld [vmem:[#allocation0] sm:$0xf]
    %59 = vrot.lane.b32.xlu0 %v58, 121
    %v60 = vpop.permute.xlu0 %59
    %vm61 = vcmask 7168
    %s62 = scalar_lea.vmem %s1, 7
    %63 = vst.msk [vmem:[%s62] ss:$16 sm:$0x3] %vm61, %v60
    %s64 = scalar_lea.vmem %s1, 7
    %65 = vst.msk [vmem:[%s64] ss:$16 sm:$0xc] %vm61, %v60
    %v66 = vld [vmem:[#allocation0] sm:$0xf]
    %67 = vrot.lane.b32.xlu0 %v66, 120
    %v68 = vpop.permute.xlu0 %67
    %vm69 = vcmask 7168
    %s70 = scalar_lea.vmem %s1, 8
    %71 = vst.msk [vmem:[%s70] ss:$16 sm:$0x3] %vm69, %v68
    %s72 = scalar_lea.vmem %s1, 8
    %73 = vst.msk [vmem:[%s72] ss:$16 sm:$0xc] %vm69, %v68
    %v74 = vld [vmem:[#allocation0] sm:$0xf]
    %75 = vrot.lane.b32.xlu0 %v74, 119
    %v76 = vpop.permute.xlu0 %75
    %vm77 = vcmask 7168
    %s78 = scalar_lea.vmem %s1, 9
    %79 = vst.msk [vmem:[%s78] ss:$16 sm:$0x3] %vm77, %v76
    %s80 = scalar_lea.vmem %s1, 9
    %81 = vst.msk [vmem:[%s80] ss:$16 sm:$0xc] %vm77, %v76
    %v82 = vld [vmem:[#allocation0] sm:$0xf]
    %83 = vrot.lane.b32.xlu0 %v82, 118
    %v84 = vpop.permute.xlu0 %83
    %vm85 = vcmask 7168
    %s86 = scalar_lea.vmem %s1, 10
    %87 = vst.msk [vmem:[%s86] ss:$16 sm:$0x3] %vm85, %v84
    %s88 = scalar_lea.vmem %s1, 10
    %89 = vst.msk [vmem:[%s88] ss:$16 sm:$0xc] %vm85, %v84
    %v90 = vld [vmem:[#allocation0] sm:$0xf]
    %91 = vrot.lane.b32.xlu0 %v90, 117
    %v92 = vpop.permute.xlu0 %91
    %vm93 = vcmask 7168
    %s94 = scalar_lea.vmem %s1, 11
    %95 = vst.msk [vmem:[%s94] ss:$16 sm:$0x3] %vm93, %v92
    %s96 = scalar_lea.vmem %s1, 11
    %97 = vst.msk [vmem:[%s96] ss:$16 sm:$0xc] %vm93, %v92
    %v98 = vld [vmem:[#allocation0] sm:$0xf]
    %99 = vrot.lane.b32.xlu0 %v98, 116
    %v100 = vpop.permute.xlu0 %99
    %vm101 = vcmask 7168
    %s102 = scalar_lea.vmem %s1, 12
    %103 = vst.msk [vmem:[%s102] ss:$16 sm:$0x3] %vm101, %v100
    %s104 = scalar_lea.vmem %s1, 12
    %105 = vst.msk [vmem:[%s104] ss:$16 sm:$0xc] %vm101, %v100
    %v106 = vld [vmem:[#allocation0] sm:$0xf]
    %107 = vrot.lane.b32.xlu0 %v106, 115
    %v108 = vpop.permute.xlu0 %107
    %vm109 = vcmask 7168
    %s110 = scalar_lea.vmem %s1, 13
    %111 = vst.msk [vmem:[%s110] ss:$16 sm:$0x3] %vm109, %v108
    %s112 = scalar_lea.vmem %s1, 13
    %113 = vst.msk [vmem:[%s112] ss:$16 sm:$0xc] %vm109, %v108
    %v114 = vld [vmem:[#allocation0] sm:$0xf]
    %115 = vrot.lane.b32.xlu0 %v114, 114
    %v116 = vpop.permute.xlu0 %115
    %vm117 = vcmask 7168
    %s118 = scalar_lea.vmem %s1, 14
    %119 = vst.msk [vmem:[%s118] ss:$16 sm:$0x3] %vm117, %v116
    %s120 = scalar_lea.vmem %s1, 14
    %121 = vst.msk [vmem:[%s120] ss:$16 sm:$0xc] %vm117, %v116
    %v122 = vld [vmem:[#allocation0] sm:$0xf]
    %123 = vrot.lane.b32.xlu0 %v122, 113
    %v124 = vpop.permute.xlu0 %123
    %vm125 = vcmask 7168
    %s126 = scalar_lea.vmem %s1, 15
    %127 = vst.msk [vmem:[%s126] ss:$16 sm:$0x3] %vm125, %v124
    %s128 = scalar_lea.vmem %s1, 15
    %129 = vst.msk [vmem:[%s128] ss:$16 sm:$0xc] %vm125, %v124

// kernel: ggcnn4_forward.14
$region0: #{ggcnn4_forward.14}
  #allocation0 [shape = 'u32[]', space=smem, size = 0x4, offset = 0x4, fixed_abs, tag = 'smem constant byte address 0x4 - core index']
  #allocation1 [shape = 'u32[144,128]{1,0:T(1,128)}', space=vmem, size = 0x12000, scoped, tag = 'internal scratch']
  %s0 = inlined_call_operand.vmem [shape: f32[2,128,64], index: 0, kind: input, shape index: {}]
  %s1 = inlined_call_operand.vmem [shape: f32[64,128], index: 1, kind: input, shape index: {}]
  %s2 = inlined_call_operand.vmem [shape: f32[64,1], index: 2, kind: input, shape index: {}]
  %s3 = inlined_call_operand.vmem [shape: f32[2,64,64], index: 3, kind: output, shape index: {}]
  %s4 = sld [smem:[#allocation0]]
  $region45: #{ggcnn4_forward.14} parent=0
    _
  %s6 = ssub.s32 1, %s4
  %s7 = scalar_select 0, %s6, %s4
  loop: start=0, step=1, limit=4
  $region2: #{ggcnn4_forward.14} parent=0 // loop_pre_header
    _
  $region3: #{ggcnn4_forward.14} parent=0 // loop_header
    %s9 = sphi 0, %s13
    %p10 = scmp.ge.s32.totalorder %s9, 4
    %s19 = sphi 0, %s21
    %s22 = sphi 0, %s19
    %s23 = sphi 0, %s22
    %s39 = sphi 0, %s23
    %s43 = sphi 0, %s43
    %s45 = sphi 0, %s43
    %s46 = sphi 0, %s45
    %s60 = sphi 0, %s46
    %s64 = sphi 0, %s64
    %s66 = sphi 0, %s64
    %s67 = sphi 0, %s66
    %s81 = sphi 0, %s67
    %s87 = sphi 0, %s89
    %s90 = sphi 0, %s87
    %s91 = sphi 0, %s90
    %s107 = sphi 0, %s91
  $region4: #{ggcnn4_forward.14} parent=0 // loop_header_branch
    %12 = sbr.rel (%p10) target = $region8
  $region5: #{ggcnn4_forward.14} parent=0 // loop_body
    %s14 = ssub.s32 %s9, 1
    %s15 = ssub.s32 %s9, 2
    %s16 = sadd.s32 %s9, 1
    %s17 = ssub.s32 %s9, %s16
    %p18 = scmp.eq.s32.totalorder %s17, 0
    %s20 = sadd.s32 %s19, 1
    %s21 = scalar_select %p18, %s19, %s20
    %p24 = pneg %p18
    %p25 = scmp.eq.s32.totalorder %s9, 1
    %p26 = por %p24, %p25
    %p27 = scmp.ne.s32.totalorder %s19, %s22
    %p28 = scmp.eq.s32.totalorder %s9, 0
    %p29 = por %p27, %p28
    %p30 = scmp.ne.s32.totalorder %s19, %s22
    %p31 = scmp.eq.s32.totalorder %s14, 1
    %p32 = por %p30, %p31
    %p33 = scmp.ne.s32.totalorder %s22, %s23
    %p34 = scmp.eq.s32.totalorder %s14, 0
    %p35 = por %p33, %p34
    %p36 = scmp.ne.s32.totalorder %s22, %s23
    %p37 = scmp.eq.s32.totalorder %s15, 1
    %p38 = por %p36, %p37
    %p40 = scmp.ne.s32.totalorder %s23, %s39
    %p41 = scmp.eq.s32.totalorder %s15, 0
    %p42 = por %p40, %p41
    %s44 = sadd.s32 %s43, 1
    %p47 = scmp.eq.s32.totalorder %s9, 1
    %p48 = scmp.ne.s32.totalorder %s43, %s45
    %p49 = scmp.eq.s32.totalorder %s9, 0
    %p50 = por %p48, %p49
    %p51 = scmp.ne.s32.totalorder %s43, %s45
    %p52 = scmp.eq.s32.totalorder %s14, 1
    %p53 = por %p51, %p52
    %p54 = scmp.ne.s32.totalorder %s45, %s46
    %p55 = scmp.eq.s32.totalorder %s14, 0
    %p56 = por %p54, %p55
    %p57 = scmp.ne.s32.totalorder %s45, %s46
    %p58 = scmp.eq.s32.totalorder %s15, 1
    %p59 = por %p57, %p58
    %p61 = scmp.ne.s32.totalorder %s46, %s60
    %p62 = scmp.eq.s32.totalorder %s15, 0
    %p63 = por %p61, %p62
    %s65 = sadd.s32 %s64, 1
    %p68 = scmp.eq.s32.totalorder %s9, 1
    %p69 = scmp.ne.s32.totalorder %s64, %s66
    %p70 = scmp.eq.s32.totalorder %s9, 0
    %p71 = por %p69, %p70
    %p72 = scmp.ne.s32.totalorder %s64, %s66
    %p73 = scmp.eq.s32.totalorder %s14, 1
    %p74 = por %p72, %p73
    %p75 = scmp.ne.s32.totalorder %s66, %s67
    %p76 = scmp.eq.s32.totalorder %s14, 0
    %p77 = por %p75, %p76
    %p78 = scmp.ne.s32.totalorder %s66, %s67
    %p79 = scmp.eq.s32.totalorder %s15, 1
    %p80 = por %p78, %p79
    %p82 = scmp.ne.s32.totalorder %s67, %s81
    %p83 = scmp.eq.s32.totalorder %s15, 0
    %p84 = por %p82, %p83
    %s85 = ssub.s32 %s9, %s16
    %p86 = scmp.eq.s32.totalorder %s85, 0
    %s88 = sadd.s32 %s87, 1
    %s89 = scalar_select %p86, %s87, %s88
    %p92 = pneg %p86
    %p93 = scmp.eq.s32.totalorder %s9, 1
    %p94 = por %p92, %p93
    %p95 = scmp.ne.s32.totalorder %s87, %s90
    %p96 = scmp.eq.s32.totalorder %s9, 0
    %p97 = por %p95, %p96
    %p98 = scmp.ne.s32.totalorder %s87, %s90
    %p99 = scmp.eq.s32.totalorder %s14, 1
    %p100 = por %p98, %p99
    %p101 = scmp.ne.s32.totalorder %s90, %s91
    %p102 = scmp.eq.s32.totalorder %s14, 0
    %p103 = por %p101, %p102
    %p104 = scmp.ne.s32.totalorder %s90, %s91
    %p105 = scmp.eq.s32.totalorder %s15, 1
    %p106 = por %p104, %p105
    %p108 = scmp.ne.s32.totalorder %s91, %s107
    %p109 = scmp.eq.s32.totalorder %s15, 0
    %p110 = por %p108, %p109
    %p111 = scmp.le.s32.totalorder 1, %s9
    %p112 = scmp.lt.s32.totalorder %s9, 3
    %p113 = pnand %p111, %p112
    %p114 = pneg %p113
    // Predicated region
    $region9: #{ggcnn4_forward.14} parent=5 // pred_check
      _
    $region10: #{ggcnn4_forward.14} parent=5 // pred_check_branch
      %116 = sbr.rel (%p113) target = $region12
    $region11: #{ggcnn4_forward.14} parent=5 // pred_region
      %s117 = ssub.s32 %s9, 1
      // Predicated region
      $region13: #{ggcnn4_forward.14} parent=11 // pred_check
        %p118 = pneg %p56
      $region14: #{ggcnn4_forward.14} parent=11 // pred_check_branch
        %120 = sbr.rel (%p118) target = $region16
      $region15: #{ggcnn4_forward.14} parent=11 // pred_region
        _
      $region16: #{ggcnn4_forward.14} parent=11 // pred_fallthru
        _
      // Predicated region
      $region17: #{ggcnn4_forward.14} parent=11 // pred_check
        %p121 = pneg %p77
      $region18: #{ggcnn4_forward.14} parent=11 // pred_check_branch
        %123 = sbr.rel (%p121) target = $region20
      $region19: #{ggcnn4_forward.14} parent=11 // pred_region
        _
      $region20: #{ggcnn4_forward.14} parent=11 // pred_fallthru
        _
    $region12: #{ggcnn4_forward.14} parent=5 // pred_fallthru
      _
    %p124 = scmp.lt.s32.totalorder %s9, 2
    // Predicated region
    $region21: #{ggcnn4_forward.14} parent=5 // pred_check
      %p125 = pneg %p124
    $region22: #{ggcnn4_forward.14} parent=5 // pred_check_branch
      %127 = sbr.rel (%p125) target = $region24
    $region23: #{ggcnn4_forward.14} parent=5 // pred_region
      // Predicated region
      $region25: #{ggcnn4_forward.14} parent=23 // pred_check
        %p128 = pneg %p29
      $region26: #{ggcnn4_forward.14} parent=23 // pred_check_branch
        %130 = sbr.rel (%p128) target = $region28
      $region27: #{ggcnn4_forward.14} parent=23 // pred_region
        %p131 = scmp.lt.s32.totalorder %s9, 1
        %s132 = scalar_select %p131, %s9, 1
        %s133 = smul.addr %s132, 16
        %s134 = smul.addr %s133, 8
        %s135 = scalar_lea.vmem %s0, %s134
      $region28: #{ggcnn4_forward.14} parent=23 // pred_fallthru
        _
    $region24: #{ggcnn4_forward.14} parent=5 // pred_fallthru
      _
    %p136 = scmp.le.s32.totalorder 1, %s9
    %p137 = scmp.lt.s32.totalorder %s9, 3
    %p138 = pnand %p136, %p137
    %p139 = pneg %p138
    // Predicated region
    $region29: #{ggcnn4_forward.14} parent=5 // pred_check
      _
    $region30: #{ggcnn4_forward.14} parent=5 // pred_check_branch
      %141 = sbr.rel (%p138) target = $region32
    $region31: #{ggcnn4_forward.14} parent=5 // pred_region
      %s142 = ssub.s32 %s9, 1
      %p143 = scmp.lt.s32.totalorder %s14, 1
      %s144 = scalar_select %p143, %s14, 1
      %s145 = smul.addr %s144, 16
      %s146 = smul.addr %s145, 8
      %s147 = scalar_lea.vmem %s0, %s146
      %p148 = pneg %p35
      %p149 = pneg %p32
      %p150 = pneg %p56
      %p151 = pneg %p53
      %p152 = pneg %p77
      %p153 = pneg %p74
      %p154 = pneg %p103
      %p155 = pneg %p100
      %p156 = scmp.lt.s32.totalorder %s14, 1
      %s157 = scalar_select %p156, %s14, 1
      %s158 = smul.addr %s157, 8
      %s159 = smul.addr %s158, 8
      %s160 = scalar_lea.vmem %s3, %s159
      %p161 = scmp.lt.s32.totalorder %s14, 1
      %s162 = scalar_select %p161, %s14, 1
      %s163 = smul.addr %s162, 16
      %s164 = smul.addr %s163, 8
      %s165 = scalar_lea.vmem %s0, %s164
      %p166 = scmp.lt.s32.totalorder %s14, 1
      %s167 = scalar_select %p166, %s14, 1
      %s168 = smul.addr %s167, 8
      %s169 = smul.addr %s168, 8
      %s170 = scalar_lea.vmem %s3, %s169
      %v171 = vld [vmem:[%s165] sm:$0xff]
      %v172 = vld [vmem:[%s165 + $0x8] sm:$0xff]
      %v173 = vld [vmem:[%s165 + $0x10] sm:$0xff]
      %v174 = vld [vmem:[%s165 + $0x18] sm:$0xff]
      %v175 = vld [vmem:[%s165 + $0x20] sm:$0xff]
      %v176 = vld [vmem:[%s165 + $0x28] sm:$0xff]
      %v177 = vld [vmem:[%s165 + $0x30] sm:$0xff]
      %v178 = vld [vmem:[%s165 + $0x38] sm:$0xff]
      %v179 = vld [vmem:[%s165 + $0x40] sm:$0xff]
      %v180 = vld [vmem:[%s165 + $0x48] sm:$0xff]
      %v181 = vld [vmem:[%s165 + $0x50] sm:$0xff]
      %v182 = vld [vmem:[%s165 + $0x58] sm:$0xff]
      %v183 = vld [vmem:[%s165 + $0x60] sm:$0xff]
      %v184 = vld [vmem:[%s165 + $0x68] sm:$0xff]
      %v185 = vld [vmem:[%s165 + $0x70] sm:$0xff]
      %v186 = vld [vmem:[%s165 + $0x78] sm:$0xff]
      %v187 = vld [vmem:[%s1] sm:$0xff]
      %v188 = vld [vmem:[%s1 + $0x8] sm:$0xff]
      %v189 = vld [vmem:[%s1 + $0x10] sm:$0xff]
      %v190 = vld [vmem:[%s1 + $0x18] sm:$0xff]
      %v191 = vld [vmem:[%s1 + $0x20] sm:$0xff]
      %v192 = vld [vmem:[%s1 + $0x28] sm:$0xff]
      %v193 = vld [vmem:[%s1 + $0x30] sm:$0xff]
      %v194 = vld [vmem:[%s1 + $0x38] sm:$0xff]
      %v195 = vld [vmem:[%s2] sm:$0xff]
      %v196 = vld [vmem:[%s2 + $0x8] sm:$0xff]
      %v197 = vld [vmem:[%s2 + $0x10] sm:$0xff]
      %v198 = vld [vmem:[%s2 + $0x18] sm:$0xff]
      %v199 = vld [vmem:[%s2 + $0x20] sm:$0xff]
      %v200 = vld [vmem:[%s2 + $0x28] sm:$0xff]
      %v201 = vld [vmem:[%s2 + $0x30] sm:$0xff]
      %v202 = vld [vmem:[%s2 + $0x38] sm:$0xff]
      %204 = vset.pattern.permute.xlu0 0
      %205 = vperm.xlu0 %204, %v195
      %v206 = vpop.permute.xlu0 %205
      %209 = vset.pattern.permute.xlu0 0
      %210 = vperm.xlu0 %209, %v196
      %v211 = vpop.permute.xlu0 %210
      %214 = vset.pattern.permute.xlu0 0
      %215 = vperm.xlu0 %214, %v197
      %v216 = vpop.permute.xlu0 %215
      %219 = vset.pattern.permute.xlu0 0
      %220 = vperm.xlu0 %219, %v198
      %v221 = vpop.permute.xlu0 %220
      %224 = vset.pattern.permute.xlu0 0
      %225 = vperm.xlu0 %224, %v199
      %v226 = vpop.permute.xlu0 %225
      %229 = vset.pattern.permute.xlu0 0
      %230 = vperm.xlu0 %229, %v200
      %v231 = vpop.permute.xlu0 %230
      %234 = vset.pattern.permute.xlu0 0
      %235 = vperm.xlu0 %234, %v201
      %v236 = vpop.permute.xlu0 %235
      %239 = vset.pattern.permute.xlu0 0
      %240 = vperm.xlu0 %239, %v202
      %v241 = vpop.permute.xlu0 %240
      %243 = vmatprep.subr.mxu0 0.0
      %244 = vmatpush1.msra.mxu0 %v171
      %245 = vmatprep.subr.mxu0 0.0
      %246 = vmatpush1.msra.mxu0 %v172
      %247 = vmatprep.subr.mxu0 0.0
      %248 = vmatpush1.msra.mxu0 %v173
      %249 = vmatprep.subr.mxu0 0.0
      %250 = vmatpush1.msra.mxu0 %v174
      %251 = vmatprep.subr.mxu0 0.0
      %252 = vmatpush1.msra.mxu0 %v175
      %253 = vmatprep.subr.mxu0 0.0
      %254 = vmatpush1.msra.mxu0 %v176
      %255 = vmatprep.subr.mxu0 0.0
      %256 = vmatpush1.msra.mxu0 %v177
      %257 = vmatprep.subr.mxu0 0.0
      %258 = vmatpush1.msra.mxu0 %v178
      %259 = vmatprep.subr.mxu0 0.0
      %260 = vmatpush1.msra.mxu0 %v179
      %261 = vmatprep.subr.mxu0 0.0
      %262 = vmatpush1.msra.mxu0 %v180
      %263 = vmatprep.subr.mxu0 0.0
      %264 = vmatpush1.msra.mxu0 %v181
      %265 = vmatprep.subr.mxu0 0.0
      %266 = vmatpush1.msra.mxu0 %v182
      %267 = vmatprep.subr.mxu0 0.0
      %268 = vmatpush1.msra.mxu0 %v183
      %269 = vmatprep.subr.mxu0 0.0
      %270 = vmatpush1.msra.mxu0 %v184
      %271 = vmatprep.subr.mxu0 0.0
      %272 = vmatpush1.msra.mxu0 %v185
      %273 = vmatprep.subr.mxu0 0.0
      %274 = vmatpush1.msra.mxu0 %v186
      %275 = vmatprep.subr.mxu0 0.0
      %276 = vmatpush1.msra.mxu0 0.0
      %277 = vmatprep.subr.mxu0 0.0
      %278 = vmatpush1.msra.mxu0 0.0
      %279 = vmatprep.subr.mxu0 0.0
      %280 = vmatpush1.msra.mxu0 0.0
      %281 = vmatprep.subr.mxu0 0.0
      %282 = vmatpush1.msra.mxu0 0.0
      %283 = vmatprep.subr.mxu0 0.0
      %284 = vmatpush1.msra.mxu0 0.0
      %285 = vmatprep.subr.mxu0 0.0
      %286 = vmatpush1.msra.mxu0 0.0
      %287 = vmatprep.subr.mxu0 0.0
      %288 = vmatpush1.msra.mxu0 0.0
      %289 = vmatprep.subr.mxu0 0.0
      %290 = vmatpush1.msra.mxu0 0.0
      %291 = vmatprep.subr.mxu0 0.0
      %292 = vmatpush1.msra.mxu0 0.0
      %293 = vmatprep.subr.mxu0 0.0
      %294 = vmatpush1.msra.mxu0 0.0
      %295 = vmatprep.subr.mxu0 0.0
      %296 = vmatpush1.msra.mxu0 0.0
      %297 = vmatprep.subr.mxu0 0.0
      %298 = vmatpush1.msra.mxu0 0.0
      %299 = vmatprep.subr.mxu0 0.0
      %300 = vmatpush1.msra.mxu0 0.0
      %301 = vmatprep.subr.mxu0 0.0
      %302 = vmatpush1.msra.mxu0 0.0
      %303 = vmatprep.subr.mxu0 0.0
      %304 = vmatpush1.msra.mxu0 0.0
      %305 = vmatprep.subr.mxu0 0.0
      %306 = vmatpush1.msra.mxu0 0.0
      %307 = vmatprep.mubr.f32.mxu0 0.0
      %308 = vmatmul.mubr.f32.gmra.mrb[0].mxu0 %v187
      %v309 = vpop.f32.mrb[0].mxu0
      %v310 = vadd.f32 %v206, %v309
      %v311 = vpop.f32.mrb[0].mxu0
      %312 = vmatprep.mubr.f32.mxu0 0.0
      %313 = vmatmul.mubr.f32.gmra.mrb[0].mxu0 %v188
      %v314 = vpop.f32.mrb[0].mxu0
      %v315 = vadd.f32 %v211, %v314
      %v316 = vpop.f32.mrb[0].mxu0
      %317 = vmatprep.mubr.f32.mxu0 0.0
      %318 = vmatmul.mubr.f32.gmra.mrb[0].mxu0 %v189
      %v319 = vpop.f32.mrb[0].mxu0
      %v320 = vadd.f32 %v216, %v319
      %v321 = vpop.f32.mrb[0].mxu0
      %322 = vmatprep.mubr.f32.mxu0 0.0
      %323 = vmatmul.mubr.f32.gmra.mrb[0].mxu0 %v190
      %v324 = vpop.f32.mrb[0].mxu0
      %v325 = vadd.f32 %v221, %v324
      %v326 = vpop.f32.mrb[0].mxu0
      %327 = vmatprep.mubr.f32.mxu0 0.0
      %328 = vmatmul.mubr.f32.gmra.mrb[0].mxu0 %v191
      %v329 = vpop.f32.mrb[0].mxu0
      %v330 = vadd.f32 %v226, %v329
      %v331 = vpop.f32.mrb[0].mxu0
      %332 = vmatprep.mubr.f32.mxu0 0.0
      %333 = vmatmul.mubr.f32.gmra.mrb[0].mxu0 %v192
      %v334 = vpop.f32.mrb[0].mxu0
      %v335 = vadd.f32 %v231, %v334
      %v336 = vpop.f32.mrb[0].mxu0
      %337 = vmatprep.mubr.f32.mxu0 0.0
      %338 = vmatmul.mubr.f32.gmra.mrb[0].mxu0 %v193
      %v339 = vpop.f32.mrb[0].mxu0
      %v340 = vadd.f32 %v236, %v339
      %v341 = vpop.f32.mrb[0].mxu0
      %342 = vmatprep.mubr.f32.mxu0 0.0
      %343 = vmatmul.mubr.f32.gmra.mrb[0].mxu0 %v194
      %v344 = vpop.f32.mrb[0].mxu0
      %v345 = vadd.f32 %v241, %v344
      %v346 = vpop.f32.mrb[0].mxu0
      %347 = vdwg.mxu0
      %v348 = vmax.f32 %v310, 0.0
      %v349 = vmax.f32 %v315, 0.0
      %v350 = vmax.f32 %v320, 0.0
      %v351 = vmax.f32 %v325, 0.0
      %v352 = vmax.f32 %v330, 0.0
      %v353 = vmax.f32 %v335, 0.0
      %v354 = vmax.f32 %v340, 0.0
      %v355 = vmax.f32 %v345, 0.0
      %vm356 = vcmask 523264
      %357 = vst.msk [vmem:[%s170] sm:$0xff] %vm356, %v348
      %358 = vst.msk [vmem:[%s170 + $0x8] sm:$0xff] %vm356, %v349
      %359 = vst.msk [vmem:[%s170 + $0x10] sm:$0xff] %vm356, %v350
      %360 = vst.msk [vmem:[%s170 + $0x18] sm:$0xff] %vm356, %v351
      %361 = vst.msk [vmem:[%s170 + $0x20] sm:$0xff] %vm356, %v352
      %362 = vst.msk [vmem:[%s170 + $0x28] sm:$0xff] %vm356, %v353
      %363 = vst.msk [vmem:[%s170 + $0x30] sm:$0xff] %vm356, %v354
      %364 = vst.msk [vmem:[%s170 + $0x38] sm:$0xff] %vm356, %v355
      %p365 = scmp.lt.s32.totalorder %s14, 1
      %s366 = scalar_select %p365, %s14, 1
      %s367 = smul.addr %s366, 8
      %s368 = smul.addr %s367, 8
      %s369 = scalar_lea.vmem %s3, %s368
      // Predicated region
      $region33: #{ggcnn4_forward.14} parent=31 // pred_check
        %p370 = pneg %p100
      $region34: #{ggcnn4_forward.14} parent=31 // pred_check_branch
        %372 = sbr.rel (%p370) target = $region36
      $region35: #{ggcnn4_forward.14} parent=31 // pred_region
        _
      $region36: #{ggcnn4_forward.14} parent=31 // pred_fallthru
        _
    $region32: #{ggcnn4_forward.14} parent=5 // pred_fallthru
      _
    %p373 = scmp.le.s32.totalorder 2, %s9
    // Predicated region
    $region37: #{ggcnn4_forward.14} parent=5 // pred_check
      %p374 = pneg %p373
    $region38: #{ggcnn4_forward.14} parent=5 // pred_check_branch
      %376 = sbr.rel (%p374) target = $region40
    $region39: #{ggcnn4_forward.14} parent=5 // pred_region
      %s377 = ssub.s32 %s9, 2
      // Predicated region
      $region41: #{ggcnn4_forward.14} parent=39 // pred_check
        %p378 = pneg %p106
      $region42: #{ggcnn4_forward.14} parent=39 // pred_check_branch
        %380 = sbr.rel (%p378) target = $region44
      $region43: #{ggcnn4_forward.14} parent=39 // pred_region
        %p381 = scmp.lt.s32.totalorder %s15, 1
        %s382 = scalar_select %p381, %s15, 1
        %s383 = smul.addr %s382, 8
        %s384 = smul.addr %s383, 8
        %s385 = scalar_lea.vmem %s3, %s384
      $region44: #{ggcnn4_forward.14} parent=39 // pred_fallthru
        _
    $region40: #{ggcnn4_forward.14} parent=5 // pred_fallthru
      _
  $region6: #{ggcnn4_forward.14} parent=0 // loop_footer
    %s13 = sadd.s32 1, %s9
  $region7: #{ggcnn4_forward.14} parent=0 // loop_footer_branch
    %8 = sbr.rel target = $region3
  $region8: #{ggcnn4_forward.14} parent=0 // loop_exit
    _

// kernel: ggcnn4_forward.15
$region0: #{ggcnn4_forward.15}
  #allocation0 [shape = 'u32[]', space=smem, size = 0x4, offset = 0x4, fixed_abs, tag = 'smem constant byte address 0x4 - core index']
  #allocation1 [shape = 'u32[144,128]{1,0:T(1,128)}', space=vmem, size = 0x12000, scoped, tag = 'internal scratch']
  %s0 = inlined_call_operand.vmem [shape: f32[2,64,256], index: 0, kind: input, shape index: {}]
  %s1 = inlined_call_operand.vmem [shape: f32[64,64], index: 1, kind: input, shape index: {}]
  %s2 = inlined_call_operand.vmem [shape: f32[64,1], index: 2, kind: input, shape index: {}]
  %s3 = inlined_call_operand.vmem [shape: f32[12,64], index: 3, kind: input, shape index: {}]
  %s4 = inlined_call_operand.vmem [shape: f32[12,1], index: 4, kind: input, shape index: {}]
  %s5 = inlined_call_operand.vmem [shape: f32[2,12,256], index: 5, kind: output, shape index: {}]
  %s6 = sld [smem:[#allocation0]]
  $region53: #{ggcnn4_forward.15} parent=0
    _
  %s8 = ssub.s32 1, %s6
  %s9 = scalar_select 0, %s8, %s6
  loop: start=0, step=1, limit=4
  $region2: #{ggcnn4_forward.15} parent=0 // loop_pre_header
    _
  $region3: #{ggcnn4_forward.15} parent=0 // loop_header
    %s11 = sphi 0, %s15
    %p12 = scmp.ge.s32.totalorder %s11, 4
    %s21 = sphi 0, %s23
    %s24 = sphi 0, %s21
    %s25 = sphi 0, %s24
    %s41 = sphi 0, %s25
    %s45 = sphi 0, %s45
    %s47 = sphi 0, %s45
    %s48 = sphi 0, %s47
    %s62 = sphi 0, %s48
    %s66 = sphi 0, %s66
    %s68 = sphi 0, %s66
    %s69 = sphi 0, %s68
    %s83 = sphi 0, %s69
    %s87 = sphi 0, %s87
    %s89 = sphi 0, %s87
    %s90 = sphi 0, %s89
    %s104 = sphi 0, %s90
    %s108 = sphi 0, %s108
    %s110 = sphi 0, %s108
    %s111 = sphi 0, %s110
    %s125 = sphi 0, %s111
    %s131 = sphi 0, %s133
    %s134 = sphi 0, %s131
    %s135 = sphi 0, %s134
    %s151 = sphi 0, %s135
  $region4: #{ggcnn4_forward.15} parent=0 // loop_header_branch
    %14 = sbr.rel (%p12) target = $region8
  $region5: #{ggcnn4_forward.15} parent=0 // loop_body
    %s16 = ssub.s32 %s11, 1
    %s17 = ssub.s32 %s11, 2
    %s18 = sadd.s32 %s11, 1
    %s19 = ssub.s32 %s11, %s18
    %p20 = scmp.eq.s32.totalorder %s19, 0
    %s22 = sadd.s32 %s21, 1
    %s23 = scalar_select %p20, %s21, %s22
    %p26 = pneg %p20
    %p27 = scmp.eq.s32.totalorder %s11, 1
    %p28 = por %p26, %p27
    %p29 = scmp.ne.s32.totalorder %s21, %s24
    %p30 = scmp.eq.s32.totalorder %s11, 0
    %p31 = por %p29, %p30
    %p32 = scmp.ne.s32.totalorder %s21, %s24
    %p33 = scmp.eq.s32.totalorder %s16, 1
    %p34 = por %p32, %p33
    %p35 = scmp.ne.s32.totalorder %s24, %s25
    %p36 = scmp.eq.s32.totalorder %s16, 0
    %p37 = por %p35, %p36
    %p38 = scmp.ne.s32.totalorder %s24, %s25
    %p39 = scmp.eq.s32.totalorder %s17, 1
    %p40 = por %p38, %p39
    %p42 = scmp.ne.s32.totalorder %s25, %s41
    %p43 = scmp.eq.s32.totalorder %s17, 0
    %p44 = por %p42, %p43
    %s46 = sadd.s32 %s45, 1
    %p49 = scmp.eq.s32.totalorder %s11, 1
    %p50 = scmp.ne.s32.totalorder %s45, %s47
    %p51 = scmp.eq.s32.totalorder %s11, 0
    %p52 = por %p50, %p51
    %p53 = scmp.ne.s32.totalorder %s45, %s47
    %p54 = scmp.eq.s32.totalorder %s16, 1
    %p55 = por %p53, %p54
    %p56 = scmp.ne.s32.totalorder %s47, %s48
    %p57 = scmp.eq.s32.totalorder %s16, 0
    %p58 = por %p56, %p57
    %p59 = scmp.ne.s32.totalorder %s47, %s48
    %p60 = scmp.eq.s32.totalorder %s17, 1
    %p61 = por %p59, %p60
    %p63 = scmp.ne.s32.totalorder %s48, %s62
    %p64 = scmp.eq.s32.totalorder %s17, 0
    %p65 = por %p63, %p64
    %s67 = sadd.s32 %s66, 1
    %p70 = scmp.eq.s32.totalorder %s11, 1
    %p71 = scmp.ne.s32.totalorder %s66, %s68
    %p72 = scmp.eq.s32.totalorder %s11, 0
    %p73 = por %p71, %p72
    %p74 = scmp.ne.s32.totalorder %s66, %s68
    %p75 = scmp.eq.s32.totalorder %s16, 1
    %p76 = por %p74, %p75
    %p77 = scmp.ne.s32.totalorder %s68, %s69
    %p78 = scmp.eq.s32.totalorder %s16, 0
    %p79 = por %p77, %p78
    %p80 = scmp.ne.s32.totalorder %s68, %s69
    %p81 = scmp.eq.s32.totalorder %s17, 1
    %p82 = por %p80, %p81
    %p84 = scmp.ne.s32.totalorder %s69, %s83
    %p85 = scmp.eq.s32.totalorder %s17, 0
    %p86 = por %p84, %p85
    %s88 = sadd.s32 %s87, 1
    %p91 = scmp.eq.s32.totalorder %s11, 1
    %p92 = scmp.ne.s32.totalorder %s87, %s89
    %p93 = scmp.eq.s32.totalorder %s11, 0
    %p94 = por %p92, %p93
    %p95 = scmp.ne.s32.totalorder %s87, %s89
    %p96 = scmp.eq.s32.totalorder %s16, 1
    %p97 = por %p95, %p96
    %p98 = scmp.ne.s32.totalorder %s89, %s90
    %p99 = scmp.eq.s32.totalorder %s16, 0
    %p100 = por %p98, %p99
    %p101 = scmp.ne.s32.totalorder %s89, %s90
    %p102 = scmp.eq.s32.totalorder %s17, 1
    %p103 = por %p101, %p102
    %p105 = scmp.ne.s32.totalorder %s90, %s104
    %p106 = scmp.eq.s32.totalorder %s17, 0
    %p107 = por %p105, %p106
    %s109 = sadd.s32 %s108, 1
    %p112 = scmp.eq.s32.totalorder %s11, 1
    %p113 = scmp.ne.s32.totalorder %s108, %s110
    %p114 = scmp.eq.s32.totalorder %s11, 0
    %p115 = por %p113, %p114
    %p116 = scmp.ne.s32.totalorder %s108, %s110
    %p117 = scmp.eq.s32.totalorder %s16, 1
    %p118 = por %p116, %p117
    %p119 = scmp.ne.s32.totalorder %s110, %s111
    %p120 = scmp.eq.s32.totalorder %s16, 0
    %p121 = por %p119, %p120
    %p122 = scmp.ne.s32.totalorder %s110, %s111
    %p123 = scmp.eq.s32.totalorder %s17, 1
    %p124 = por %p122, %p123
    %p126 = scmp.ne.s32.totalorder %s111, %s125
    %p127 = scmp.eq.s32.totalorder %s17, 0
    %p128 = por %p126, %p127
    %s129 = ssub.s32 %s11, %s18
    %p130 = scmp.eq.s32.totalorder %s129, 0
    %s132 = sadd.s32 %s131, 1
    %s133 = scalar_select %p130, %s131, %s132
    %p136 = pneg %p130
    %p137 = scmp.eq.s32.totalorder %s11, 1
    %p138 = por %p136, %p137
    %p139 = scmp.ne.s32.totalorder %s131, %s134
    %p140 = scmp.eq.s32.totalorder %s11, 0
    %p141 = por %p139, %p140
    %p142 = scmp.ne.s32.totalorder %s131, %s134
    %p143 = scmp.eq.s32.totalorder %s16, 1
    %p144 = por %p142, %p143
    %p145 = scmp.ne.s32.totalorder %s134, %s135
    %p146 = scmp.eq.s32.totalorder %s16, 0
    %p147 = por %p145, %p146
    %p148 = scmp.ne.s32.totalorder %s134, %s135
    %p149 = scmp.eq.s32.totalorder %s17, 1
    %p150 = por %p148, %p149
    %p152 = scmp.ne.s32.totalorder %s135, %s151
    %p153 = scmp.eq.s32.totalorder %s17, 0
    %p154 = por %p152, %p153
    %p155 = scmp.le.s32.totalorder 1, %s11
    %p156 = scmp.lt.s32.totalorder %s11, 3
    %p157 = pnand %p155, %p156
    %p158 = pneg %p157
    // Predicated region
    $region9: #{ggcnn4_forward.15} parent=5 // pred_check
      _
    $region10: #{ggcnn4_forward.15} parent=5 // pred_check_branch
      %160 = sbr.rel (%p157) target = $region12
    $region11: #{ggcnn4_forward.15} parent=5 // pred_region
      %s161 = ssub.s32 %s11, 1
      // Predicated region
      $region13: #{ggcnn4_forward.15} parent=11 // pred_check
        %p162 = pneg %p58
      $region14: #{ggcnn4_forward.15} parent=11 // pred_check_branch
        %164 = sbr.rel (%p162) target = $region16
      $region15: #{ggcnn4_forward.15} parent=11 // pred_region
        _
      $region16: #{ggcnn4_forward.15} parent=11 // pred_fallthru
        _
      // Predicated region
      $region17: #{ggcnn4_forward.15} parent=11 // pred_check
        %p165 = pneg %p79
      $region18: #{ggcnn4_forward.15} parent=11 // pred_check_branch
        %167 = sbr.rel (%p165) target = $region20
      $region19: #{ggcnn4_forward.15} parent=11 // pred_region
        _
      $region20: #{ggcnn4_forward.15} parent=11 // pred_fallthru
        _
      // Predicated region
      $region21: #{ggcnn4_forward.15} parent=11 // pred_check
        %p168 = pneg %p100
      $region22: #{ggcnn4_forward.15} parent=11 // pred_check_branch
        %170 = sbr.rel (%p168) target = $region24
      $region23: #{ggcnn4_forward.15} parent=11 // pred_region
        _
      $region24: #{ggcnn4_forward.15} parent=11 // pred_fallthru
        _
      // Predicated region
      $region25: #{ggcnn4_forward.15} parent=11 // pred_check
        %p171 = pneg %p121
      $region26: #{ggcnn4_forward.15} parent=11 // pred_check_branch
        %173 = sbr.rel (%p171) target = $region28
      $region27: #{ggcnn4_forward.15} parent=11 // pred_region
        _
      $region28: #{ggcnn4_forward.15} parent=11 // pred_fallthru
        _
    $region12: #{ggcnn4_forward.15} parent=5 // pred_fallthru
      _
    %p174 = scmp.lt.s32.totalorder %s11, 2
    // Predicated region
    $region29: #{ggcnn4_forward.15} parent=5 // pred_check
      %p175 = pneg %p174
    $region30: #{ggcnn4_forward.15} parent=5 // pred_check_branch
      %177 = sbr.rel (%p175) target = $region32
    $region31: #{ggcnn4_forward.15} parent=5 // pred_region
      // Predicated region
      $region33: #{ggcnn4_forward.15} parent=31 // pred_check
        %p178 = pneg %p31
      $region34: #{ggcnn4_forward.15} parent=31 // pred_check_branch
        %180 = sbr.rel (%p178) target = $region36
      $region35: #{ggcnn4_forward.15} parent=31 // pred_region
        %p181 = scmp.lt.s32.totalorder %s11, 1
        %s182 = scalar_select %p181, %s11, 1
        %s183 = smul.addr %s182, 16
        %s184 = smul.addr %s183, 8
        %s185 = scalar_lea.vmem %s0, %s184
      $region36: #{ggcnn4_forward.15} parent=31 // pred_fallthru
        _
    $region32: #{ggcnn4_forward.15} parent=5 // pred_fallthru
      _
    %p186 = scmp.le.s32.totalorder 1, %s11
    %p187 = scmp.lt.s32.totalorder %s11, 3
    %p188 = pnand %p186, %p187
    %p189 = pneg %p188
    // Predicated region
    $region37: #{ggcnn4_forward.15} parent=5 // pred_check
      _
    $region38: #{ggcnn4_forward.15} parent=5 // pred_check_branch
      %191 = sbr.rel (%p188) target = $region40
    $region39: #{ggcnn4_forward.15} parent=5 // pred_region
      %s192 = ssub.s32 %s11, 1
      %p193 = scmp.lt.s32.totalorder %s16, 1
      %s194 = scalar_select %p193, %s16, 1
      %s195 = smul.addr %s194, 16
      %s196 = smul.addr %s195, 8
      %s197 = scalar_lea.vmem %s0, %s196
      %p198 = pneg %p37
      %p199 = pneg %p34
      %p200 = pneg %p58
      %p201 = pneg %p55
      %p202 = pneg %p79
      %p203 = pneg %p76
      %p204 = pneg %p100
      %p205 = pneg %p97
      %p206 = pneg %p121
      %p207 = pneg %p118
      %p208 = pneg %p147
      %p209 = pneg %p144
      %p210 = scmp.lt.s32.totalorder %s16, 1
      %s211 = scalar_select %p210, %s16, 1
      %s212 = smul.addr %s211, 4
      %s213 = smul.addr %s212, 8
      %s214 = scalar_lea.vmem %s5, %s213
      %p215 = scmp.lt.s32.totalorder %s16, 1
      %s216 = scalar_select %p215, %s16, 1
      %s217 = smul.addr %s216, 16
      %s218 = smul.addr %s217, 8
      %s219 = scalar_lea.vmem %s0, %s218
      %p220 = scmp.lt.s32.totalorder %s16, 1
      %s221 = scalar_select %p220, %s16, 1
      %s222 = smul.addr %s221, 4
      %s223 = smul.addr %s222, 8
      %s224 = scalar_lea.vmem %s5, %s223
      %v225 = vld [vmem:[%s219] sm:$0xff]
      %v226 = vld [vmem:[%s219 + $0x8] sm:$0xff]
      %v227 = vld [vmem:[%s219 + $0x10] sm:$0xff]
      %v228 = vld [vmem:[%s219 + $0x18] sm:$0xff]
      %v229 = vld [vmem:[%s219 + $0x20] sm:$0xff]
      %v230 = vld [vmem:[%s219 + $0x28] sm:$0xff]
      %v231 = vld [vmem:[%s219 + $0x30] sm:$0xff]
      %v232 = vld [vmem:[%s219 + $0x38] sm:$0xff]
      %v233 = vld [vmem:[%s219 + $0x40] sm:$0xff]
      %v234 = vld [vmem:[%s219 + $0x48] sm:$0xff]
      %v235 = vld [vmem:[%s219 + $0x50] sm:$0xff]
      %v236 = vld [vmem:[%s219 + $0x58] sm:$0xff]
      %v237 = vld [vmem:[%s219 + $0x60] sm:$0xff]
      %v238 = vld [vmem:[%s219 + $0x68] sm:$0xff]
      %v239 = vld [vmem:[%s219 + $0x70] sm:$0xff]
      %v240 = vld [vmem:[%s219 + $0x78] sm:$0xff]
      %v241 = vld [vmem:[%s1] sm:$0xff]
      %v242 = vld [vmem:[%s1 + $0x8] sm:$0xff]
      %v243 = vld [vmem:[%s1 + $0x10] sm:$0xff]
      %v244 = vld [vmem:[%s1 + $0x18] sm:$0xff]
      %v245 = vld [vmem:[%s1 + $0x20] sm:$0xff]
      %v246 = vld [vmem:[%s1 + $0x28] sm:$0xff]
      %v247 = vld [vmem:[%s1 + $0x30] sm:$0xff]
      %v248 = vld [vmem:[%s1 + $0x38] sm:$0xff]
      %v249 = vld [vmem:[%s2] sm:$0xff]
      %v250 = vld [vmem:[%s2 + $0x8] sm:$0xff]
      %v251 = vld [vmem:[%s2 + $0x10] sm:$0xff]
      %v252 = vld [vmem:[%s2 + $0x18] sm:$0xff]
      %v253 = vld [vmem:[%s2 + $0x20] sm:$0xff]
      %v254 = vld [vmem:[%s2 + $0x28] sm:$0xff]
      %v255 = vld [vmem:[%s2 + $0x30] sm:$0xff]
      %v256 = vld [vmem:[%s2 + $0x38] sm:$0xff]
      %258 = vset.pattern.permute.xlu0 0
      %259 = vperm.xlu0 %258, %v249
      %v260 = vpop.permute.xlu0 %259
      %263 = vset.pattern.permute.xlu0 0
      %264 = vperm.xlu0 %263, %v250
      %v265 = vpop.permute.xlu0 %264
      %268 = vset.pattern.permute.xlu0 0
      %269 = vperm.xlu0 %268, %v251
      %v270 = vpop.permute.xlu0 %269
      %273 = vset.pattern.permute.xlu0 0
      %274 = vperm.xlu0 %273, %v252
      %v275 = vpop.permute.xlu0 %274
      %278 = vset.pattern.permute.xlu0 0
      %279 = vperm.xlu0 %278, %v253
      %v280 = vpop.permute.xlu0 %279
      %283 = vset.pattern.permute.xlu0 0
      %284 = vperm.xlu0 %283, %v254
      %v285 = vpop.permute.xlu0 %284
      %288 = vset.pattern.permute.xlu0 0
      %289 = vperm.xlu0 %288, %v255
      %v290 = vpop.permute.xlu0 %289
      %293 = vset.pattern.permute.xlu0 0
      %294 = vperm.xlu0 %293, %v256
      %v295 = vpop.permute.xlu0 %294
      %vm297 = vcmask 523264
      %v299 = vsel %vm297, %v241, 0
      %v302 = vsel %vm297, %v242, 0
      %v305 = vsel %vm297, %v243, 0
      %v308 = vsel %vm297, %v244, 0
      %v311 = vsel %vm297, %v245, 0
      %v314 = vsel %vm297, %v246, 0
      %v317 = vsel %vm297, %v247, 0
      %v320 = vsel %vm297, %v248, 0
      %322 = vmatprep.subr.mxu0 %v226
      %323 = vmatpush1.msra.mxu0 %v225
      %324 = vmatprep.subr.mxu0 %v228
      %325 = vmatpush1.msra.mxu0 %v227
      %326 = vmatprep.subr.mxu0 %v230
      %327 = vmatpush1.msra.mxu0 %v229
      %328 = vmatprep.subr.mxu0 %v232
      %329 = vmatpush1.msra.mxu0 %v231
      %330 = vmatprep.subr.mxu0 %v234
      %331 = vmatpush1.msra.mxu0 %v233
      %332 = vmatprep.subr.mxu0 %v236
      %333 = vmatpush1.msra.mxu0 %v235
      %334 = vmatprep.subr.mxu0 %v238
      %335 = vmatpush1.msra.mxu0 %v237
      %336 = vmatprep.subr.mxu0 %v240
      %337 = vmatpush1.msra.mxu0 %v239
      %338 = vmatprep.subr.mxu0 0.0
      %339 = vmatpush1.msra.mxu0 0.0
      %340 = vmatprep.subr.mxu0 0.0
      %341 = vmatpush1.msra.mxu0 0.0
      %342 = vmatprep.subr.mxu0 0.0
      %343 = vmatpush1.msra.mxu0 0.0
      %344 = vmatprep.subr.mxu0 0.0
      %345 = vmatpush1.msra.mxu0 0.0
      %346 = vmatprep.subr.mxu0 0.0
      %347 = vmatpush1.msra.mxu0 0.0
      %348 = vmatprep.subr.mxu0 0.0
      %349 = vmatpush1.msra.mxu0 0.0
      %350 = vmatprep.subr.mxu0 0.0
      %351 = vmatpush1.msra.mxu0 0.0
      %352 = vmatprep.subr.mxu0 0.0
      %353 = vmatpush1.msra.mxu0 0.0
      %354 = vmatprep.subr.mxu0 0.0
      %355 = vmatpush1.msra.mxu0 0.0
      %356 = vmatprep.subr.mxu0 0.0
      %357 = vmatpush1.msra.mxu0 0.0
      %358 = vmatprep.subr.mxu0 0.0
      %359 = vmatpush1.msra.mxu0 0.0
      %360 = vmatprep.subr.mxu0 0.0
      %361 = vmatpush1.msra.mxu0 0.0
      %362 = vmatprep.subr.mxu0 0.0
      %363 = vmatpush1.msra.mxu0 0.0
      %364 = vmatprep.subr.mxu0 0.0
      %365 = vmatpush1.msra.mxu0 0.0
      %366 = vmatprep.subr.mxu0 0.0
      %367 = vmatpush1.msra.mxu0 0.0
      %368 = vmatprep.subr.mxu0 0.0
      %369 = vmatpush1.msra.mxu0 0.0
      %370 = vmatprep.subr.mxu0 0.0
      %371 = vmatpush1.msra.mxu0 0.0
      %372 = vmatprep.subr.mxu0 0.0
      %373 = vmatpush1.msra.mxu0 0.0
      %374 = vmatprep.subr.mxu0 0.0
      %375 = vmatpush1.msra.mxu0 0.0
      %376 = vmatprep.subr.mxu0 0.0
      %377 = vmatpush1.msra.mxu0 0.0
      %378 = vmatprep.subr.mxu0 0.0
      %379 = vmatpush1.msra.mxu0 0.0
      %380 = vmatprep.subr.mxu0 0.0
      %381 = vmatpush1.msra.mxu0 0.0
      %382 = vmatprep.subr.mxu0 0.0
      %383 = vmatpush1.msra.mxu0 0.0
      %384 = vmatprep.subr.mxu0 0.0
      %385 = vmatpush1.msra.mxu0 0.0
      %386 = vmatprep.mubr.f32.mxu0 0.0
      %387 = vmatmul.mubr.f32.gmra.mrb[0].mxu0 %v299
      %v388 = vpop.f32.mrb[0].mxu0
      %v389 = vadd.f32 %v260, %v388
      %v390 = vpop.f32.mrb[0].mxu0
      %v391 = vadd.f32 %v260, %v390
      %392 = vmatprep.mubr.f32.mxu0 0.0
      %393 = vmatmul.mubr.f32.gmra.mrb[0].mxu0 %v302
      %v394 = vpop.f32.mrb[0].mxu0
      %v395 = vadd.f32 %v265, %v394
      %v396 = vpop.f32.mrb[0].mxu0
      %v397 = vadd.f32 %v265, %v396
      %398 = vmatprep.mubr.f32.mxu0 0.0
      %399 = vmatmul.mubr.f32.gmra.mrb[0].mxu0 %v305
      %v400 = vpop.f32.mrb[0].mxu0
      %v401 = vadd.f32 %v270, %v400
      %v402 = vpop.f32.mrb[0].mxu0
      %v403 = vadd.f32 %v270, %v402
      %404 = vmatprep.mubr.f32.mxu0 0.0
      %405 = vmatmul.mubr.f32.gmra.mrb[0].mxu0 %v308
      %v406 = vpop.f32.mrb[0].mxu0
      %v407 = vadd.f32 %v275, %v406
      %v408 = vpop.f32.mrb[0].mxu0
      %v409 = vadd.f32 %v275, %v408
      %410 = vmatprep.mubr.f32.mxu0 0.0
      %411 = vmatmul.mubr.f32.gmra.mrb[0].mxu0 %v311
      %v412 = vpop.f32.mrb[0].mxu0
      %v413 = vadd.f32 %v280, %v412
      %v414 = vpop.f32.mrb[0].mxu0
      %v415 = vadd.f32 %v280, %v414
      %416 = vmatprep.mubr.f32.mxu0 0.0
      %417 = vmatmul.mubr.f32.gmra.mrb[0].mxu0 %v314
      %v418 = vpop.f32.mrb[0].mxu0
      %v419 = vadd.f32 %v285, %v418
      %v420 = vpop.f32.mrb[0].mxu0
      %v421 = vadd.f32 %v285, %v420
      %422 = vmatprep.mubr.f32.mxu0 0.0
      %423 = vmatmul.mubr.f32.gmra.mrb[0].mxu0 %v317
      %v424 = vpop.f32.mrb[0].mxu0
      %v425 = vadd.f32 %v290, %v424
      %v426 = vpop.f32.mrb[0].mxu0
      %v427 = vadd.f32 %v290, %v426
      %428 = vmatprep.mubr.f32.mxu0 0.0
      %429 = vmatmul.mubr.f32.gmra.mrb[0].mxu0 %v320
      %v430 = vpop.f32.mrb[0].mxu0
      %v431 = vadd.f32 %v295, %v430
      %v432 = vpop.f32.mrb[0].mxu0
      %v433 = vadd.f32 %v295, %v432
      %434 = vdwg.mxu0
      %v435 = vmax.f32 %v389, 0.0
      %v436 = vmax.f32 %v391, 0.0
      %v437 = vmax.f32 %v395, 0.0
      %v438 = vmax.f32 %v397, 0.0
      %v439 = vmax.f32 %v401, 0.0
      %v440 = vmax.f32 %v403, 0.0
      %v441 = vmax.f32 %v407, 0.0
      %v442 = vmax.f32 %v409, 0.0
      %v443 = vmax.f32 %v413, 0.0
      %v444 = vmax.f32 %v415, 0.0
      %v445 = vmax.f32 %v419, 0.0
      %v446 = vmax.f32 %v421, 0.0
      %v447 = vmax.f32 %v425, 0.0
      %v448 = vmax.f32 %v427, 0.0
      %v449 = vmax.f32 %v431, 0.0
      %v450 = vmax.f32 %v433, 0.0
      %v451 = vld [vmem:[%s3] sm:$0xff]
      %v452 = vld [vmem:[%s3 + $0x8] sm:$0xf]
      %v453 = vld [vmem:[%s4] sm:$0xff]
      %v454 = vld [vmem:[%s4 + $0x8] sm:$0xf]
      %456 = vset.pattern.permute.xlu0 0
      %457 = vperm.xlu0 %456, %v453
      %v458 = vpop.permute.xlu0 %457
      %461 = vset.pattern.permute.xlu0 0
      %462 = vperm.xlu0 %461, %v454
      %v463 = vpop.permute.xlu0 %462
      %v466 = vsel %vm297, %v451, 0
      %v469 = vsel %vm297, %v452, 0
      %471 = vmatprep.subr.mxu0 %v436
      %472 = vmatpush1.msra.mxu0 %v435
      %473 = vmatprep.subr.mxu0 %v438
      %474 = vmatpush1.msra.mxu0 %v437
      %475 = vmatprep.subr.mxu0 %v440
      %476 = vmatpush1.msra.mxu0 %v439
      %477 = vmatprep.subr.mxu0 %v442
      %478 = vmatpush1.msra.mxu0 %v441
      %479 = vmatprep.subr.mxu0 %v444
      %480 = vmatpush1.msra.mxu0 %v443
      %481 = vmatprep.subr.mxu0 %v446
      %482 = vmatpush1.msra.mxu0 %v445
      %483 = vmatprep.subr.mxu0 %v448
      %484 = vmatpush1.msra.mxu0 %v447
      %485 = vmatprep.subr.mxu0 %v450
      %486 = vmatpush1.msra.mxu0 %v449
      %487 = vmatprep.subr.mxu0 0.0
      %488 = vmatpush1.msra.mxu0 0.0
      %489 = vmatprep.subr.mxu0 0.0
      %490 = vmatpush1.msra.mxu0 0.0
      %491 = vmatprep.subr.mxu0 0.0
      %492 = vmatpush1.msra.mxu0 0.0
      %493 = vmatprep.subr.mxu0 0.0
      %494 = vmatpush1.msra.mxu0 0.0
      %495 = vmatprep.subr.mxu0 0.0
      %496 = vmatpush1.msra.mxu0 0.0
      %497 = vmatprep.subr.mxu0 0.0
      %498 = vmatpush1.msra.mxu0 0.0
      %499 = vmatprep.subr.mxu0 0.0
      %500 = vmatpush1.msra.mxu0 0.0
      %501 = vmatprep.subr.mxu0 0.0
      %502 = vmatpush1.msra.mxu0 0.0
      %503 = vmatprep.subr.mxu0 0.0
      %504 = vmatpush1.msra.mxu0 0.0
      %505 = vmatprep.subr.mxu0 0.0
      %506 = vmatpush1.msra.mxu0 0.0
      %507 = vmatprep.subr.mxu0 0.0
      %508 = vmatpush1.msra.mxu0 0.0
      %509 = vmatprep.subr.mxu0 0.0
      %510 = vmatpush1.msra.mxu0 0.0
      %511 = vmatprep.subr.mxu0 0.0
      %512 = vmatpush1.msra.mxu0 0.0
      %513 = vmatprep.subr.mxu0 0.0
      %514 = vmatpush1.msra.mxu0 0.0
      %515 = vmatprep.subr.mxu0 0.0
      %516 = vmatpush1.msra.mxu0 0.0
      %517 = vmatprep.subr.mxu0 0.0
      %518 = vmatpush1.msra.mxu0 0.0
      %519 = vmatprep.subr.mxu0 0.0
      %520 = vmatpush1.msra.mxu0 0.0
      %521 = vmatprep.subr.mxu0 0.0
      %522 = vmatpush1.msra.mxu0 0.0
      %523 = vmatprep.subr.mxu0 0.0
      %524 = vmatpush1.msra.mxu0 0.0
      %525 = vmatprep.subr.mxu0 0.0
      %526 = vmatpush1.msra.mxu0 0.0
      %527 = vmatprep.subr.mxu0 0.0
      %528 = vmatpush1.msra.mxu0 0.0
      %529 = vmatprep.subr.mxu0 0.0
      %530 = vmatpush1.msra.mxu0 0.0
      %531 = vmatprep.subr.mxu0 0.0
      %532 = vmatpush1.msra.mxu0 0.0
      %533 = vmatprep.subr.mxu0 0.0
      %534 = vmatpush1.msra.mxu0 0.0
      %535 = vmatprep.mubr.f32.mxu0 0.0
      %536 = vmatmul.mubr.f32.gmra.mrb[0].mxu0 %v466
      %v537 = vpop.f32.mrb[0].mxu0
      %v538 = vadd.f32 %v458, %v537
      %v539 = vpop.f32.mrb[0].mxu0
      %v540 = vadd.f32 %v458, %v539
      %541 = vmatprep.mubr.f32.mxu0 0.0
      %542 = vmatmul.mubr.f32.gmra.mrb[0].mxu0 %v469
      %v543 = vpop.f32.mrb[0].mxu0
      %v544 = vadd.f32 %v463, %v543
      %v545 = vpop.f32.mrb[0].mxu0
      %v546 = vadd.f32 %v463, %v545
      %547 = vdwg.mxu0
      %v548 = vlaneseq
      %v549 = vshrl.u32 %v548, 7
      %v550 = vadd.s32 %v549, 8
      %vm551 = vcmp.lt.s32.totalorder %v549, 4
      %vm552 = vcmp.lt.s32.totalorder %v550, 4
      %v553 = vxor.u32 %v538, 2147483648
      %v554 = vxor.u32 %v540, 2147483648
      %v555 = vxor.u32 %v544, 2147483648
      %v556 = vxor.u32 %v546, 2147483648
      %v557 = vmul.f32 %v553, 1.442695
      %v558 = vpow.pop %v557
      %v559 = vmul.f32 %v554, 1.442695
      %v560 = vpow.pop %v559
      %v561 = vmul.f32 %v555, 1.442695
      %v562 = vpow.pop %v561
      %v563 = vmul.f32 %v556, 1.442695
      %v564 = vpow.pop %v563
      %v565 = vadd.f32 %v558, 1.0
      %v566 = vadd.f32 %v560, 1.0
      %v567 = vadd.f32 %v562, 1.0
      %v568 = vadd.f32 %v564, 1.0
      %v569 = vrcp.pop %v565
      %v570 = vmul.f32 1.0, %v569
      %v571 = vrcp.pop %v566
      %v572 = vmul.f32 1.0, %v571
      %v573 = vrcp.pop %v567
      %v574 = vmul.f32 1.0, %v573
      %v575 = vrcp.pop %v568
      %v576 = vmul.f32 1.0, %v575
      %v577 = vsel %vm551, %v570, %v538
      %v578 = vsel %vm551, %v572, %v540
      %v579 = vsel %vm552, %v574, %v544
      %v580 = vsel %vm552, %v576, %v546
      %581 = vst [vmem:[%s224] sm:$0xff] %v577
      %582 = vst [vmem:[%s224 + $0x8] sm:$0xff] %v578
      %583 = vst [vmem:[%s224 + $0x10] sm:$0xf] %v579
      %584 = vst [vmem:[%s224 + $0x18] sm:$0xf] %v580
      %p585 = scmp.lt.s32.totalorder %s16, 1
      %s586 = scalar_select %p585, %s16, 1
      %s587 = smul.addr %s586, 4
      %s588 = smul.addr %s587, 8
      %s589 = scalar_lea.vmem %s5, %s588
      // Predicated region
      $region41: #{ggcnn4_forward.15} parent=39 // pred_check
        %p590 = pneg %p144
      $region42: #{ggcnn4_forward.15} parent=39 // pred_check_branch
        %592 = sbr.rel (%p590) target = $region44
      $region43: #{ggcnn4_forward.15} parent=39 // pred_region
        _
      $region44: #{ggcnn4_forward.15} parent=39 // pred_fallthru
        _
    $region40: #{ggcnn4_forward.15} parent=5 // pred_fallthru
      _
    %p593 = scmp.le.s32.totalorder 2, %s11
    // Predicated region
    $region45: #{ggcnn4_forward.15} parent=5 // pred_check
      %p594 = pneg %p593
    $region46: #{ggcnn4_forward.15} parent=5 // pred_check_branch
      %596 = sbr.rel (%p594) target = $region48
    $region47: #{ggcnn4_forward.15} parent=5 // pred_region
      %s597 = ssub.s32 %s11, 2
      // Predicated region
      $region49: #{ggcnn4_forward.15} parent=47 // pred_check
        %p598 = pneg %p150
      $region50: #{ggcnn4_forward.15} parent=47 // pred_check_branch
        %600 = sbr.rel (%p598) target = $region52
      $region51: #{ggcnn4_forward.15} parent=47 // pred_region
        %p601 = scmp.lt.s32.totalorder %s17, 1
        %s602 = scalar_select %p601, %s17, 1
        %s603 = smul.addr %s602, 4
        %s604 = smul.addr %s603, 8
        %s605 = scalar_lea.vmem %s5, %s604
      $region52: #{ggcnn4_forward.15} parent=47 // pred_fallthru
        _
    $region48: #{ggcnn4_forward.15} parent=5 // pred_fallthru
      _
  $region6: #{ggcnn4_forward.15} parent=0 // loop_footer
    %s15 = sadd.s32 1, %s11
  $region7: #{ggcnn4_forward.15} parent=0 // loop_footer_branch
    %10 = sbr.rel target = $region3
  $region8: #{ggcnn4_forward.15} parent=0 // loop_exit
    _

</llo_original>
